<compile_context>
chip_gen: v5e
topology: v5e:2x2
jax: 0.10.0
libtpu: 0.0.40
codegen_flags: <defaults>
</compile_context>

<pallas_src>
import functools
import math
import numpy as np
import jax
import jax.numpy as jnp
from jax.experimental import pallas as pl
from jax.experimental.pallas import tpu as pltpu


# --------------------------------------------------------------------------------------
# Pallas kernel: one grid step = `block_b` batches lane-stacked -> (rows, block_b*C=128).
# --------------------------------------------------------------------------------------
def sgblock_kernel(x_ref, dstack_ref, er_ref, ei_ref, wr_ref, wi_ref, wtok_ref,
                   avg_ref, const_ref, out_ref, *, lens_x, a, whalf):
    f32 = jnp.float32
    bf16 = jnp.bfloat16
    N, BC = x_ref.shape                                  # BC = block_b * C (lane-dense, 128)
    hwf = a * whalf

    def mm(p, q):                                        # bf16 MXU matmul, f32 accumulation
        return jnp.dot(p.astype(bf16), q.astype(bf16), preferred_element_type=f32)

    x = x_ref[...]                                       # (N, BC) f32

    # ---- packed small constants (pre-tiled to BC lanes, f32) ----------------------------
    gamma = const_ref[0:1, :]
    beta  = const_ref[1:2, :]
    b_r   = const_ref[2:3, :]
    b_i   = const_ref[3:4, :]
    b3    = const_ref[4:5, :]
    b1    = const_ref[5:6, :]
    cwr   = const_ref[8:8 + hwf, :]
    cwi   = const_ref[8 + hwf:8 + 2 * hwf, :]
    tap0  = 8 + 2 * hwf                                  # start of 9 per-tap mask slabs
    tok0  = tap0 + 9 * hwf                               # start of 2 token-shift mask slabs

    # -------- spectral branch (SpectralGatingNetwork) ------------------------------------
    xs = x[lens_x:, :]                                   # (n_sp, BC), 8-aligned static slice
    # per-channel-group LayerNorm stats via block-diag averaging matmul (no lane reductions)
    mu = mm(xs, avg_ref[...])
    var = mm(xs * xs, avg_ref[...]) - mu * mu
    xn = (xs - mu) * jax.lax.rsqrt(var + 1e-5) * gamma + beta

    # rfft2(norm='ortho') as ONE stacked real matmul shared across lane-batches
    xf = mm(dstack_ref[...], xn)                         # (2*hwf, BC)
    xr, xi = xf[:hwf, :], xf[hwf:, :]

    # conv3x3 (padding=1) on the (a, whalf) spectral grid: one wide channel-mix matmul
    # (BC, 9*BC) with 128-aligned tap slabs, then 9 roll + pre-broadcast-mask adds.
    def conv3x3_spec(xin, w_ref, bias):
        zw = mm(xin, w_ref[...])                         # (hwf, 9*BC)
        acc = jnp.zeros((hwf, BC), f32)
        for kh in range(3):
            for kw in range(3):
                k = kh * 3 + kw
                s = (kh - 1) * whalf + (kw - 1)          # flattened spatial offset
                zk = zw[:, k * BC:(k + 1) * BC]          # 128-lane aligned slab
                if s != 0:
                    zk = pltpu.roll(zk, (-s) % hwf, axis=0)   # out[i] = zk[(i + s) mod hwf]
                m = const_ref[tap0 + k * hwf: tap0 + (k + 1) * hwf, :]
                acc = acc + zk * m                       # zero out padded / wrapped taps
        return jnp.maximum(acc + bias, 0.0)

    o_r = conv3x3_spec(xr, wr_ref, b_r)
    o_i = conv3x3_spec(xi, wi_ref, b_i)

    # complex gating weight
    rr = o_r * cwr - o_i * cwi
    ri = o_r * cwi + o_i * cwr

    # irfft2(norm='ortho') as two real matmuls (Er, Ei passed separately, no concat)
    xsp = mm(er_ref[...], rr) + mm(ei_ref[...], ri)      # (n_sp, BC)

    # -------- token branch: SGBlock conv3x3 + conv1x1 on (B, C, N, 1) --------------------
    # fused block-diag channel mix: [tap(n-1) | tap(n) | tap(n+1) | conv1x1] -> (N, 4*BC)
    y = mm(x, wtok_ref[...])
    z0, z1, z2, z3 = (y[:, 0:BC], y[:, BC:2 * BC], y[:, 2 * BC:3 * BC], y[:, 3 * BC:4 * BC])
    m_prev = const_ref[tok0:tok0 + N, :]
    m_next = const_ref[tok0 + N:tok0 + 2 * N, :]
    z0s = pltpu.roll(z0, 1, axis=0) * m_prev             # z0[n-1], zero at n = 0
    z2s = pltpu.roll(z2, N - 1, axis=0) * m_next         # z2[n+1], zero at n = N-1
    xp = (jnp.maximum(z0s + z1 + z2s + b3, 0.0)
          + jnp.maximum(z3 + b1, 0.0))                   # (N, BC)

    # -------- combine + single full-block, lane-dense store ------------------------------
    top = jnp.maximum(xp[:lens_x, :] + x[:lens_x, :], 0.0)
    bot = jnp.maximum(xp[lens_x:, :] + xsp, 0.0)
    out_ref[...] = jnp.concatenate([top, bot], axis=0)


# --------------------------------------------------------------------------------------
# Host-side constant construction (cached / hoisted out of the per-call path)
# --------------------------------------------------------------------------------------
@functools.lru_cache(maxsize=None)
def build_fft_mats(a, b):
    whalf = b // 2 + 1
    nsp, hwf = a * b, a * whalf
    eye_r = np.eye(nsp, dtype=np.float64).reshape(nsp, a, b)
    spec = np.fft.rfft2(eye_r, axes=(1, 2), norm='ortho').reshape(nsp, hwf)
    D = spec.T                                               # (hwf, nsp) complex
    eye_c = np.eye(hwf, dtype=np.complex128).reshape(hwf, a, whalf)
    Er = np.fft.irfft2(eye_c, s=(a, b), axes=(1, 2), norm='ortho').reshape(hwf, nsp).T
    Ei = np.fft.irfft2(1j * eye_c, s=(a, b), axes=(1, 2), norm='ortho').reshape(hwf, nsp).T
    dstack = np.concatenate([D.real, D.imag], axis=0).astype(np.float32)   # (2*hwf, nsp)
    return dstack, Er.astype(np.float32), Ei.astype(np.float32)


def block_diag_taps(w_conv, n_rep):
    """(O, I, 3, 3) -> block-diag (n_rep*I, 9*n_rep*O); tap k slab = cols [k*n_rep*O, ...)."""
    O, I = w_conv.shape[0], w_conv.shape[1]
    out = np.zeros((n_rep * I, 9 * n_rep * O), np.float32)
    for kh in range(3):
        for kw in range(3):
            k = kh * 3 + kw
            wk = w_conv[:, :, kh, kw].T                      # (I, O)
            for r in range(n_rep):
                out[r * I:(r + 1) * I,
                    k * n_rep * O + r * O: k * n_rep * O + (r + 1) * O] = wk
    return out


def block_diag_token(w3, w1, n_rep):
    """Fused token weights: taps [n-1, n, n+1, conv1x1] -> block-diag (n_rep*C, 4*n_rep*C)."""
    C = w3.shape[0]
    taps = [w3[:, :, 0, 1].T, w3[:, :, 1, 1].T, w3[:, :, 2, 1].T, w1.T]   # each (I, O)
    out = np.zeros((n_rep * C, 4 * n_rep * C), np.float32)
    for k, wk in enumerate(taps):
        for r in range(n_rep):
            out[r * C:(r + 1) * C,
                k * n_rep * C + r * C: k * n_rep * C + (r + 1) * C] = wk
    return out


def pack_consts(params, a, whalf, N, C, n_rep):
    """One f32 (rows, n_rep*C) array: biases, gamma/beta, complex gate, tap & token masks."""
    BC = n_rep * C
    hwf = a * whalf

    def tile_row(v):
        return np.tile(np.asarray(v, np.float32).reshape(1, C), (1, n_rep))

    rows = np.zeros((8, BC), np.float32)
    rows[0] = tile_row(params['gamma'])
    rows[1] = tile_row(params['beta'])
    rows[2] = tile_row(params['b_conv_r'])
    rows[3] = tile_row(params['b_conv_i'])
    rows[4] = tile_row(params['b_conv3'])
    rows[5] = tile_row(params['b_conv1'])

    cw = np.asarray(params['complex_weight'], np.float32).reshape(hwf, C, 2)
    cwr = np.tile(cw[..., 0], (1, n_rep))                    # (hwf, BC)
    cwi = np.tile(cw[..., 1], (1, n_rep))

    tapm = np.zeros((9 * hwf, 1), np.float32)                # per-tap valid-neighbour masks
    for kh in range(3):
        for kw in range(3):
            k = kh * 3 + kw
            for r in range(a):
                for c in range(whalf):
                    if 0 <= r + kh - 1 < a and 0 <= c + kw - 1 < whalf:
                        tapm[k * hwf + r * whalf + c, 0] = 1.0
    tapm = np.broadcast_to(tapm, (9 * hwf, BC))

    tokm = np.ones((2 * N, BC), np.float32)                  # [prev-tap mask; next-tap mask]
    tokm[0, :] = 0.0                                         # x[n-1] invalid at n = 0
    tokm[N + N - 1, :] = 0.0                                 # x[n+1] invalid at n = N-1

    return np.concatenate([rows, cwr, cwi, tapm, tokm], axis=0)


# --------------------------------------------------------------------------------------
# Parameters (deterministic, synthetic; shapes follow the PyTorch module)
# --------------------------------------------------------------------------------------
def make_params(key, dim, h, w):
    whalf = w // 2 + 1
    ks = jax.random.split(key, 11)

    def uni(k, shape, bound):
        return jax.random.uniform(k, shape, jnp.float32, -bound, bound)

    b3 = 1.0 / math.sqrt(dim * 9)
    b1 = 1.0 / math.sqrt(dim * 1)
    return dict(
        gamma=1.0 + 0.1 * jax.random.normal(ks[0], (dim,), jnp.float32),   # LayerNorm weight
        beta=0.1 * jax.random.normal(ks[1], (dim,), jnp.float32),          # LayerNorm bias
        complex_weight=0.02 * jax.random.normal(ks[2], (h, whalf, dim, 2), jnp.float32),
        w_conv_r=uni(ks[3], (dim, dim, 3, 3), b3), b_conv_r=uni(ks[4], (dim,), b3),
        w_conv_i=uni(ks[5], (dim, dim, 3, 3), b3), b_conv_i=uni(ks[6], (dim,), b3),
        w_conv3=uni(ks[7], (dim, dim, 3, 3), b3), b_conv3=uni(ks[8], (dim,), b3),
        w_conv1=uni(ks[9], (dim, dim, 1, 1), b1), b_conv1=uni(ks[10], (dim,), b1),
    )


# --------------------------------------------------------------------------------------
# Builder: prepares all constants ONCE, returns a jitted callable (x -> out)
# --------------------------------------------------------------------------------------
def make_sgblock(params, lens_x, h, w, n_tok, block_b):
    C = int(np.asarray(params['gamma']).shape[0])
    a, b = h, w
    whalf = b // 2 + 1
    n_sp = a * b
    N = n_tok
    assert N == lens_x + n_sp
    BC = block_b * C
    assert BC % 128 == 0, "choose block_b so block_b*dim is a multiple of 128"

    dstack, Er, Ei = build_fft_mats(a, b)
    wr_bd = block_diag_taps(np.asarray(params['w_conv_r'], np.float32), block_b)
    wi_bd = block_diag_taps(np.asarray(params['w_conv_i'], np.float32), block_b)
    wtok_bd = block_diag_token(np.asarray(params['w_conv3'], np.float32),
                               np.asarray(params['w_conv1'], np.float32)[:, :, 0, 0],
                               block_b)
    avg = np.kron(np.eye(block_b, dtype=np.float32),
                  np.full((C, C), 1.0 / C, np.float32))       # block-diag channel averaging
    consts = pack_consts(params, a, whalf, N, C, block_b)

    bf = jnp.bfloat16
    dstack_d = jnp.asarray(dstack, bf)                        # (2*hwf, n_sp)
    er_d = jnp.asarray(Er, bf)                                # (n_sp, hwf)
    ei_d = jnp.asarray(Ei, bf)
    wr_d = jnp.asarray(wr_bd, bf)                             # (BC, 9*BC)
    wi_d = jnp.asarray(wi_bd, bf)
    wtok_d = jnp.asarray(wtok_bd, bf)                         # (BC, 4*BC)
    avg_d = jnp.asarray(avg, bf)                              # (BC, BC); entries 1/C exact
    consts_d = jnp.asarray(consts, jnp.float32)               # (592, BC) for the test shapes

    kernel = functools.partial(sgblock_kernel, lens_x=lens_x, a=a, whalf=whalf)
    weights = (dstack_d, er_d, ei_d, wr_d, wi_d, wtok_d, avg_d, consts_d)

    def const_spec(arr):
        nd = arr.ndim
        return pl.BlockSpec(tuple(arr.shape), lambda i, _n=nd: (0,) * _n)

    @jax.jit
    def fwd(x):
        B = x.shape[0]
        assert x.shape[1] == N and x.shape[2] == C
        assert B % block_b == 0, "batch must be a multiple of block_b"
        grid = B // block_b
        # wrapper-side layout plumbing: lane-stack the batches -> (N, B*C)
        x_t = jnp.transpose(x.astype(jnp.float32), (1, 0, 2)).reshape(N, B * C)

        in_specs = [pl.BlockSpec((N, BC), lambda i: (0, i))]
        in_specs += [const_spec(z) for z in weights]

        out = pl.pallas_call(
            kernel,
            out_shape=jax.ShapeDtypeStruct((N, B * C), jnp.float32),
            grid_spec=pltpu.PrefetchScalarGridSpec(
                num_scalar_prefetch=0,
                grid=(grid,),
                in_specs=in_specs,
                out_specs=pl.BlockSpec((N, BC), lambda i: (0, i)),
            ),
            # lane-blocks of batches are independent -> shard across TCs (v7x megacore)
            compiler_params=pltpu.CompilerParams(dimension_semantics=("parallel",)),
        )(x_t, *weights)
        return jnp.transpose(out.reshape(N, B, C), (1, 0, 2))

    return fwd


# --------------------------------------------------------------------------------------
# Pure numpy reference (float64) reproducing the PyTorch forward exactly
# --------------------------------------------------------------------------------------
def sgblock_ref(x, lens_x, params, h, w):
    x = np.asarray(x, np.float64)
    B, N, C = x.shape
    n_sp = N - lens_x
    a = b = int(math.sqrt(n_sp))
    gamma = np.asarray(params['gamma'], np.float64)
    beta = np.asarray(params['beta'], np.float64)

    # --- SpectralGatingNetwork ---
    z = x[:, :lens_x]
    xs = x[:, lens_x:]
    mu = xs.mean(-1, keepdims=True)
    var = ((xs - mu) ** 2).mean(-1, keepdims=True)
    xn = (xs - mu) / np.sqrt(var + 1e-5) * gamma + beta
    xg = xn.reshape(B, a, b, C)
    xf = np.fft.rfft2(xg, axes=(1, 2), norm='ortho')
    xr = np.transpose(xf.real, (0, 3, 1, 2))
    xi = np.transpose(xf.imag, (0, 3, 1, 2))

    def conv3x3(inp, wc, bc):
        Bn, Ci, H, W = inp.shape
        wc = np.asarray(wc, np.float64)
        bc = np.asarray(bc, np.float64)
        pad = np.pad(inp, ((0, 0), (0, 0), (1, 1), (1, 1)))
        out = np.zeros((Bn, wc.shape[0], H, W))
        for kh in range(3):
            for kw in range(3):
                out += np.einsum('bihw,oi->bohw',
                                 pad[:, :, kh:kh + H, kw:kw + W], wc[:, :, kh, kw])
        return out + bc[None, :, None, None]

    xr = np.maximum(conv3x3(xr, params['w_conv_r'], params['b_conv_r']), 0.0)
    xi = np.maximum(conv3x3(xi, params['w_conv_i'], params['b_conv_i']), 0.0)
    xc = (xr + 1j * xi).transpose(0, 2, 3, 1)
    cw = np.asarray(params['complex_weight'], np.float64)
    xc = xc * (cw[..., 0] + 1j * cw[..., 1])
    xsp = np.fft.irfft2(xc, s=(a, b), axes=(1, 2), norm='ortho').reshape(B, n_sp, C)
    x0 = np.concatenate([z, xsp], axis=1)

    # --- token branch (conv3x3 + conv1x1 on (B, C, N, 1)) ---
    xt = np.transpose(x, (0, 2, 1))[..., None]
    w3 = np.asarray(params['w_conv3'], np.float64)
    b3 = np.asarray(params['b_conv3'], np.float64)
    x1 = np.maximum(conv3x3(xt, w3, b3), 0.0)
    w1 = np.asarray(params['w_conv1'], np.float64)[:, :, 0, 0]
    b1 = np.asarray(params['b_conv1'], np.float64)
    x2 = np.einsum('binw,oi->bonw', xt, w1) + b1[None, :, None, None]
    x2 = np.maximum(x2, 0.0)
    xp = (x1 + x2)[:, :, :, 0].transpose(0, 2, 1)

    return np.maximum(xp + x0, 0.0)


# --------------------------------------------------------------------------------------
if __name__ == "__main__":
    key = jax.random.PRNGKey(0)
    B, dim, h, w, lens_x = 8, 32, 8, 8, 8        # N = lens_x + h*w = 72
    N = lens_x + h * w
    block_b = 4                                   # 4*32 = 128 lanes/step; grid = 2 (2 v7x TCs)
    kx, kp = jax.random.split(key)
    x = jax.random.normal(kx, (B, N, dim), jnp.float32)
    params = make_params(kp, dim, h, w)

    fwd = make_sgblock(params, lens_x, h, w, N, block_b)
    out = jax.block_until_ready(fwd(x))

    ref = sgblock_ref(np.asarray(x), lens_x, params, h, w)
    err = float(np.max(np.abs(np.asarray(out, np.float64) - ref)))
    assert out.shape == (B, N, dim)
    assert np.isfinite(np.asarray(out)).all()
    assert err < 3e-2, f"max abs err {err}"      # bf16 MXU operands, f32 accumulation
    print("KERNEL_OK")
</pallas_src>

<mosaic_0001>
module attributes {stable_mosaic.version = 11 : i64} {
  func.func @sgblock_kernel(%arg0: i32, %arg1: memref<72x128xf32, #tpu.memory_space<vmem>>, %arg2: memref<80x64xbf16, #tpu.memory_space<vmem>>, %arg3: memref<64x40xbf16, #tpu.memory_space<vmem>>, %arg4: memref<64x40xbf16, #tpu.memory_space<vmem>>, %arg5: memref<128x1152xbf16, #tpu.memory_space<vmem>>, %arg6: memref<128x1152xbf16, #tpu.memory_space<vmem>>, %arg7: memref<128x512xbf16, #tpu.memory_space<vmem>>, %arg8: memref<128x128xbf16, #tpu.memory_space<vmem>>, %arg9: memref<592x128xf32, #tpu.memory_space<vmem>>, %arg10: memref<72x128xf32, #tpu.memory_space<vmem>>) attributes {dimension_semantics = [#tpu.dimension_semantics<parallel>], iteration_bounds = array<i64: 2>, scalar_prefetch = 0 : i64, scratch_operands = 0 : i64, tpu.core_type = #tpu.core_type<tc>, window_params = [{transform_indices = @transform_0, window_bounds = array<i64: 72, 128>}, {pipeline_mode = #tpu.pipeline_mode<synchronous>, transform_indices = @transform_1, window_bounds = array<i64: 80, 64>}, {pipeline_mode = #tpu.pipeline_mode<synchronous>, transform_indices = @transform_2, window_bounds = array<i64: 64, 40>}, {pipeline_mode = #tpu.pipeline_mode<synchronous>, transform_indices = @transform_3, window_bounds = array<i64: 64, 40>}, {pipeline_mode = #tpu.pipeline_mode<synchronous>, transform_indices = @transform_4, window_bounds = array<i64: 128, 1152>}, {pipeline_mode = #tpu.pipeline_mode<synchronous>, transform_indices = @transform_5, window_bounds = array<i64: 128, 1152>}, {pipeline_mode = #tpu.pipeline_mode<synchronous>, transform_indices = @transform_6, window_bounds = array<i64: 128, 512>}, {pipeline_mode = #tpu.pipeline_mode<synchronous>, transform_indices = @transform_7, window_bounds = array<i64: 128, 128>}, {pipeline_mode = #tpu.pipeline_mode<synchronous>, transform_indices = @transform_8, window_bounds = array<i64: 592, 128>}, {transform_indices = @transform_9, window_bounds = array<i64: 72, 128>}]} {
    %c0 = arith.constant 0 : index
    %c0_0 = arith.constant 0 : index
    %0 = vector.load %arg1[%c0, %c0_0] : memref<72x128xf32, #tpu.memory_space<vmem>>, vector<72x128xf32>
    %c0_1 = arith.constant 0 : index
    %c0_2 = arith.constant 0 : index
    %1 = vector.load %arg9[%c0_1, %c0_2] : memref<592x128xf32, #tpu.memory_space<vmem>>, vector<1x128xf32>
    %c1 = arith.constant 1 : index
    %c0_3 = arith.constant 0 : index
    %2 = vector.load %arg9[%c1, %c0_3] : memref<592x128xf32, #tpu.memory_space<vmem>>, vector<1x128xf32>
    %c2 = arith.constant 2 : index
    %c0_4 = arith.constant 0 : index
    %3 = vector.load %arg9[%c2, %c0_4] : memref<592x128xf32, #tpu.memory_space<vmem>>, vector<1x128xf32>
    %c3 = arith.constant 3 : index
    %c0_5 = arith.constant 0 : index
    %4 = vector.load %arg9[%c3, %c0_5] : memref<592x128xf32, #tpu.memory_space<vmem>>, vector<1x128xf32>
    %c4 = arith.constant 4 : index
    %c0_6 = arith.constant 0 : index
    %5 = vector.load %arg9[%c4, %c0_6] : memref<592x128xf32, #tpu.memory_space<vmem>>, vector<1x128xf32>
    %c5 = arith.constant 5 : index
    %c0_7 = arith.constant 0 : index
    %6 = vector.load %arg9[%c5, %c0_7] : memref<592x128xf32, #tpu.memory_space<vmem>>, vector<1x128xf32>
    %c8 = arith.constant 8 : index
    %c0_8 = arith.constant 0 : index
    %7 = vector.load %arg9[%c8, %c0_8] : memref<592x128xf32, #tpu.memory_space<vmem>>, vector<40x128xf32>
    %c48 = arith.constant 48 : index
    %c0_9 = arith.constant 0 : index
    %8 = vector.load %arg9[%c48, %c0_9] : memref<592x128xf32, #tpu.memory_space<vmem>>, vector<40x128xf32>
    %9 = vector.extract_strided_slice %0 {offsets = [8, 0], sizes = [64, 128], strides = [1, 1]} : vector<72x128xf32> to vector<64x128xf32>
    %c0_10 = arith.constant 0 : index
    %c0_11 = arith.constant 0 : index
    %10 = vector.load %arg8[%c0_10, %c0_11] : memref<128x128xbf16, #tpu.memory_space<vmem>>, vector<128x128xbf16>
    %11 = arith.truncf %9 : vector<64x128xf32> to vector<64x128xbf16>
    %cst = arith.constant dense<0.000000e+00> : vector<64x128xf32>
    %12 = tpu.matmul %11, %10, %cst {dimension_numbers = #tpu.dot_dimension_numbers<[1], [0], [0], [1], [0, 0, 1, 1], [], []>} : vector<64x128xbf16>, vector<128x128xbf16>, vector<64x128xf32> -> vector<64x128xf32>
    %13 = arith.mulf %9, %9 : vector<64x128xf32>
    %c0_12 = arith.constant 0 : index
    %c0_13 = arith.constant 0 : index
    %14 = vector.load %arg8[%c0_12, %c0_13] : memref<128x128xbf16, #tpu.memory_space<vmem>>, vector<128x128xbf16>
    %15 = arith.truncf %13 : vector<64x128xf32> to vector<64x128xbf16>
    %cst_14 = arith.constant dense<0.000000e+00> : vector<64x128xf32>
    %16 = tpu.matmul %15, %14, %cst_14 {dimension_numbers = #tpu.dot_dimension_numbers<[1], [0], [0], [1], [0, 0, 1, 1], [], []>} : vector<64x128xbf16>, vector<128x128xbf16>, vector<64x128xf32> -> vector<64x128xf32>
    %17 = arith.mulf %12, %12 : vector<64x128xf32>
    %18 = arith.subf %16, %17 : vector<64x128xf32>
    %19 = arith.subf %9, %12 : vector<64x128xf32>
    %cst_15 = arith.constant 9.99999974E-6 : f32
    %20 = vector.broadcast %cst_15 : f32 to vector<64x128xf32>
    %21 = arith.addf %18, %20 : vector<64x128xf32>
    %22 = math.rsqrt %21 : vector<64x128xf32>
    %23 = arith.mulf %19, %22 : vector<64x128xf32>
    %24 = vector.broadcast %1 : vector<1x128xf32> to vector<64x128xf32>
    %25 = arith.mulf %23, %24 : vector<64x128xf32>
    %26 = vector.broadcast %2 : vector<1x128xf32> to vector<64x128xf32>
    %27 = arith.addf %25, %26 : vector<64x128xf32>
    %c0_16 = arith.constant 0 : index
    %c0_17 = arith.constant 0 : index
    %28 = vector.load %arg2[%c0_16, %c0_17] : memref<80x64xbf16, #tpu.memory_space<vmem>>, vector<80x64xbf16>
    %29 = arith.truncf %27 : vector<64x128xf32> to vector<64x128xbf16>
    %cst_18 = arith.constant dense<0.000000e+00> : vector<80x128xf32>
    %30 = tpu.matmul %28, %29, %cst_18 {dimension_numbers = #tpu.dot_dimension_numbers<[1], [0], [0], [1], [0, 0, 1, 1], [], []>} : vector<80x64xbf16>, vector<64x128xbf16>, vector<80x128xf32> -> vector<80x128xf32>
    %31 = vector.extract_strided_slice %30 {offsets = [0, 0], sizes = [40, 128], strides = [1, 1]} : vector<80x128xf32> to vector<40x128xf32>
    %32 = vector.extract_strided_slice %30 {offsets = [40, 0], sizes = [40, 128], strides = [1, 1]} : vector<80x128xf32> to vector<40x128xf32>
    %c0_19 = arith.constant 0 : index
    %c0_20 = arith.constant 0 : index
    %33 = vector.load %arg5[%c0_19, %c0_20] : memref<128x1152xbf16, #tpu.memory_space<vmem>>, vector<128x1152xbf16>
    %34 = arith.truncf %31 : vector<40x128xf32> to vector<40x128xbf16>
    %cst_21 = arith.constant dense<0.000000e+00> : vector<40x1152xf32>
    %35 = tpu.matmul %34, %33, %cst_21 {dimension_numbers = #tpu.dot_dimension_numbers<[1], [0], [0], [1], [0, 0, 1, 1], [], []>} : vector<40x128xbf16>, vector<128x1152xbf16>, vector<40x1152xf32> -> vector<40x1152xf32>
    %cst_22 = arith.constant 0.000000e+00 : f32
    %36 = vector.broadcast %cst_22 : f32 to vector<40x128xf32>
    %37 = vector.extract_strided_slice %35 {offsets = [0, 0], sizes = [40, 128], strides = [1, 1]} : vector<40x1152xf32> to vector<40x128xf32>
    %c6_i32 = arith.constant 6 : i32
    %38 = tpu.dynamic_rotate %37 by %c6_i32 dim 0 : vector<40x128xf32>, i32 -> vector<40x128xf32>
    %c88 = arith.constant 88 : index
    %c0_23 = arith.constant 0 : index
    %39 = vector.load %arg9[%c88, %c0_23] : memref<592x128xf32, #tpu.memory_space<vmem>>, vector<40x128xf32>
    %40 = arith.mulf %38, %39 : vector<40x128xf32>
    %41 = arith.addf %36, %40 : vector<40x128xf32>
    %42 = vector.extract_strided_slice %35 {offsets = [0, 128], sizes = [40, 128], strides = [1, 1]} : vector<40x1152xf32> to vector<40x128xf32>
    %c5_i32 = arith.constant 5 : i32
    %43 = tpu.dynamic_rotate %42 by %c5_i32 dim 0 : vector<40x128xf32>, i32 -> vector<40x128xf32>
    %c128 = arith.constant 128 : index
    %c0_24 = arith.constant 0 : index
    %44 = vector.load %arg9[%c128, %c0_24] : memref<592x128xf32, #tpu.memory_space<vmem>>, vector<40x128xf32>
    %45 = arith.mulf %43, %44 : vector<40x128xf32>
    %46 = arith.addf %41, %45 : vector<40x128xf32>
    %47 = vector.extract_strided_slice %35 {offsets = [0, 256], sizes = [40, 128], strides = [1, 1]} : vector<40x1152xf32> to vector<40x128xf32>
    %c4_i32 = arith.constant 4 : i32
    %48 = tpu.dynamic_rotate %47 by %c4_i32 dim 0 : vector<40x128xf32>, i32 -> vector<40x128xf32>
    %c168 = arith.constant 168 : index
    %c0_25 = arith.constant 0 : index
    %49 = vector.load %arg9[%c168, %c0_25] : memref<592x128xf32, #tpu.memory_space<vmem>>, vector<40x128xf32>
    %50 = arith.mulf %48, %49 : vector<40x128xf32>
    %51 = arith.addf %46, %50 : vector<40x128xf32>
    %52 = vector.extract_strided_slice %35 {offsets = [0, 384], sizes = [40, 128], strides = [1, 1]} : vector<40x1152xf32> to vector<40x128xf32>
    %c1_i32 = arith.constant 1 : i32
    %53 = tpu.dynamic_rotate %52 by %c1_i32 dim 0 : vector<40x128xf32>, i32 -> vector<40x128xf32>
    %c208 = arith.constant 208 : index
    %c0_26 = arith.constant 0 : index
    %54 = vector.load %arg9[%c208, %c0_26] : memref<592x128xf32, #tpu.memory_space<vmem>>, vector<40x128xf32>
    %55 = arith.mulf %53, %54 : vector<40x128xf32>
    %56 = arith.addf %51, %55 : vector<40x128xf32>
    %57 = vector.extract_strided_slice %35 {offsets = [0, 512], sizes = [40, 128], strides = [1, 1]} : vector<40x1152xf32> to vector<40x128xf32>
    %c248 = arith.constant 248 : index
    %c0_27 = arith.constant 0 : index
    %58 = vector.load %arg9[%c248, %c0_27] : memref<592x128xf32, #tpu.memory_space<vmem>>, vector<40x128xf32>
    %59 = arith.mulf %57, %58 : vector<40x128xf32>
    %60 = arith.addf %56, %59 : vector<40x128xf32>
    %61 = vector.extract_strided_slice %35 {offsets = [0, 640], sizes = [40, 128], strides = [1, 1]} : vector<40x1152xf32> to vector<40x128xf32>
    %c39_i32 = arith.constant 39 : i32
    %62 = tpu.dynamic_rotate %61 by %c39_i32 dim 0 : vector<40x128xf32>, i32 -> vector<40x128xf32>
    %c288 = arith.constant 288 : index
    %c0_28 = arith.constant 0 : index
    %63 = vector.load %arg9[%c288, %c0_28] : memref<592x128xf32, #tpu.memory_space<vmem>>, vector<40x128xf32>
    %64 = arith.mulf %62, %63 : vector<40x128xf32>
    %65 = arith.addf %60, %64 : vector<40x128xf32>
    %66 = vector.extract_strided_slice %35 {offsets = [0, 768], sizes = [40, 128], strides = [1, 1]} : vector<40x1152xf32> to vector<40x128xf32>
    %c36_i32 = arith.constant 36 : i32
    %67 = tpu.dynamic_rotate %66 by %c36_i32 dim 0 : vector<40x128xf32>, i32 -> vector<40x128xf32>
    %c328 = arith.constant 328 : index
    %c0_29 = arith.constant 0 : index
    %68 = vector.load %arg9[%c328, %c0_29] : memref<592x128xf32, #tpu.memory_space<vmem>>, vector<40x128xf32>
    %69 = arith.mulf %67, %68 : vector<40x128xf32>
    %70 = arith.addf %65, %69 : vector<40x128xf32>
    %71 = vector.extract_strided_slice %35 {offsets = [0, 896], sizes = [40, 128], strides = [1, 1]} : vector<40x1152xf32> to vector<40x128xf32>
    %c35_i32 = arith.constant 35 : i32
    %72 = tpu.dynamic_rotate %71 by %c35_i32 dim 0 : vector<40x128xf32>, i32 -> vector<40x128xf32>
    %c368 = arith.constant 368 : index
    %c0_30 = arith.constant 0 : index
    %73 = vector.load %arg9[%c368, %c0_30] : memref<592x128xf32, #tpu.memory_space<vmem>>, vector<40x128xf32>
    %74 = arith.mulf %72, %73 : vector<40x128xf32>
    %75 = arith.addf %70, %74 : vector<40x128xf32>
    %76 = vector.extract_strided_slice %35 {offsets = [0, 1024], sizes = [40, 128], strides = [1, 1]} : vector<40x1152xf32> to vector<40x128xf32>
    %c34_i32 = arith.constant 34 : i32
    %77 = tpu.dynamic_rotate %76 by %c34_i32 dim 0 : vector<40x128xf32>, i32 -> vector<40x128xf32>
    %c408 = arith.constant 408 : index
    %c0_31 = arith.constant 0 : index
    %78 = vector.load %arg9[%c408, %c0_31] : memref<592x128xf32, #tpu.memory_space<vmem>>, vector<40x128xf32>
    %79 = arith.mulf %77, %78 : vector<40x128xf32>
    %80 = arith.addf %75, %79 : vector<40x128xf32>
    %81 = vector.broadcast %3 : vector<1x128xf32> to vector<40x128xf32>
    %82 = arith.addf %80, %81 : vector<40x128xf32>
    %cst_32 = arith.constant 0.000000e+00 : f32
    %83 = vector.broadcast %cst_32 : f32 to vector<40x128xf32>
    %84 = arith.maximumf %82, %83 : vector<40x128xf32>
    %c0_33 = arith.constant 0 : index
    %c0_34 = arith.constant 0 : index
    %85 = vector.load %arg6[%c0_33, %c0_34] : memref<128x1152xbf16, #tpu.memory_space<vmem>>, vector<128x1152xbf16>
    %86 = arith.truncf %32 : vector<40x128xf32> to vector<40x128xbf16>
    %cst_35 = arith.constant dense<0.000000e+00> : vector<40x1152xf32>
    %87 = tpu.matmul %86, %85, %cst_35 {dimension_numbers = #tpu.dot_dimension_numbers<[1], [0], [0], [1], [0, 0, 1, 1], [], []>} : vector<40x128xbf16>, vector<128x1152xbf16>, vector<40x1152xf32> -> vector<40x1152xf32>
    %cst_36 = arith.constant 0.000000e+00 : f32
    %88 = vector.broadcast %cst_36 : f32 to vector<40x128xf32>
    %89 = vector.extract_strided_slice %87 {offsets = [0, 0], sizes = [40, 128], strides = [1, 1]} : vector<40x1152xf32> to vector<40x128xf32>
    %c6_i32_37 = arith.constant 6 : i32
    %90 = tpu.dynamic_rotate %89 by %c6_i32_37 dim 0 : vector<40x128xf32>, i32 -> vector<40x128xf32>
    %c88_38 = arith.constant 88 : index
    %c0_39 = arith.constant 0 : index
    %91 = vector.load %arg9[%c88_38, %c0_39] : memref<592x128xf32, #tpu.memory_space<vmem>>, vector<40x128xf32>
    %92 = arith.mulf %90, %91 : vector<40x128xf32>
    %93 = arith.addf %88, %92 : vector<40x128xf32>
    %94 = vector.extract_strided_slice %87 {offsets = [0, 128], sizes = [40, 128], strides = [1, 1]} : vector<40x1152xf32> to vector<40x128xf32>
    %c5_i32_40 = arith.constant 5 : i32
    %95 = tpu.dynamic_rotate %94 by %c5_i32_40 dim 0 : vector<40x128xf32>, i32 -> vector<40x128xf32>
    %c128_41 = arith.constant 128 : index
    %c0_42 = arith.constant 0 : index
    %96 = vector.load %arg9[%c128_41, %c0_42] : memref<592x128xf32, #tpu.memory_space<vmem>>, vector<40x128xf32>
    %97 = arith.mulf %95, %96 : vector<40x128xf32>
    %98 = arith.addf %93, %97 : vector<40x128xf32>
    %99 = vector.extract_strided_slice %87 {offsets = [0, 256], sizes = [40, 128], strides = [1, 1]} : vector<40x1152xf32> to vector<40x128xf32>
    %c4_i32_43 = arith.constant 4 : i32
    %100 = tpu.dynamic_rotate %99 by %c4_i32_43 dim 0 : vector<40x128xf32>, i32 -> vector<40x128xf32>
    %c168_44 = arith.constant 168 : index
    %c0_45 = arith.constant 0 : index
    %101 = vector.load %arg9[%c168_44, %c0_45] : memref<592x128xf32, #tpu.memory_space<vmem>>, vector<40x128xf32>
    %102 = arith.mulf %100, %101 : vector<40x128xf32>
    %103 = arith.addf %98, %102 : vector<40x128xf32>
    %104 = vector.extract_strided_slice %87 {offsets = [0, 384], sizes = [40, 128], strides = [1, 1]} : vector<40x1152xf32> to vector<40x128xf32>
    %c1_i32_46 = arith.constant 1 : i32
    %105 = tpu.dynamic_rotate %104 by %c1_i32_46 dim 0 : vector<40x128xf32>, i32 -> vector<40x128xf32>
    %c208_47 = arith.constant 208 : index
    %c0_48 = arith.constant 0 : index
    %106 = vector.load %arg9[%c208_47, %c0_48] : memref<592x128xf32, #tpu.memory_space<vmem>>, vector<40x128xf32>
    %107 = arith.mulf %105, %106 : vector<40x128xf32>
    %108 = arith.addf %103, %107 : vector<40x128xf32>
    %109 = vector.extract_strided_slice %87 {offsets = [0, 512], sizes = [40, 128], strides = [1, 1]} : vector<40x1152xf32> to vector<40x128xf32>
    %c248_49 = arith.constant 248 : index
    %c0_50 = arith.constant 0 : index
    %110 = vector.load %arg9[%c248_49, %c0_50] : memref<592x128xf32, #tpu.memory_space<vmem>>, vector<40x128xf32>
    %111 = arith.mulf %109, %110 : vector<40x128xf32>
    %112 = arith.addf %108, %111 : vector<40x128xf32>
    %113 = vector.extract_strided_slice %87 {offsets = [0, 640], sizes = [40, 128], strides = [1, 1]} : vector<40x1152xf32> to vector<40x128xf32>
    %c39_i32_51 = arith.constant 39 : i32
    %114 = tpu.dynamic_rotate %113 by %c39_i32_51 dim 0 : vector<40x128xf32>, i32 -> vector<40x128xf32>
    %c288_52 = arith.constant 288 : index
    %c0_53 = arith.constant 0 : index
    %115 = vector.load %arg9[%c288_52, %c0_53] : memref<592x128xf32, #tpu.memory_space<vmem>>, vector<40x128xf32>
    %116 = arith.mulf %114, %115 : vector<40x128xf32>
    %117 = arith.addf %112, %116 : vector<40x128xf32>
    %118 = vector.extract_strided_slice %87 {offsets = [0, 768], sizes = [40, 128], strides = [1, 1]} : vector<40x1152xf32> to vector<40x128xf32>
    %c36_i32_54 = arith.constant 36 : i32
    %119 = tpu.dynamic_rotate %118 by %c36_i32_54 dim 0 : vector<40x128xf32>, i32 -> vector<40x128xf32>
    %c328_55 = arith.constant 328 : index
    %c0_56 = arith.constant 0 : index
    %120 = vector.load %arg9[%c328_55, %c0_56] : memref<592x128xf32, #tpu.memory_space<vmem>>, vector<40x128xf32>
    %121 = arith.mulf %119, %120 : vector<40x128xf32>
    %122 = arith.addf %117, %121 : vector<40x128xf32>
    %123 = vector.extract_strided_slice %87 {offsets = [0, 896], sizes = [40, 128], strides = [1, 1]} : vector<40x1152xf32> to vector<40x128xf32>
    %c35_i32_57 = arith.constant 35 : i32
    %124 = tpu.dynamic_rotate %123 by %c35_i32_57 dim 0 : vector<40x128xf32>, i32 -> vector<40x128xf32>
    %c368_58 = arith.constant 368 : index
    %c0_59 = arith.constant 0 : index
    %125 = vector.load %arg9[%c368_58, %c0_59] : memref<592x128xf32, #tpu.memory_space<vmem>>, vector<40x128xf32>
    %126 = arith.mulf %124, %125 : vector<40x128xf32>
    %127 = arith.addf %122, %126 : vector<40x128xf32>
    %128 = vector.extract_strided_slice %87 {offsets = [0, 1024], sizes = [40, 128], strides = [1, 1]} : vector<40x1152xf32> to vector<40x128xf32>
    %c34_i32_60 = arith.constant 34 : i32
    %129 = tpu.dynamic_rotate %128 by %c34_i32_60 dim 0 : vector<40x128xf32>, i32 -> vector<40x128xf32>
    %c408_61 = arith.constant 408 : index
    %c0_62 = arith.constant 0 : index
    %130 = vector.load %arg9[%c408_61, %c0_62] : memref<592x128xf32, #tpu.memory_space<vmem>>, vector<40x128xf32>
    %131 = arith.mulf %129, %130 : vector<40x128xf32>
    %132 = arith.addf %127, %131 : vector<40x128xf32>
    %133 = vector.broadcast %4 : vector<1x128xf32> to vector<40x128xf32>
    %134 = arith.addf %132, %133 : vector<40x128xf32>
    %cst_63 = arith.constant 0.000000e+00 : f32
    %135 = vector.broadcast %cst_63 : f32 to vector<40x128xf32>
    %136 = arith.maximumf %134, %135 : vector<40x128xf32>
    %137 = arith.mulf %84, %7 : vector<40x128xf32>
    %138 = arith.mulf %136, %8 : vector<40x128xf32>
    %139 = arith.subf %137, %138 : vector<40x128xf32>
    %140 = arith.mulf %84, %8 : vector<40x128xf32>
    %141 = arith.mulf %136, %7 : vector<40x128xf32>
    %142 = arith.addf %140, %141 : vector<40x128xf32>
    %c0_64 = arith.constant 0 : index
    %c0_65 = arith.constant 0 : index
    %143 = vector.load %arg3[%c0_64, %c0_65] : memref<64x40xbf16, #tpu.memory_space<vmem>>, vector<64x40xbf16>
    %144 = arith.truncf %139 : vector<40x128xf32> to vector<40x128xbf16>
    %cst_66 = arith.constant dense<0.000000e+00> : vector<64x128xf32>
    %145 = tpu.matmul %143, %144, %cst_66 {dimension_numbers = #tpu.dot_dimension_numbers<[1], [0], [0], [1], [0, 0, 1, 1], [], []>} : vector<64x40xbf16>, vector<40x128xbf16>, vector<64x128xf32> -> vector<64x128xf32>
    %c0_67 = arith.constant 0 : index
    %c0_68 = arith.constant 0 : index
    %146 = vector.load %arg4[%c0_67, %c0_68] : memref<64x40xbf16, #tpu.memory_space<vmem>>, vector<64x40xbf16>
    %147 = arith.truncf %142 : vector<40x128xf32> to vector<40x128xbf16>
    %cst_69 = arith.constant dense<0.000000e+00> : vector<64x128xf32>
    %148 = tpu.matmul %146, %147, %cst_69 {dimension_numbers = #tpu.dot_dimension_numbers<[1], [0], [0], [1], [0, 0, 1, 1], [], []>} : vector<64x40xbf16>, vector<40x128xbf16>, vector<64x128xf32> -> vector<64x128xf32>
    %149 = arith.addf %145, %148 : vector<64x128xf32>
    %c0_70 = arith.constant 0 : index
    %c0_71 = arith.constant 0 : index
    %150 = vector.load %arg7[%c0_70, %c0_71] : memref<128x512xbf16, #tpu.memory_space<vmem>>, vector<128x512xbf16>
    %151 = arith.truncf %0 : vector<72x128xf32> to vector<72x128xbf16>
    %cst_72 = arith.constant dense<0.000000e+00> : vector<72x512xf32>
    %152 = tpu.matmul %151, %150, %cst_72 {dimension_numbers = #tpu.dot_dimension_numbers<[1], [0], [0], [1], [0, 0, 1, 1], [], []>} : vector<72x128xbf16>, vector<128x512xbf16>, vector<72x512xf32> -> vector<72x512xf32>
    %153 = vector.extract_strided_slice %152 {offsets = [0, 0], sizes = [72, 128], strides = [1, 1]} : vector<72x512xf32> to vector<72x128xf32>
    %154 = vector.extract_strided_slice %152 {offsets = [0, 128], sizes = [72, 128], strides = [1, 1]} : vector<72x512xf32> to vector<72x128xf32>
    %155 = vector.extract_strided_slice %152 {offsets = [0, 256], sizes = [72, 128], strides = [1, 1]} : vector<72x512xf32> to vector<72x128xf32>
    %156 = vector.extract_strided_slice %152 {offsets = [0, 384], sizes = [72, 128], strides = [1, 1]} : vector<72x512xf32> to vector<72x128xf32>
    %c448 = arith.constant 448 : index
    %c0_73 = arith.constant 0 : index
    %157 = vector.load %arg9[%c448, %c0_73] : memref<592x128xf32, #tpu.memory_space<vmem>>, vector<72x128xf32>
    %c520 = arith.constant 520 : index
    %c0_74 = arith.constant 0 : index
    %158 = vector.load %arg9[%c520, %c0_74] : memref<592x128xf32, #tpu.memory_space<vmem>>, vector<72x128xf32>
    %c1_i32_75 = arith.constant 1 : i32
    %159 = tpu.dynamic_rotate %153 by %c1_i32_75 dim 0 : vector<72x128xf32>, i32 -> vector<72x128xf32>
    %160 = arith.mulf %159, %157 : vector<72x128xf32>
    %c71_i32 = arith.constant 71 : i32
    %161 = tpu.dynamic_rotate %155 by %c71_i32 dim 0 : vector<72x128xf32>, i32 -> vector<72x128xf32>
    %162 = arith.mulf %161, %158 : vector<72x128xf32>
    %163 = arith.addf %160, %154 : vector<72x128xf32>
    %164 = arith.addf %163, %162 : vector<72x128xf32>
    %165 = vector.broadcast %5 : vector<1x128xf32> to vector<72x128xf32>
    %166 = arith.addf %164, %165 : vector<72x128xf32>
    %cst_76 = arith.constant 0.000000e+00 : f32
    %167 = vector.broadcast %cst_76 : f32 to vector<72x128xf32>
    %168 = arith.maximumf %166, %167 : vector<72x128xf32>
    %169 = vector.broadcast %6 : vector<1x128xf32> to vector<72x128xf32>
    %170 = arith.addf %156, %169 : vector<72x128xf32>
    %cst_77 = arith.constant 0.000000e+00 : f32
    %171 = vector.broadcast %cst_77 : f32 to vector<72x128xf32>
    %172 = arith.maximumf %170, %171 : vector<72x128xf32>
    %173 = arith.addf %168, %172 : vector<72x128xf32>
    %174 = vector.extract_strided_slice %173 {offsets = [0, 0], sizes = [8, 128], strides = [1, 1]} : vector<72x128xf32> to vector<8x128xf32>
    %175 = vector.extract_strided_slice %0 {offsets = [0, 0], sizes = [8, 128], strides = [1, 1]} : vector<72x128xf32> to vector<8x128xf32>
    %176 = arith.addf %174, %175 : vector<8x128xf32>
    %cst_78 = arith.constant 0.000000e+00 : f32
    %177 = vector.broadcast %cst_78 : f32 to vector<8x128xf32>
    %178 = arith.maximumf %176, %177 : vector<8x128xf32>
    %179 = vector.extract_strided_slice %173 {offsets = [8, 0], sizes = [64, 128], strides = [1, 1]} : vector<72x128xf32> to vector<64x128xf32>
    %180 = arith.addf %179, %149 : vector<64x128xf32>
    %cst_79 = arith.constant 0.000000e+00 : f32
    %181 = vector.broadcast %cst_79 : f32 to vector<64x128xf32>
    %182 = arith.maximumf %180, %181 : vector<64x128xf32>
    %183 = tpu.concatenate %178, %182 in 0 : vector<8x128xf32>, vector<64x128xf32> -> vector<72x128xf32>
    %c0_80 = arith.constant 0 : index
    %c0_81 = arith.constant 0 : index
    %184 = vector.load %arg10[%c0_80, %c0_81] : memref<72x128xf32, #tpu.memory_space<vmem>>, vector<72x128xf32>
    tpu.vector_store %arg10[%c0_80, %c0_81], %183 {strides = array<i32>} : memref<72x128xf32, #tpu.memory_space<vmem>>, vector<72x128xf32>,
    return
  }
  func.func @transform_0(%arg0: i32) -> (i32, i32) {
    %c0_i32 = arith.constant 0 : i32
    %c0_i32_0 = arith.constant 0 : i32
    return %c0_i32, %arg0 : i32, i32
  }
  func.func @transform_1(%arg0: i32) -> (i32, i32) {
    %c0_i32 = arith.constant 0 : i32
    %c0_i32_0 = arith.constant 0 : i32
    %c0_i32_1 = arith.constant 0 : i32
    return %c0_i32, %c0_i32_0 : i32, i32
  }
  func.func @transform_2(%arg0: i32) -> (i32, i32) {
    %c0_i32 = arith.constant 0 : i32
    %c0_i32_0 = arith.constant 0 : i32
    %c0_i32_1 = arith.constant 0 : i32
    return %c0_i32, %c0_i32_0 : i32, i32
  }
  func.func @transform_3(%arg0: i32) -> (i32, i32) {
    %c0_i32 = arith.constant 0 : i32
    %c0_i32_0 = arith.constant 0 : i32
    %c0_i32_1 = arith.constant 0 : i32
    return %c0_i32, %c0_i32_0 : i32, i32
  }
  func.func @transform_4(%arg0: i32) -> (i32, i32) {
    %c0_i32 = arith.constant 0 : i32
    %c0_i32_0 = arith.constant 0 : i32
    %c0_i32_1 = arith.constant 0 : i32
    return %c0_i32, %c0_i32_0 : i32, i32
  }
  func.func @transform_5(%arg0: i32) -> (i32, i32) {
    %c0_i32 = arith.constant 0 : i32
    %c0_i32_0 = arith.constant 0 : i32
    %c0_i32_1 = arith.constant 0 : i32
    return %c0_i32, %c0_i32_0 : i32, i32
  }
  func.func @transform_6(%arg0: i32) -> (i32, i32) {
    %c0_i32 = arith.constant 0 : i32
    %c0_i32_0 = arith.constant 0 : i32
    %c0_i32_1 = arith.constant 0 : i32
    return %c0_i32, %c0_i32_0 : i32, i32
  }
  func.func @transform_7(%arg0: i32) -> (i32, i32) {
    %c0_i32 = arith.constant 0 : i32
    %c0_i32_0 = arith.constant 0 : i32
    %c0_i32_1 = arith.constant 0 : i32
    return %c0_i32, %c0_i32_0 : i32, i32
  }
  func.func @transform_8(%arg0: i32) -> (i32, i32) {
    %c0_i32 = arith.constant 0 : i32
    %c0_i32_0 = arith.constant 0 : i32
    %c0_i32_1 = arith.constant 0 : i32
    return %c0_i32, %c0_i32_0 : i32, i32
  }
  func.func @transform_9(%arg0: i32) -> (i32, i32) {
    %c0_i32 = arith.constant 0 : i32
    %c0_i32_0 = arith.constant 0 : i32
    return %c0_i32, %arg0 : i32, i32
  }
}

</mosaic_0001>

<llo_original>
// kernel: fwd.1
$region0: #{fwd.1}
  #allocation0 [shape = 'u32[]', space=smem, size = 0x4, offset = 0x4, fixed_abs, tag = 'smem constant byte address 0x4 - core index']
  #allocation1 [shape = 'u32[72,128]{1,0:T(1,128)}', space=vmem, size = 0x9000, scoped, tag = 'internal scratch']
  %s0 = inlined_call_operand.vmem [shape: f32[72,256], index: 0, kind: input, shape index: {}]
  %s1 = inlined_call_operand.vmem [shape: bf16[80,64], index: 1, kind: input, shape index: {}]
  %s2 = inlined_call_operand.hbm [shape: bf16[64,40], index: 2, kind: input, shape index: {}]
  %s3 = inlined_call_operand.vmem [shape: bf16[64,40], index: 3, kind: input, shape index: {}]
  %s4 = inlined_call_operand.hbm [shape: bf16[128,1152], index: 4, kind: input, shape index: {}]
  %s5 = inlined_call_operand.hbm [shape: bf16[128,1152], index: 5, kind: input, shape index: {}]
  %s6 = inlined_call_operand.vmem [shape: bf16[128,512], index: 6, kind: input, shape index: {}]
  %s7 = inlined_call_operand.vmem [shape: bf16[128,128], index: 7, kind: input, shape index: {}]
  %s8 = inlined_call_operand.hbm [shape: f32[592,128], index: 8, kind: input, shape index: {}]
  %s9 = inlined_call_operand.vmem [shape: f32[72,256], index: 9, kind: output, shape index: {}]
  %s10 = sld [smem:[#allocation0]]
  $region157: #{fwd.1} parent=0
    _
  %s12 = ssub.s32 1, %s10
  %s13 = scalar_select 0, %s12, %s10
  $region1: #{fwd.1} parent=0
    #allocation2 [shape = 'u8[73728]{0}', space=vmem, size = 0x12000, scoped, tag = 'input window, operand 0']
    #allocation3 [shape = 'u8[16384]{0}', space=vmem, size = 0x4000, scoped, tag = 'input window, operand 2, single buffered']
    #allocation4 [shape = 's32[2]{0}', space=sflag, size = 0x8, scoped, tag = 'scoped memory for fwd.1']
    #allocation5 [shape = 'u8[294912]{0}', space=vmem, size = 0x48000, scoped, tag = 'input window, operand 4, single buffered']
    #allocation6 [shape = 's32[1]{0}', space=sflag, size = 0x4, scoped, tag = 'scoped memory for fwd.1']
    #allocation7 [shape = 'u8[294912]{0}', space=vmem, size = 0x48000, scoped, tag = 'input window, operand 5, single buffered']
    #allocation8 [shape = 'u8[303104]{0}', space=vmem, size = 0x4a000, scoped, tag = 'input window, operand 8, single buffered']
    #allocation9 [shape = 's32[1]{0}', space=sflag, size = 0x4, scoped, tag = 'scoped memory for fwd.1']
    #allocation10 [shape = 'u8[73728]{0}', space=vmem, size = 0x12000, scoped, tag = 'output window, operand 0']
    %14 = vsyncpa [#allocation4], 0
    %15 = vsyncpa [#allocation6], 0
    %16 = vsyncpa [#allocation9], 0
    loop: start=0, step=1, limit=4
    $region2: #{fwd.1} parent=1 // loop_pre_header
      _
    $region3: #{fwd.1} parent=1 // loop_header
      %s18 = sphi 0, %s22
      %p19 = scmp.ge.s32.totalorder %s18, 4
      %s28 = sphi 0, %s30
      %s31 = sphi 0, %s28
      %s32 = sphi 0, %s31
      %s48 = sphi 0, %s32
      %s52 = sphi 0, %s52
      %s54 = sphi 0, %s52
      %s55 = sphi 0, %s54
      %s69 = sphi 0, %s55
      %s73 = sphi 0, %s73
      %s75 = sphi 0, %s73
      %s76 = sphi 0, %s75
      %s90 = sphi 0, %s76
      %s94 = sphi 0, %s94
      %s96 = sphi 0, %s94
      %s97 = sphi 0, %s96
      %s111 = sphi 0, %s97
      %s115 = sphi 0, %s115
      %s117 = sphi 0, %s115
      %s118 = sphi 0, %s117
      %s132 = sphi 0, %s118
      %s136 = sphi 0, %s136
      %s138 = sphi 0, %s136
      %s139 = sphi 0, %s138
      %s153 = sphi 0, %s139
      %s157 = sphi 0, %s157
      %s159 = sphi 0, %s157
      %s160 = sphi 0, %s159
      %s174 = sphi 0, %s160
      %s178 = sphi 0, %s178
      %s180 = sphi 0, %s178
      %s181 = sphi 0, %s180
      %s195 = sphi 0, %s181
      %s199 = sphi 0, %s199
      %s201 = sphi 0, %s199
      %s202 = sphi 0, %s201
      %s216 = sphi 0, %s202
      %s222 = sphi 0, %s224
      %s225 = sphi 0, %s222
      %s226 = sphi 0, %s225
      %s242 = sphi 0, %s226
    $region4: #{fwd.1} parent=1 // loop_header_branch
      %21 = sbr.rel (%p19) target = $region8
    $region5: #{fwd.1} parent=1 // loop_body
      %s23 = ssub.s32 %s18, 1
      %s24 = ssub.s32 %s18, 2
      %s25 = sadd.s32 %s18, 1
      %s26 = ssub.s32 %s18, %s25
      %p27 = scmp.eq.s32.totalorder %s26, 0
      %s29 = sadd.s32 %s28, 1
      %s30 = scalar_select %p27, %s28, %s29
      %p33 = pneg %p27
      %p34 = scmp.eq.s32.totalorder %s18, 1
      %p35 = por %p33, %p34
      %p36 = scmp.ne.s32.totalorder %s28, %s31
      %p37 = scmp.eq.s32.totalorder %s18, 0
      %p38 = por %p36, %p37
      %p39 = scmp.ne.s32.totalorder %s28, %s31
      %p40 = scmp.eq.s32.totalorder %s23, 1
      %p41 = por %p39, %p40
      %p42 = scmp.ne.s32.totalorder %s31, %s32
      %p43 = scmp.eq.s32.totalorder %s23, 0
      %p44 = por %p42, %p43
      %p45 = scmp.ne.s32.totalorder %s31, %s32
      %p46 = scmp.eq.s32.totalorder %s24, 1
      %p47 = por %p45, %p46
      %p49 = scmp.ne.s32.totalorder %s32, %s48
      %p50 = scmp.eq.s32.totalorder %s24, 0
      %p51 = por %p49, %p50
      %s53 = sadd.s32 %s52, 1
      %p56 = scmp.eq.s32.totalorder %s18, 1
      %p57 = scmp.ne.s32.totalorder %s52, %s54
      %p58 = scmp.eq.s32.totalorder %s18, 0
      %p59 = por %p57, %p58
      %p60 = scmp.ne.s32.totalorder %s52, %s54
      %p61 = scmp.eq.s32.totalorder %s23, 1
      %p62 = por %p60, %p61
      %p63 = scmp.ne.s32.totalorder %s54, %s55
      %p64 = scmp.eq.s32.totalorder %s23, 0
      %p65 = por %p63, %p64
      %p66 = scmp.ne.s32.totalorder %s54, %s55
      %p67 = scmp.eq.s32.totalorder %s24, 1
      %p68 = por %p66, %p67
      %p70 = scmp.ne.s32.totalorder %s55, %s69
      %p71 = scmp.eq.s32.totalorder %s24, 0
      %p72 = por %p70, %p71
      %s74 = sadd.s32 %s73, 1
      %p77 = scmp.eq.s32.totalorder %s18, 1
      %p78 = scmp.ne.s32.totalorder %s73, %s75
      %p79 = scmp.eq.s32.totalorder %s18, 0
      %p80 = por %p78, %p79
      %p81 = scmp.ne.s32.totalorder %s73, %s75
      %p82 = scmp.eq.s32.totalorder %s23, 1
      %p83 = por %p81, %p82
      %p84 = scmp.ne.s32.totalorder %s75, %s76
      %p85 = scmp.eq.s32.totalorder %s23, 0
      %p86 = por %p84, %p85
      %p87 = scmp.ne.s32.totalorder %s75, %s76
      %p88 = scmp.eq.s32.totalorder %s24, 1
      %p89 = por %p87, %p88
      %p91 = scmp.ne.s32.totalorder %s76, %s90
      %p92 = scmp.eq.s32.totalorder %s24, 0
      %p93 = por %p91, %p92
      %s95 = sadd.s32 %s94, 1
      %p98 = scmp.eq.s32.totalorder %s18, 1
      %p99 = scmp.ne.s32.totalorder %s94, %s96
      %p100 = scmp.eq.s32.totalorder %s18, 0
      %p101 = por %p99, %p100
      %p102 = scmp.ne.s32.totalorder %s94, %s96
      %p103 = scmp.eq.s32.totalorder %s23, 1
      %p104 = por %p102, %p103
      %p105 = scmp.ne.s32.totalorder %s96, %s97
      %p106 = scmp.eq.s32.totalorder %s23, 0
      %p107 = por %p105, %p106
      %p108 = scmp.ne.s32.totalorder %s96, %s97
      %p109 = scmp.eq.s32.totalorder %s24, 1
      %p110 = por %p108, %p109
      %p112 = scmp.ne.s32.totalorder %s97, %s111
      %p113 = scmp.eq.s32.totalorder %s24, 0
      %p114 = por %p112, %p113
      %s116 = sadd.s32 %s115, 1
      %p119 = scmp.eq.s32.totalorder %s18, 1
      %p120 = scmp.ne.s32.totalorder %s115, %s117
      %p121 = scmp.eq.s32.totalorder %s18, 0
      %p122 = por %p120, %p121
      %p123 = scmp.ne.s32.totalorder %s115, %s117
      %p124 = scmp.eq.s32.totalorder %s23, 1
      %p125 = por %p123, %p124
      %p126 = scmp.ne.s32.totalorder %s117, %s118
      %p127 = scmp.eq.s32.totalorder %s23, 0
      %p128 = por %p126, %p127
      %p129 = scmp.ne.s32.totalorder %s117, %s118
      %p130 = scmp.eq.s32.totalorder %s24, 1
      %p131 = por %p129, %p130
      %p133 = scmp.ne.s32.totalorder %s118, %s132
      %p134 = scmp.eq.s32.totalorder %s24, 0
      %p135 = por %p133, %p134
      %s137 = sadd.s32 %s136, 1
      %p140 = scmp.eq.s32.totalorder %s18, 1
      %p141 = scmp.ne.s32.totalorder %s136, %s138
      %p142 = scmp.eq.s32.totalorder %s18, 0
      %p143 = por %p141, %p142
      %p144 = scmp.ne.s32.totalorder %s136, %s138
      %p145 = scmp.eq.s32.totalorder %s23, 1
      %p146 = por %p144, %p145
      %p147 = scmp.ne.s32.totalorder %s138, %s139
      %p148 = scmp.eq.s32.totalorder %s23, 0
      %p149 = por %p147, %p148
      %p150 = scmp.ne.s32.totalorder %s138, %s139
      %p151 = scmp.eq.s32.totalorder %s24, 1
      %p152 = por %p150, %p151
      %p154 = scmp.ne.s32.totalorder %s139, %s153
      %p155 = scmp.eq.s32.totalorder %s24, 0
      %p156 = por %p154, %p155
      %s158 = sadd.s32 %s157, 1
      %p161 = scmp.eq.s32.totalorder %s18, 1
      %p162 = scmp.ne.s32.totalorder %s157, %s159
      %p163 = scmp.eq.s32.totalorder %s18, 0
      %p164 = por %p162, %p163
      %p165 = scmp.ne.s32.totalorder %s157, %s159
      %p166 = scmp.eq.s32.totalorder %s23, 1
      %p167 = por %p165, %p166
      %p168 = scmp.ne.s32.totalorder %s159, %s160
      %p169 = scmp.eq.s32.totalorder %s23, 0
      %p170 = por %p168, %p169
      %p171 = scmp.ne.s32.totalorder %s159, %s160
      %p172 = scmp.eq.s32.totalorder %s24, 1
      %p173 = por %p171, %p172
      %p175 = scmp.ne.s32.totalorder %s160, %s174
      %p176 = scmp.eq.s32.totalorder %s24, 0
      %p177 = por %p175, %p176
      %s179 = sadd.s32 %s178, 1
      %p182 = scmp.eq.s32.totalorder %s18, 1
      %p183 = scmp.ne.s32.totalorder %s178, %s180
      %p184 = scmp.eq.s32.totalorder %s18, 0
      %p185 = por %p183, %p184
      %p186 = scmp.ne.s32.totalorder %s178, %s180
      %p187 = scmp.eq.s32.totalorder %s23, 1
      %p188 = por %p186, %p187
      %p189 = scmp.ne.s32.totalorder %s180, %s181
      %p190 = scmp.eq.s32.totalorder %s23, 0
      %p191 = por %p189, %p190
      %p192 = scmp.ne.s32.totalorder %s180, %s181
      %p193 = scmp.eq.s32.totalorder %s24, 1
      %p194 = por %p192, %p193
      %p196 = scmp.ne.s32.totalorder %s181, %s195
      %p197 = scmp.eq.s32.totalorder %s24, 0
      %p198 = por %p196, %p197
      %s200 = sadd.s32 %s199, 1
      %p203 = scmp.eq.s32.totalorder %s18, 1
      %p204 = scmp.ne.s32.totalorder %s199, %s201
      %p205 = scmp.eq.s32.totalorder %s18, 0
      %p206 = por %p204, %p205
      %p207 = scmp.ne.s32.totalorder %s199, %s201
      %p208 = scmp.eq.s32.totalorder %s23, 1
      %p209 = por %p207, %p208
      %p210 = scmp.ne.s32.totalorder %s201, %s202
      %p211 = scmp.eq.s32.totalorder %s23, 0
      %p212 = por %p210, %p211
      %p213 = scmp.ne.s32.totalorder %s201, %s202
      %p214 = scmp.eq.s32.totalorder %s24, 1
      %p215 = por %p213, %p214
      %p217 = scmp.ne.s32.totalorder %s202, %s216
      %p218 = scmp.eq.s32.totalorder %s24, 0
      %p219 = por %p217, %p218
      %s220 = ssub.s32 %s18, %s25
      %p221 = scmp.eq.s32.totalorder %s220, 0
      %s223 = sadd.s32 %s222, 1
      %s224 = scalar_select %p221, %s222, %s223
      %p227 = pneg %p221
      %p228 = scmp.eq.s32.totalorder %s18, 1
      %p229 = por %p227, %p228
      %p230 = scmp.ne.s32.totalorder %s222, %s225
      %p231 = scmp.eq.s32.totalorder %s18, 0
      %p232 = por %p230, %p231
      %p233 = scmp.ne.s32.totalorder %s222, %s225
      %p234 = scmp.eq.s32.totalorder %s23, 1
      %p235 = por %p233, %p234
      %p236 = scmp.ne.s32.totalorder %s225, %s226
      %p237 = scmp.eq.s32.totalorder %s23, 0
      %p238 = por %p236, %p237
      %p239 = scmp.ne.s32.totalorder %s225, %s226
      %p240 = scmp.eq.s32.totalorder %s24, 1
      %p241 = por %p239, %p240
      %p243 = scmp.ne.s32.totalorder %s226, %s242
      %p244 = scmp.eq.s32.totalorder %s24, 0
      %p245 = por %p243, %p244
      %p246 = scmp.le.s32.totalorder 1, %s18
      %p247 = scmp.lt.s32.totalorder %s18, 3
      %p248 = pnand %p246, %p247
      %p249 = pneg %p248
      // Predicated region
      $region9: #{fwd.1} parent=5 // pred_check
        _
      $region10: #{fwd.1} parent=5 // pred_check_branch
        %251 = sbr.rel (%p248) target = $region12
      $region11: #{fwd.1} parent=5 // pred_region
        %s252 = ssub.s32 %s18, 1
        // Predicated region
        $region13: #{fwd.1} parent=11 // pred_check
          %p253 = pneg %p65
        $region14: #{fwd.1} parent=11 // pred_check_branch
          %255 = sbr.rel (%p253) target = $region16
        $region15: #{fwd.1} parent=11 // pred_region
          _
        $region16: #{fwd.1} parent=11 // pred_fallthru
          _
        // Predicated region
        $region17: #{fwd.1} parent=11 // pred_check
          %p256 = pneg %p86
        $region18: #{fwd.1} parent=11 // pred_check_branch
          %258 = sbr.rel (%p256) target = $region20
        $region19: #{fwd.1} parent=11 // pred_region
          %260 = vsyncadd [#allocation4], 0
          %s261 = sshll.u32 %s2, 4
          %s262 = int_to_ptr.hbm [resolvable:$true] %s261
          %s263 = sshll.u32 [#allocation3], 4
          %s264 = int_to_ptr.vmem [resolvable:$true] %s263
          %269 = dma.hbm_to_vmem [thread:$0]  %s262, 512, %s264, [#allocation4], 64, 64, 4
        $region20: #{fwd.1} parent=11 // pred_fallthru
          _
        // Predicated region
        $region21: #{fwd.1} parent=11 // pred_check
          %p270 = pneg %p107
        $region22: #{fwd.1} parent=11 // pred_check_branch
          %272 = sbr.rel (%p270) target = $region24
        $region23: #{fwd.1} parent=11 // pred_region
          _
        $region24: #{fwd.1} parent=11 // pred_fallthru
          _
        // Predicated region
        $region25: #{fwd.1} parent=11 // pred_check
          %p273 = pneg %p128
        $region26: #{fwd.1} parent=11 // pred_check_branch
          %275 = sbr.rel (%p273) target = $region28
        $region27: #{fwd.1} parent=11 // pred_region
          %277 = vsyncadd [#allocation6], 0
          %s278 = sshll.u32 %s4, 4
          %s279 = int_to_ptr.hbm [resolvable:$true] %s278
          %s280 = sshll.u32 [#allocation5], 4
          %s281 = int_to_ptr.vmem [resolvable:$true] %s280
          %286 = dma.hbm_to_vmem [thread:$0]  %s279, 9216, %s281, [#allocation6], 576, 576, 36
        $region28: #{fwd.1} parent=11 // pred_fallthru
          _
        // Predicated region
        $region29: #{fwd.1} parent=11 // pred_check
          %p287 = pneg %p149
        $region30: #{fwd.1} parent=11 // pred_check_branch
          %289 = sbr.rel (%p287) target = $region32
        $region31: #{fwd.1} parent=11 // pred_region
          %291 = vsyncadd [#allocation6], 0
          %s292 = sshll.u32 %s5, 4
          %s293 = int_to_ptr.hbm [resolvable:$true] %s292
          %s294 = sshll.u32 [#allocation7], 4
          %s295 = int_to_ptr.vmem [resolvable:$true] %s294
          %300 = dma.hbm_to_vmem [thread:$0]  %s293, 9216, %s295, [#allocation6], 576, 576, 36
        $region32: #{fwd.1} parent=11 // pred_fallthru
          _
        // Predicated region
        $region33: #{fwd.1} parent=11 // pred_check
          %p301 = pneg %p170
        $region34: #{fwd.1} parent=11 // pred_check_branch
          %303 = sbr.rel (%p301) target = $region36
        $region35: #{fwd.1} parent=11 // pred_region
          _
        $region36: #{fwd.1} parent=11 // pred_fallthru
          _
        // Predicated region
        $region37: #{fwd.1} parent=11 // pred_check
          %p304 = pneg %p191
        $region38: #{fwd.1} parent=11 // pred_check_branch
          %306 = sbr.rel (%p304) target = $region40
        $region39: #{fwd.1} parent=11 // pred_region
          _
        $region40: #{fwd.1} parent=11 // pred_fallthru
          _
        // Predicated region
        $region41: #{fwd.1} parent=11 // pred_check
          %p307 = pneg %p212
        $region42: #{fwd.1} parent=11 // pred_check_branch
          %309 = sbr.rel (%p307) target = $region44
        $region43: #{fwd.1} parent=11 // pred_region
          %311 = vsyncadd [#allocation9], 0
          %s312 = sshll.u32 %s8, 4
          %s313 = int_to_ptr.hbm [resolvable:$true] %s312
          %s314 = sshll.u32 [#allocation8], 4
          %s315 = int_to_ptr.vmem [resolvable:$true] %s314
          %320 = dma.hbm_to_vmem [thread:$0]  %s313, 9472, %s315, [#allocation9], 128, 128, 8
        $region44: #{fwd.1} parent=11 // pred_fallthru
          _
      $region12: #{fwd.1} parent=5 // pred_fallthru
        _
      %p321 = scmp.lt.s32.totalorder %s18, 2
      // Predicated region
      $region45: #{fwd.1} parent=5 // pred_check
        %p322 = pneg %p321
      $region46: #{fwd.1} parent=5 // pred_check_branch
        %324 = sbr.rel (%p322) target = $region48
      $region47: #{fwd.1} parent=5 // pred_region
        // Predicated region
        $region49: #{fwd.1} parent=47 // pred_check
          %p325 = pneg %p38
        $region50: #{fwd.1} parent=47 // pred_check_branch
          %327 = sbr.rel (%p325) target = $region52
        $region51: #{fwd.1} parent=47 // pred_region
          %s328 = sand.u32 %s28, 1
          %s329 = sand.u32 %s28, 1
          %s330 = smul.addr %s329, 72
          %s331 = scalar_lea.vmem [#allocation2], %s330
          %s332 = smul.addr %s18, 8
          %s333 = scalar_lea.vmem %s0, %s332
          // Predicated region
          $region53: #{fwd.1} parent=51 // pred_check
            _
          $region54: #{fwd.1} parent=51 // pred_check_branch
            %335 = sbr.rel (0) target = $region56
          $region55: #{fwd.1} parent=51 // pred_region
            // Predicated region
            $region57: #{fwd.1} parent=55 // pred_check
              _
            $region58: #{fwd.1} parent=55 // pred_check_branch
              %337 = sbr.rel (0) target = $region60
            $region59: #{fwd.1} parent=55 // pred_region
              // Predicated region
              $region72: #{fwd.1} parent=59 // pred_check
                _
              $region73: #{fwd.1} parent=59 // pred_check_branch
                %369 = sbr.rel (0) target = $region75
              $region74: #{fwd.1} parent=59 // pred_region
                loop: start=0, step=1, limit=1
                $region76: #{fwd.1} parent=74 // loop_pre_header
                  _
                $region77: #{fwd.1} parent=74 // loop_header
                  %s371 = sphi 0, %s375
                  %p372 = scmp.ge.s32.totalorder %s371, 1
                  %s376 = sphi %s333, %s333
                  %s377 = sphi %s331, %s331
                $region78: #{fwd.1} parent=74 // loop_header_branch
                  %374 = sbr.rel (%p372) target = $region82
                $region79: #{fwd.1} parent=74 // loop_body
                  %v378 = vld [vmem:[%s376] sm:$0xff]
                  %379 = vst [vmem:[%s377] sm:$0xff] %v378
                  %v380 = vld [vmem:[%s376 + $0x10] sm:$0xff]
                  %381 = vst [vmem:[%s377 + $0x8] sm:$0xff] %v380
                  %v382 = vld [vmem:[%s376 + $0x20] sm:$0xff]
                  %383 = vst [vmem:[%s377 + $0x10] sm:$0xff] %v382
                  %v384 = vld [vmem:[%s376 + $0x30] sm:$0xff]
                  %385 = vst [vmem:[%s377 + $0x18] sm:$0xff] %v384
                  %v386 = vld [vmem:[%s376 + $0x40] sm:$0xff]
                  %387 = vst [vmem:[%s377 + $0x20] sm:$0xff] %v386
                  %v388 = vld [vmem:[%s376 + $0x50] sm:$0xff]
                  %389 = vst [vmem:[%s377 + $0x28] sm:$0xff] %v388
                  %v390 = vld [vmem:[%s376 + $0x60] sm:$0xff]
                  %391 = vst [vmem:[%s377 + $0x30] sm:$0xff] %v390
                  %v392 = vld [vmem:[%s376 + $0x70] sm:$0xff]
                  %393 = vst [vmem:[%s377 + $0x38] sm:$0xff] %v392
                  %v394 = vld [vmem:[%s376 + $0x80] sm:$0xff]
                  %395 = vst [vmem:[%s377 + $0x40] sm:$0xff] %v394
                $region80: #{fwd.1} parent=74 // loop_footer
                  %s375 = sadd.s32 1, %s371
                $region81: #{fwd.1} parent=74 // loop_footer_branch
                  %370 = sbr.rel target = $region77
                $region82: #{fwd.1} parent=74 // loop_exit
                  _
              $region75: #{fwd.1} parent=59 // pred_fallthru
                _
              // Predicated region
              $region83: #{fwd.1} parent=59 // pred_check
                _
              $region84: #{fwd.1} parent=59 // pred_check_branch
                %397 = sbr.rel target = $region86
              $region85: #{fwd.1} parent=59 // pred_region
                _
              $region86: #{fwd.1} parent=59 // pred_fallthru
                _
            $region60: #{fwd.1} parent=55 // pred_fallthru
              _
            // Predicated region
            $region61: #{fwd.1} parent=55 // pred_check
              _
            $region62: #{fwd.1} parent=55 // pred_check_branch
              %339 = sbr.rel target = $region64
            $region63: #{fwd.1} parent=55 // pred_region
              %s341 = ssub.s32 256, 1
              loop: start=0, step=1, limit=1
              $region65: #{fwd.1} parent=63 // loop_pre_header
                _
              $region66: #{fwd.1} parent=63 // loop_header
                %s343 = sphi 0, %s347
                %p344 = scmp.ge.s32.totalorder %s343, 1
                %s348 = sphi %s333, %s333
                %s349 = sphi %s331, %s331
              $region67: #{fwd.1} parent=63 // loop_header_branch
                %346 = sbr.rel (%p344) target = $region71
              $region68: #{fwd.1} parent=63 // loop_body
                %v350 = vld [vmem:[%s348] sm:%s341]
                %351 = vst [vmem:[%s349] sm:%s341] %v350
                %v352 = vld [vmem:[%s348 + $0x10] sm:%s341]
                %353 = vst [vmem:[%s349 + $0x8] sm:%s341] %v352
                %v354 = vld [vmem:[%s348 + $0x20] sm:%s341]
                %355 = vst [vmem:[%s349 + $0x10] sm:%s341] %v354
                %v356 = vld [vmem:[%s348 + $0x30] sm:%s341]
                %357 = vst [vmem:[%s349 + $0x18] sm:%s341] %v356
                %v358 = vld [vmem:[%s348 + $0x40] sm:%s341]
                %359 = vst [vmem:[%s349 + $0x20] sm:%s341] %v358
                %v360 = vld [vmem:[%s348 + $0x50] sm:%s341]
                %361 = vst [vmem:[%s349 + $0x28] sm:%s341] %v360
                %v362 = vld [vmem:[%s348 + $0x60] sm:%s341]
                %363 = vst [vmem:[%s349 + $0x30] sm:%s341] %v362
                %v364 = vld [vmem:[%s348 + $0x70] sm:%s341]
                %365 = vst [vmem:[%s349 + $0x38] sm:%s341] %v364
                %v366 = vld [vmem:[%s348 + $0x80] sm:%s341]
                %367 = vst [vmem:[%s349 + $0x40] sm:%s341] %v366
              $region69: #{fwd.1} parent=63 // loop_footer
                %s347 = sadd.s32 1, %s343
              $region70: #{fwd.1} parent=63 // loop_footer_branch
                %342 = sbr.rel target = $region66
              $region71: #{fwd.1} parent=63 // loop_exit
                _
            $region64: #{fwd.1} parent=55 // pred_fallthru
              _
          $region56: #{fwd.1} parent=51 // pred_fallthru
            _
          %398 = vnop
        $region52: #{fwd.1} parent=47 // pred_fallthru
          _
      $region48: #{fwd.1} parent=5 // pred_fallthru
        _
      %p399 = scmp.le.s32.totalorder 1, %s18
      %p400 = scmp.lt.s32.totalorder %s18, 3
      %p401 = pnand %p399, %p400
      %p402 = pneg %p401
      // Predicated region
      $region87: #{fwd.1} parent=5 // pred_check
        _
      $region88: #{fwd.1} parent=5 // pred_check_branch
        %404 = sbr.rel (%p401) target = $region90
      $region89: #{fwd.1} parent=5 // pred_region
        %s405 = ssub.s32 %s18, 1
        %s406 = sand.u32 %s31, 1
        %s407 = sand.u32 %s31, 1
        %s408 = smul.addr %s407, 72
        %s409 = scalar_lea.vmem [#allocation2], %s408
        // Predicated region
        $region91: #{fwd.1} parent=89 // pred_check
          %p410 = pneg %p44
        $region92: #{fwd.1} parent=89 // pred_check_branch
          %412 = sbr.rel (%p410) target = $region94
        $region93: #{fwd.1} parent=89 // pred_region
          _
        $region94: #{fwd.1} parent=89 // pred_fallthru
          _
        // Predicated region
        $region95: #{fwd.1} parent=89 // pred_check
          %p413 = pneg %p86
        $region96: #{fwd.1} parent=89 // pred_check_branch
          %415 = sbr.rel (%p413) target = $region98
        $region97: #{fwd.1} parent=89 // pred_region
          %417 = dma.done [#allocation4], 512
        $region98: #{fwd.1} parent=89 // pred_fallthru
          _
        // Predicated region
        $region99: #{fwd.1} parent=89 // pred_check
          %p418 = pneg %p128
        $region100: #{fwd.1} parent=89 // pred_check_branch
          %420 = sbr.rel (%p418) target = $region102
        $region101: #{fwd.1} parent=89 // pred_region
          %422 = dma.done [#allocation6], 9216
        $region102: #{fwd.1} parent=89 // pred_fallthru
          _
        // Predicated region
        $region103: #{fwd.1} parent=89 // pred_check
          %p423 = pneg %p149
        $region104: #{fwd.1} parent=89 // pred_check_branch
          %425 = sbr.rel (%p423) target = $region106
        $region105: #{fwd.1} parent=89 // pred_region
          %427 = dma.done [#allocation6], 9216
        $region106: #{fwd.1} parent=89 // pred_fallthru
          _
        // Predicated region
        $region107: #{fwd.1} parent=89 // pred_check
          %p428 = pneg %p212
        $region108: #{fwd.1} parent=89 // pred_check_branch
          %430 = sbr.rel (%p428) target = $region110
        $region109: #{fwd.1} parent=89 // pred_region
          %432 = dma.done [#allocation9], 9472
        $region110: #{fwd.1} parent=89 // pred_fallthru
          _
        %s433 = sand.u32 %s31, 1
        %s434 = sand.u32 %s31, 1
        %s435 = smul.addr %s434, 72
        %s436 = scalar_lea.vmem [#allocation2], %s435
        %p437 = pneg %p44
        %p438 = pneg %p41
        %p439 = pneg %p65
        %p440 = pneg %p62
        %p441 = pneg %p86
        %p442 = pneg %p83
        %p443 = pneg %p107
        %p444 = pneg %p104
        %p445 = pneg %p128
        %p446 = pneg %p125
        %p447 = pneg %p149
        %p448 = pneg %p146
        %p449 = pneg %p170
        %p450 = pneg %p167
        %p451 = pneg %p191
        %p452 = pneg %p188
        %p453 = pneg %p212
        %p454 = pneg %p209
        %p455 = pneg %p238
        %p456 = pneg %p235
        %s457 = sand.u32 %s225, 1
        %s458 = sand.u32 %s225, 1
        %s459 = smul.addr %s458, 72
        %s460 = scalar_lea.vmem [#allocation10], %s459
        %v462 = vld [vmem:[%s409] sm:$0xff]
        %v463 = vld [vmem:[%s409 + $0x8] sm:$0xff]
        %v464 = vld [vmem:[%s409 + $0x10] sm:$0xff]
        %v465 = vld [vmem:[%s409 + $0x18] sm:$0xff]
        %v466 = vld [vmem:[%s409 + $0x20] sm:$0xff]
        %v467 = vld [vmem:[%s409 + $0x28] sm:$0xff]
        %v468 = vld [vmem:[%s409 + $0x30] sm:$0xff]
        %v469 = vld [vmem:[%s409 + $0x38] sm:$0xff]
        %v470 = vld [vmem:[%s409 + $0x40] sm:$0xff]
        %v471 = vld [vmem:[#allocation8] sm:$0x1]
        %v472 = vld [vmem:[#allocation8 + $0x1] sm:$0x1]
        %v473 = vld [vmem:[#allocation8 + $0x2] sm:$0x1]
        %v474 = vld [vmem:[#allocation8 + $0x3] sm:$0x1]
        %v475 = vld [vmem:[#allocation8 + $0x4] sm:$0x1]
        %v476 = vld [vmem:[#allocation8 + $0x5] sm:$0x1]
        %v477 = vld [vmem:[#allocation8 + $0x8] sm:$0xff]
        %v478 = vld [vmem:[#allocation8 + $0x10] sm:$0xff]
        %v479 = vld [vmem:[#allocation8 + $0x18] sm:$0xff]
        %v480 = vld [vmem:[#allocation8 + $0x20] sm:$0xff]
        %v481 = vld [vmem:[#allocation8 + $0x28] sm:$0xff]
        %v482 = vld [vmem:[#allocation8 + $0x30] sm:$0xff]
        %v483 = vld [vmem:[#allocation8 + $0x38] sm:$0xff]
        %v484 = vld [vmem:[#allocation8 + $0x40] sm:$0xff]
        %v485 = vld [vmem:[#allocation8 + $0x48] sm:$0xff]
        %v486 = vld [vmem:[#allocation8 + $0x50] sm:$0xff]
        %v487 = vld [vmem:[%s7] sm:$0xf]
        %v488 = vld [vmem:[%s7 + $0x4] sm:$0xf]
        %v489 = vld [vmem:[%s7 + $0x8] sm:$0xf]
        %v490 = vld [vmem:[%s7 + $0xc] sm:$0xf]
        %v491 = vld [vmem:[%s7 + $0x10] sm:$0xf]
        %v492 = vld [vmem:[%s7 + $0x14] sm:$0xf]
        %v493 = vld [vmem:[%s7 + $0x18] sm:$0xf]
        %v494 = vld [vmem:[%s7 + $0x1c] sm:$0xf]
        %v495 = vld [vmem:[%s7 + $0x20] sm:$0xf]
        %v496 = vld [vmem:[%s7 + $0x24] sm:$0xf]
        %v497 = vld [vmem:[%s7 + $0x28] sm:$0xf]
        %v498 = vld [vmem:[%s7 + $0x2c] sm:$0xf]
        %v499 = vld [vmem:[%s7 + $0x30] sm:$0xf]
        %v500 = vld [vmem:[%s7 + $0x34] sm:$0xf]
        %v501 = vld [vmem:[%s7 + $0x38] sm:$0xf]
        %v502 = vld [vmem:[%s7 + $0x3c] sm:$0xf]
        %v503 = vpack.c.bf16 %v464, %v463
        %v504 = vpack.c.bf16 %v466, %v465
        %v505 = vpack.c.bf16 %v468, %v467
        %v506 = vpack.c.bf16 %v470, %v469
        %v523 = vunpack.c.l.b16 %v487
        %v524 = vunpack.c.l.b16 %v488
        %v525 = vunpack.c.l.b16 %v489
        %v526 = vunpack.c.l.b16 %v490
        %v527 = vunpack.c.l.b16 %v491
        %v528 = vunpack.c.l.b16 %v492
        %v529 = vunpack.c.l.b16 %v493
        %v530 = vunpack.c.l.b16 %v494
        %v531 = vunpack.c.l.b16 %v495
        %v532 = vunpack.c.l.b16 %v496
        %v533 = vunpack.c.l.b16 %v497
        %v534 = vunpack.c.l.b16 %v498
        %v535 = vunpack.c.l.b16 %v499
        %v536 = vunpack.c.l.b16 %v500
        %v537 = vunpack.c.l.b16 %v501
        %v538 = vunpack.c.l.b16 %v502
        %v539 = vpack.c.b16 %v524, %v523
        %v540 = vpack.c.b16 %v526, %v525
        %v541 = vpack.c.b16 %v528, %v527
        %v542 = vpack.c.b16 %v530, %v529
        %v543 = vpack.c.b16 %v532, %v531
        %v544 = vpack.c.b16 %v534, %v533
        %v545 = vpack.c.b16 %v536, %v535
        %v546 = vpack.c.b16 %v538, %v537
        %555 = vmatpush.bf16.msra.mxu0 %v546
        %556 = vmatpush.bf16.msra.mxu0 %v545
        %557 = vmatpush.bf16.msra.mxu0 %v544
        %558 = vmatpush.bf16.msra.mxu0 %v543
        %559 = vmatpush.bf16.msra.mxu0 %v542
        %560 = vmatpush.bf16.msra.mxu0 %v541
        %561 = vmatpush.bf16.msra.mxu0 %v540
        %562 = vmatpush.bf16.msra.mxu0 %v539
        %563 = vmatmul.bf16.gmra.mxu0 %v503
        %v564 = vpop.f32.mrf.mxu0
        %v565 = vadd.f32 0.0, %v564
        %v566 = vpop.f32.mrf.mxu0
        %v567 = vadd.f32 0.0, %v566
        %568 = vmatmul.bf16.gmra.mxu0 %v504
        %v569 = vpop.f32.mrf.mxu0
        %v570 = vadd.f32 0.0, %v569
        %v571 = vpop.f32.mrf.mxu0
        %v572 = vadd.f32 0.0, %v571
        %573 = vmatmul.bf16.gmra.mxu0 %v505
        %v574 = vpop.f32.mrf.mxu0
        %v575 = vadd.f32 0.0, %v574
        %v576 = vpop.f32.mrf.mxu0
        %v577 = vadd.f32 0.0, %v576
        %578 = vmatmul.bf16.gmra.mxu0 %v506
        %v579 = vpop.f32.mrf.mxu0
        %v580 = vadd.f32 0.0, %v579
        %v581 = vpop.f32.mrf.mxu0
        %v582 = vadd.f32 0.0, %v581
        %583 = vdwg.mxu0
        %v584 = vmul.f32 %v463, %v463
        %v585 = vmul.f32 %v464, %v464
        %v586 = vmul.f32 %v465, %v465
        %v587 = vmul.f32 %v466, %v466
        %v588 = vmul.f32 %v467, %v467
        %v589 = vmul.f32 %v468, %v468
        %v590 = vmul.f32 %v469, %v469
        %v591 = vmul.f32 %v470, %v470
        %v592 = vpack.c.bf16 %v585, %v584
        %v593 = vpack.c.bf16 %v587, %v586
        %v594 = vpack.c.bf16 %v589, %v588
        %v595 = vpack.c.bf16 %v591, %v590
        %596 = vmatpush.bf16.msra.mxu0 %v546
        %597 = vmatpush.bf16.msra.mxu0 %v545
        %598 = vmatpush.bf16.msra.mxu0 %v544
        %599 = vmatpush.bf16.msra.mxu0 %v543
        %600 = vmatpush.bf16.msra.mxu0 %v542
        %601 = vmatpush.bf16.msra.mxu0 %v541
        %602 = vmatpush.bf16.msra.mxu0 %v540
        %603 = vmatpush.bf16.msra.mxu0 %v539
        %604 = vmatmul.bf16.gmra.mxu0 %v592
        %v605 = vpop.f32.mrf.mxu0
        %v606 = vadd.f32 0.0, %v605
        %v607 = vpop.f32.mrf.mxu0
        %v608 = vadd.f32 0.0, %v607
        %609 = vmatmul.bf16.gmra.mxu0 %v593
        %v610 = vpop.f32.mrf.mxu0
        %v611 = vadd.f32 0.0, %v610
        %v612 = vpop.f32.mrf.mxu0
        %v613 = vadd.f32 0.0, %v612
        %614 = vmatmul.bf16.gmra.mxu0 %v594
        %v615 = vpop.f32.mrf.mxu0
        %v616 = vadd.f32 0.0, %v615
        %v617 = vpop.f32.mrf.mxu0
        %v618 = vadd.f32 0.0, %v617
        %619 = vmatmul.bf16.gmra.mxu0 %v595
        %v620 = vpop.f32.mrf.mxu0
        %v621 = vadd.f32 0.0, %v620
        %v622 = vpop.f32.mrf.mxu0
        %v623 = vadd.f32 0.0, %v622
        %624 = vdwg.mxu0
        %v625 = vmul.f32 %v565, %v565
        %v626 = vmul.f32 %v567, %v567
        %v627 = vmul.f32 %v570, %v570
        %v628 = vmul.f32 %v572, %v572
        %v629 = vmul.f32 %v575, %v575
        %v630 = vmul.f32 %v577, %v577
        %v631 = vmul.f32 %v580, %v580
        %v632 = vmul.f32 %v582, %v582
        %v633 = vsub.f32 %v606, %v625
        %v634 = vsub.f32 %v608, %v626
        %v635 = vsub.f32 %v611, %v627
        %v636 = vsub.f32 %v613, %v628
        %v637 = vsub.f32 %v616, %v629
        %v638 = vsub.f32 %v618, %v630
        %v639 = vsub.f32 %v621, %v631
        %v640 = vsub.f32 %v623, %v632
        %v641 = vsub.f32 %v463, %v565
        %v642 = vsub.f32 %v464, %v567
        %v643 = vsub.f32 %v465, %v570
        %v644 = vsub.f32 %v466, %v572
        %v645 = vsub.f32 %v467, %v575
        %v646 = vsub.f32 %v468, %v577
        %v647 = vsub.f32 %v469, %v580
        %v648 = vsub.f32 %v470, %v582
        %v649 = vadd.f32 %v633, 1e-05
        %v650 = vadd.f32 %v634, 1e-05
        %v651 = vadd.f32 %v635, 1e-05
        %v652 = vadd.f32 %v636, 1e-05
        %v653 = vadd.f32 %v637, 1e-05
        %v654 = vadd.f32 %v638, 1e-05
        %v655 = vadd.f32 %v639, 1e-05
        %v656 = vadd.f32 %v640, 1e-05
        %v657 = vrsqrt.pop %v649
        %v658 = vmul.f32 %v657, %v649
        %v659 = vmul.f32 %v658, %v657
        %v660 = vmul.f32 0.5, %v659
        %v661 = vsub.f32 1.5, %v660
        %v662 = vmul.f32 %v657, %v661
        %vm663 = vweird.f32 %v649
        %vm664 = vweird.f32 %v657
        %vm665 = vmor %vm663, %vm664
        %v666 = vsel %vm665, %v657, %v662
        %v667 = vrsqrt.pop %v650
        %v668 = vmul.f32 %v667, %v650
        %v669 = vmul.f32 %v668, %v667
        %v670 = vmul.f32 0.5, %v669
        %v671 = vsub.f32 1.5, %v670
        %v672 = vmul.f32 %v667, %v671
        %vm673 = vweird.f32 %v650
        %vm674 = vweird.f32 %v667
        %vm675 = vmor %vm673, %vm674
        %v676 = vsel %vm675, %v667, %v672
        %v677 = vrsqrt.pop %v651
        %v678 = vmul.f32 %v677, %v651
        %v679 = vmul.f32 %v678, %v677
        %v680 = vmul.f32 0.5, %v679
        %v681 = vsub.f32 1.5, %v680
        %v682 = vmul.f32 %v677, %v681
        %vm683 = vweird.f32 %v651
        %vm684 = vweird.f32 %v677
        %vm685 = vmor %vm683, %vm684
        %v686 = vsel %vm685, %v677, %v682
        %v687 = vrsqrt.pop %v652
        %v688 = vmul.f32 %v687, %v652
        %v689 = vmul.f32 %v688, %v687
        %v690 = vmul.f32 0.5, %v689
        %v691 = vsub.f32 1.5, %v690
        %v692 = vmul.f32 %v687, %v691
        %vm693 = vweird.f32 %v652
        %vm694 = vweird.f32 %v687
        %vm695 = vmor %vm693, %vm694
        %v696 = vsel %vm695, %v687, %v692
        %v697 = vrsqrt.pop %v653
        %v698 = vmul.f32 %v697, %v653
        %v699 = vmul.f32 %v698, %v697
        %v700 = vmul.f32 0.5, %v699
        %v701 = vsub.f32 1.5, %v700
        %v702 = vmul.f32 %v697, %v701
        %vm703 = vweird.f32 %v653
        %vm704 = vweird.f32 %v697
        %vm705 = vmor %vm703, %vm704
        %v706 = vsel %vm705, %v697, %v702
        %v707 = vrsqrt.pop %v654
        %v708 = vmul.f32 %v707, %v654
        %v709 = vmul.f32 %v708, %v707
        %v710 = vmul.f32 0.5, %v709
        %v711 = vsub.f32 1.5, %v710
        %v712 = vmul.f32 %v707, %v711
        %vm713 = vweird.f32 %v654
        %vm714 = vweird.f32 %v707
        %vm715 = vmor %vm713, %vm714
        %v716 = vsel %vm715, %v707, %v712
        %v717 = vrsqrt.pop %v655
        %v718 = vmul.f32 %v717, %v655
        %v719 = vmul.f32 %v718, %v717
        %v720 = vmul.f32 0.5, %v719
        %v721 = vsub.f32 1.5, %v720
        %v722 = vmul.f32 %v717, %v721
        %vm723 = vweird.f32 %v655
        %vm724 = vweird.f32 %v717
        %vm725 = vmor %vm723, %vm724
        %v726 = vsel %vm725, %v717, %v722
        %v727 = vrsqrt.pop %v656
        %v728 = vmul.f32 %v727, %v656
        %v729 = vmul.f32 %v728, %v727
        %v730 = vmul.f32 0.5, %v729
        %v731 = vsub.f32 1.5, %v730
        %v732 = vmul.f32 %v727, %v731
        %vm733 = vweird.f32 %v656
        %vm734 = vweird.f32 %v727
        %vm735 = vmor %vm733, %vm734
        %v736 = vsel %vm735, %v727, %v732
        %v737 = vmul.f32 %v641, %v666
        %v738 = vmul.f32 %v642, %v676
        %v739 = vmul.f32 %v643, %v686
        %v740 = vmul.f32 %v644, %v696
        %v741 = vmul.f32 %v645, %v706
        %v742 = vmul.f32 %v646, %v716
        %v743 = vmul.f32 %v647, %v726
        %v744 = vmul.f32 %v648, %v736
        %v745 = vperm.slane %v471, 0
        %v746 = vmul.f32 %v737, %v745
        %v747 = vmul.f32 %v738, %v745
        %v748 = vmul.f32 %v739, %v745
        %v749 = vmul.f32 %v740, %v745
        %v750 = vmul.f32 %v741, %v745
        %v751 = vmul.f32 %v742, %v745
        %v752 = vmul.f32 %v743, %v745
        %v753 = vmul.f32 %v744, %v745
        %v754 = vperm.slane %v472, 0
        %v755 = vadd.f32 %v746, %v754
        %v756 = vadd.f32 %v747, %v754
        %v757 = vadd.f32 %v748, %v754
        %v758 = vadd.f32 %v749, %v754
        %v759 = vadd.f32 %v750, %v754
        %v760 = vadd.f32 %v751, %v754
        %v761 = vadd.f32 %v752, %v754
        %v762 = vadd.f32 %v753, %v754
        %v763 = vld [vmem:[%s1] sm:$0xf]
        %v764 = vld [vmem:[%s1 + $0x4] sm:$0xf]
        %v765 = vld [vmem:[%s1 + $0x8] sm:$0xf]
        %v766 = vld [vmem:[%s1 + $0xc] sm:$0xf]
        %v767 = vld [vmem:[%s1 + $0x10] sm:$0xf]
        %v768 = vld [vmem:[%s1 + $0x14] sm:$0xf]
        %v769 = vld [vmem:[%s1 + $0x18] sm:$0xf]
        %v770 = vld [vmem:[%s1 + $0x1c] sm:$0xf]
        %v771 = vld [vmem:[%s1 + $0x20] sm:$0xf]
        %v772 = vld [vmem:[%s1 + $0x24] sm:$0xf]
        %v773 = vpack.c.bf16 %v756, %v755
        %v774 = vpack.c.bf16 %v758, %v757
        %v775 = vpack.c.bf16 %v760, %v759
        %v776 = vpack.c.bf16 %v762, %v761
        %v787 = vunpack.c.l.b16 %v763
        %v788 = vunpack.c.l.b16 %v764
        %v789 = vunpack.c.l.b16 %v765
        %v790 = vunpack.c.l.b16 %v766
        %v791 = vunpack.c.l.b16 %v767
        %v792 = vunpack.c.l.b16 %v768
        %v793 = vunpack.c.l.b16 %v769
        %v794 = vunpack.c.l.b16 %v770
        %v795 = vunpack.c.l.b16 %v771
        %v796 = vunpack.c.l.b16 %v772
        %v797 = vpack.c.b16 %v788, %v787
        %v798 = vpack.c.b16 %v790, %v789
        %v799 = vpack.c.b16 %v792, %v791
        %v800 = vpack.c.b16 %v794, %v793
        %v801 = vpack.c.b16 %v796, %v795
        %vm802 = vcmask 523264
        %v804 = vsel %vm802, %v797, 0
        %v807 = vsel %vm802, %v798, 0
        %v810 = vsel %vm802, %v799, 0
        %v813 = vsel %vm802, %v800, 0
        %v816 = vsel %vm802, %v801, 0
        %818 = vmatpush.bf16.msra.mxu0 0
        %819 = vmatpush.bf16.msra.mxu0 0
        %820 = vmatpush.bf16.msra.mxu0 0
        %821 = vmatpush.bf16.msra.mxu0 0
        %822 = vmatpush.bf16.msra.mxu0 %v776
        %823 = vmatpush.bf16.msra.mxu0 %v775
        %824 = vmatpush.bf16.msra.mxu0 %v774
        %825 = vmatpush.bf16.msra.mxu0 %v773
        %826 = vmatmul.bf16.gmra.mxu0 %v804
        %v827 = vpop.f32.mrf.mxu0
        %v828 = vadd.f32 0.0, %v827
        %v829 = vpop.f32.mrf.mxu0
        %v830 = vadd.f32 0.0, %v829
        %831 = vmatmul.bf16.gmra.mxu0 %v807
        %v832 = vpop.f32.mrf.mxu0
        %v833 = vadd.f32 0.0, %v832
        %v834 = vpop.f32.mrf.mxu0
        %v835 = vadd.f32 0.0, %v834
        %836 = vmatmul.bf16.gmra.mxu0 %v810
        %v837 = vpop.f32.mrf.mxu0
        %v838 = vadd.f32 0.0, %v837
        %v839 = vpop.f32.mrf.mxu0
        %v840 = vadd.f32 0.0, %v839
        %841 = vmatmul.bf16.gmra.mxu0 %v813
        %v842 = vpop.f32.mrf.mxu0
        %v843 = vadd.f32 0.0, %v842
        %v844 = vpop.f32.mrf.mxu0
        %v845 = vadd.f32 0.0, %v844
        %846 = vmatmul.bf16.gmra.mxu0 %v816
        %v847 = vpop.f32.mrf.mxu0
        %v848 = vadd.f32 0.0, %v847
        %v849 = vpop.f32.mrf.mxu0
        %v850 = vadd.f32 0.0, %v849
        %851 = vdwg.mxu0
        %v852 = vld [vmem:[#allocation5] sm:$0xff]
        %v853 = vld [vmem:[#allocation5 + $0x8] sm:$0xff]
        %v854 = vld [vmem:[#allocation5 + $0x10] sm:$0xff]
        %v855 = vld [vmem:[#allocation5 + $0x18] sm:$0xff]
        %v856 = vld [vmem:[#allocation5 + $0x20] sm:$0xf]
        %v857 = vld [vmem:[#allocation5 + $0x24] sm:$0xff]
        %v858 = vld [vmem:[#allocation5 + $0x2c] sm:$0xff]
        %v859 = vld [vmem:[#allocation5 + $0x34] sm:$0xff]
        %v860 = vld [vmem:[#allocation5 + $0x3c] sm:$0xff]
        %v861 = vld [vmem:[#allocation5 + $0x44] sm:$0xf]
        %v862 = vld [vmem:[#allocation5 + $0x48] sm:$0xff]
        %v863 = vld [vmem:[#allocation5 + $0x50] sm:$0xff]
        %v864 = vld [vmem:[#allocation5 + $0x58] sm:$0xff]
        %v865 = vld [vmem:[#allocation5 + $0x60] sm:$0xff]
        %v866 = vld [vmem:[#allocation5 + $0x68] sm:$0xf]
        %v867 = vld [vmem:[#allocation5 + $0x6c] sm:$0xff]
        %v868 = vld [vmem:[#allocation5 + $0x74] sm:$0xff]
        %v869 = vld [vmem:[#allocation5 + $0x7c] sm:$0xff]
        %v870 = vld [vmem:[#allocation5 + $0x84] sm:$0xff]
        %v871 = vld [vmem:[#allocation5 + $0x8c] sm:$0xf]
        %v872 = vld [vmem:[#allocation5 + $0x90] sm:$0xff]
        %v873 = vld [vmem:[#allocation5 + $0x98] sm:$0xff]
        %v874 = vld [vmem:[#allocation5 + $0xa0] sm:$0xff]
        %v875 = vld [vmem:[#allocation5 + $0xa8] sm:$0xff]
        %v876 = vld [vmem:[#allocation5 + $0xb0] sm:$0xf]
        %v877 = vld [vmem:[#allocation5 + $0xb4] sm:$0xff]
        %v878 = vld [vmem:[#allocation5 + $0xbc] sm:$0xff]
        %v879 = vld [vmem:[#allocation5 + $0xc4] sm:$0xff]
        %v880 = vld [vmem:[#allocation5 + $0xcc] sm:$0xff]
        %v881 = vld [vmem:[#allocation5 + $0xd4] sm:$0xf]
        %v882 = vld [vmem:[#allocation5 + $0xd8] sm:$0xff]
        %v883 = vld [vmem:[#allocation5 + $0xe0] sm:$0xff]
        %v884 = vld [vmem:[#allocation5 + $0xe8] sm:$0xff]
        %v885 = vld [vmem:[#allocation5 + $0xf0] sm:$0xff]
        %v886 = vld [vmem:[#allocation5 + $0xf8] sm:$0xf]
        %v887 = vld [vmem:[#allocation5 + $0xfc] sm:$0xff]
        %v888 = vld [vmem:[#allocation5 + $0x104] sm:$0xff]
        %v889 = vld [vmem:[#allocation5 + $0x10c] sm:$0xff]
        %v890 = vld [vmem:[#allocation5 + $0x114] sm:$0xff]
        %v891 = vld [vmem:[#allocation5 + $0x11c] sm:$0xf]
        %v892 = vld [vmem:[#allocation5 + $0x120] sm:$0xff]
        %v893 = vld [vmem:[#allocation5 + $0x128] sm:$0xff]
        %v894 = vld [vmem:[#allocation5 + $0x130] sm:$0xff]
        %v895 = vld [vmem:[#allocation5 + $0x138] sm:$0xff]
        %v896 = vld [vmem:[#allocation5 + $0x140] sm:$0xf]
        %v897 = vld [vmem:[#allocation5 + $0x144] sm:$0xff]
        %v898 = vld [vmem:[#allocation5 + $0x14c] sm:$0xff]
        %v899 = vld [vmem:[#allocation5 + $0x154] sm:$0xff]
        %v900 = vld [vmem:[#allocation5 + $0x15c] sm:$0xff]
        %v901 = vld [vmem:[#allocation5 + $0x164] sm:$0xf]
        %v902 = vld [vmem:[#allocation5 + $0x168] sm:$0xff]
        %v903 = vld [vmem:[#allocation5 + $0x170] sm:$0xff]
        %v904 = vld [vmem:[#allocation5 + $0x178] sm:$0xff]
        %v905 = vld [vmem:[#allocation5 + $0x180] sm:$0xff]
        %v906 = vld [vmem:[#allocation5 + $0x188] sm:$0xf]
        %v907 = vld [vmem:[#allocation5 + $0x18c] sm:$0xff]
        %v908 = vld [vmem:[#allocation5 + $0x194] sm:$0xff]
        %v909 = vld [vmem:[#allocation5 + $0x19c] sm:$0xff]
        %v910 = vld [vmem:[#allocation5 + $0x1a4] sm:$0xff]
        %v911 = vld [vmem:[#allocation5 + $0x1ac] sm:$0xf]
        %v912 = vld [vmem:[#allocation5 + $0x1b0] sm:$0xff]
        %v913 = vld [vmem:[#allocation5 + $0x1b8] sm:$0xff]
        %v914 = vld [vmem:[#allocation5 + $0x1c0] sm:$0xff]
        %v915 = vld [vmem:[#allocation5 + $0x1c8] sm:$0xff]
        %v916 = vld [vmem:[#allocation5 + $0x1d0] sm:$0xf]
        %v917 = vld [vmem:[#allocation5 + $0x1d4] sm:$0xff]
        %v918 = vld [vmem:[#allocation5 + $0x1dc] sm:$0xff]
        %v919 = vld [vmem:[#allocation5 + $0x1e4] sm:$0xff]
        %v920 = vld [vmem:[#allocation5 + $0x1ec] sm:$0xff]
        %v921 = vld [vmem:[#allocation5 + $0x1f4] sm:$0xf]
        %v922 = vld [vmem:[#allocation5 + $0x1f8] sm:$0xff]
        %v923 = vld [vmem:[#allocation5 + $0x200] sm:$0xff]
        %v924 = vld [vmem:[#allocation5 + $0x208] sm:$0xff]
        %v925 = vld [vmem:[#allocation5 + $0x210] sm:$0xff]
        %v926 = vld [vmem:[#allocation5 + $0x218] sm:$0xf]
        %v927 = vld [vmem:[#allocation5 + $0x21c] sm:$0xff]
        %v928 = vld [vmem:[#allocation5 + $0x224] sm:$0xff]
        %v929 = vld [vmem:[#allocation5 + $0x22c] sm:$0xff]
        %v930 = vld [vmem:[#allocation5 + $0x234] sm:$0xff]
        %v931 = vld [vmem:[#allocation5 + $0x23c] sm:$0xf]
        %v932 = vpack.c.bf16 %v830, %v828
        %v933 = vpack.c.bf16 %v835, %v833
        %v934 = vpack.c.bf16 %v838, %v838
        %v1015 = vunpack.c.l.b16 %v852
        %v1016 = vunpack.c.h.b16 %v852
        %v1017 = vunpack.c.l.b16 %v853
        %v1018 = vunpack.c.h.b16 %v853
        %v1019 = vunpack.c.l.b16 %v854
        %v1020 = vunpack.c.h.b16 %v854
        %v1021 = vunpack.c.l.b16 %v855
        %v1022 = vunpack.c.h.b16 %v855
        %v1023 = vunpack.c.l.b16 %v856
        %v1024 = vunpack.c.l.b16 %v857
        %v1025 = vunpack.c.h.b16 %v857
        %v1026 = vunpack.c.l.b16 %v858
        %v1027 = vunpack.c.h.b16 %v858
        %v1028 = vunpack.c.l.b16 %v859
        %v1029 = vunpack.c.h.b16 %v859
        %v1030 = vunpack.c.l.b16 %v860
        %v1031 = vunpack.c.h.b16 %v860
        %v1032 = vunpack.c.l.b16 %v861
        %v1033 = vunpack.c.l.b16 %v862
        %v1034 = vunpack.c.h.b16 %v862
        %v1035 = vunpack.c.l.b16 %v863
        %v1036 = vunpack.c.h.b16 %v863
        %v1037 = vunpack.c.l.b16 %v864
        %v1038 = vunpack.c.h.b16 %v864
        %v1039 = vunpack.c.l.b16 %v865
        %v1040 = vunpack.c.h.b16 %v865
        %v1041 = vunpack.c.l.b16 %v866
        %v1042 = vunpack.c.l.b16 %v867
        %v1043 = vunpack.c.h.b16 %v867
        %v1044 = vunpack.c.l.b16 %v868
        %v1045 = vunpack.c.h.b16 %v868
        %v1046 = vunpack.c.l.b16 %v869
        %v1047 = vunpack.c.h.b16 %v869
        %v1048 = vunpack.c.l.b16 %v870
        %v1049 = vunpack.c.h.b16 %v870
        %v1050 = vunpack.c.l.b16 %v871
        %v1051 = vunpack.c.l.b16 %v872
        %v1052 = vunpack.c.h.b16 %v872
        %v1053 = vunpack.c.l.b16 %v873
        %v1054 = vunpack.c.h.b16 %v873
        %v1055 = vunpack.c.l.b16 %v874
        %v1056 = vunpack.c.h.b16 %v874
        %v1057 = vunpack.c.l.b16 %v875
        %v1058 = vunpack.c.h.b16 %v875
        %v1059 = vunpack.c.l.b16 %v876
        %v1060 = vunpack.c.l.b16 %v877
        %v1061 = vunpack.c.h.b16 %v877
        %v1062 = vunpack.c.l.b16 %v878
        %v1063 = vunpack.c.h.b16 %v878
        %v1064 = vunpack.c.l.b16 %v879
        %v1065 = vunpack.c.h.b16 %v879
        %v1066 = vunpack.c.l.b16 %v880
        %v1067 = vunpack.c.h.b16 %v880
        %v1068 = vunpack.c.l.b16 %v881
        %v1069 = vunpack.c.l.b16 %v882
        %v1070 = vunpack.c.h.b16 %v882
        %v1071 = vunpack.c.l.b16 %v883
        %v1072 = vunpack.c.h.b16 %v883
        %v1073 = vunpack.c.l.b16 %v884
        %v1074 = vunpack.c.h.b16 %v884
        %v1075 = vunpack.c.l.b16 %v885
        %v1076 = vunpack.c.h.b16 %v885
        %v1077 = vunpack.c.l.b16 %v886
        %v1078 = vunpack.c.l.b16 %v887
        %v1079 = vunpack.c.h.b16 %v887
        %v1080 = vunpack.c.l.b16 %v888
        %v1081 = vunpack.c.h.b16 %v888
        %v1082 = vunpack.c.l.b16 %v889
        %v1083 = vunpack.c.h.b16 %v889
        %v1084 = vunpack.c.l.b16 %v890
        %v1085 = vunpack.c.h.b16 %v890
        %v1086 = vunpack.c.l.b16 %v891
        %v1087 = vunpack.c.l.b16 %v892
        %v1088 = vunpack.c.h.b16 %v892
        %v1089 = vunpack.c.l.b16 %v893
        %v1090 = vunpack.c.h.b16 %v893
        %v1091 = vunpack.c.l.b16 %v894
        %v1092 = vunpack.c.h.b16 %v894
        %v1093 = vunpack.c.l.b16 %v895
        %v1094 = vunpack.c.h.b16 %v895
        %v1095 = vunpack.c.l.b16 %v896
        %v1096 = vunpack.c.l.b16 %v897
        %v1097 = vunpack.c.h.b16 %v897
        %v1098 = vunpack.c.l.b16 %v898
        %v1099 = vunpack.c.h.b16 %v898
        %v1100 = vunpack.c.l.b16 %v899
        %v1101 = vunpack.c.h.b16 %v899
        %v1102 = vunpack.c.l.b16 %v900
        %v1103 = vunpack.c.h.b16 %v900
        %v1104 = vunpack.c.l.b16 %v901
        %v1105 = vunpack.c.l.b16 %v902
        %v1106 = vunpack.c.h.b16 %v902
        %v1107 = vunpack.c.l.b16 %v903
        %v1108 = vunpack.c.h.b16 %v903
        %v1109 = vunpack.c.l.b16 %v904
        %v1110 = vunpack.c.h.b16 %v904
        %v1111 = vunpack.c.l.b16 %v905
        %v1112 = vunpack.c.h.b16 %v905
        %v1113 = vunpack.c.l.b16 %v906
        %v1114 = vunpack.c.l.b16 %v907
        %v1115 = vunpack.c.h.b16 %v907
        %v1116 = vunpack.c.l.b16 %v908
        %v1117 = vunpack.c.h.b16 %v908
        %v1118 = vunpack.c.l.b16 %v909
        %v1119 = vunpack.c.h.b16 %v909
        %v1120 = vunpack.c.l.b16 %v910
        %v1121 = vunpack.c.h.b16 %v910
        %v1122 = vunpack.c.l.b16 %v911
        %v1123 = vunpack.c.l.b16 %v912
        %v1124 = vunpack.c.h.b16 %v912
        %v1125 = vunpack.c.l.b16 %v913
        %v1126 = vunpack.c.h.b16 %v913
        %v1127 = vunpack.c.l.b16 %v914
        %v1128 = vunpack.c.h.b16 %v914
        %v1129 = vunpack.c.l.b16 %v915
        %v1130 = vunpack.c.h.b16 %v915
        %v1131 = vunpack.c.l.b16 %v916
        %v1132 = vunpack.c.l.b16 %v917
        %v1133 = vunpack.c.h.b16 %v917
        %v1134 = vunpack.c.l.b16 %v918
        %v1135 = vunpack.c.h.b16 %v918
        %v1136 = vunpack.c.l.b16 %v919
        %v1137 = vunpack.c.h.b16 %v919
        %v1138 = vunpack.c.l.b16 %v920
        %v1139 = vunpack.c.h.b16 %v920
        %v1140 = vunpack.c.l.b16 %v921
        %v1141 = vunpack.c.l.b16 %v922
        %v1142 = vunpack.c.h.b16 %v922
        %v1143 = vunpack.c.l.b16 %v923
        %v1144 = vunpack.c.h.b16 %v923
        %v1145 = vunpack.c.l.b16 %v924
        %v1146 = vunpack.c.h.b16 %v924
        %v1147 = vunpack.c.l.b16 %v925
        %v1148 = vunpack.c.h.b16 %v925
        %v1149 = vunpack.c.l.b16 %v926
        %v1150 = vunpack.c.l.b16 %v927
        %v1151 = vunpack.c.h.b16 %v927
        %v1152 = vunpack.c.l.b16 %v928
        %v1153 = vunpack.c.h.b16 %v928
        %v1154 = vunpack.c.l.b16 %v929
        %v1155 = vunpack.c.h.b16 %v929
        %v1156 = vunpack.c.l.b16 %v930
        %v1157 = vunpack.c.h.b16 %v930
        %v1158 = vunpack.c.l.b16 %v931
        %v1159 = vpack.c.b16 %v1024, %v1015
        %v1160 = vpack.c.b16 %v1025, %v1016
        %v1161 = vpack.c.b16 %v1026, %v1017
        %v1162 = vpack.c.b16 %v1027, %v1018
        %v1163 = vpack.c.b16 %v1028, %v1019
        %v1164 = vpack.c.b16 %v1029, %v1020
        %v1165 = vpack.c.b16 %v1030, %v1021
        %v1166 = vpack.c.b16 %v1031, %v1022
        %v1167 = vpack.c.b16 %v1032, %v1023
        %v1168 = vpack.c.b16 %v1042, %v1033
        %v1169 = vpack.c.b16 %v1043, %v1034
        %v1170 = vpack.c.b16 %v1044, %v1035
        %v1171 = vpack.c.b16 %v1045, %v1036
        %v1172 = vpack.c.b16 %v1046, %v1037
        %v1173 = vpack.c.b16 %v1047, %v1038
        %v1174 = vpack.c.b16 %v1048, %v1039
        %v1175 = vpack.c.b16 %v1049, %v1040
        %v1176 = vpack.c.b16 %v1050, %v1041
        %v1177 = vpack.c.b16 %v1060, %v1051
        %v1178 = vpack.c.b16 %v1061, %v1052
        %v1179 = vpack.c.b16 %v1062, %v1053
        %v1180 = vpack.c.b16 %v1063, %v1054
        %v1181 = vpack.c.b16 %v1064, %v1055
        %v1182 = vpack.c.b16 %v1065, %v1056
        %v1183 = vpack.c.b16 %v1066, %v1057
        %v1184 = vpack.c.b16 %v1067, %v1058
        %v1185 = vpack.c.b16 %v1068, %v1059
        %v1186 = vpack.c.b16 %v1078, %v1069
        %v1187 = vpack.c.b16 %v1079, %v1070
        %v1188 = vpack.c.b16 %v1080, %v1071
        %v1189 = vpack.c.b16 %v1081, %v1072
        %v1190 = vpack.c.b16 %v1082, %v1073
        %v1191 = vpack.c.b16 %v1083, %v1074
        %v1192 = vpack.c.b16 %v1084, %v1075
        %v1193 = vpack.c.b16 %v1085, %v1076
        %v1194 = vpack.c.b16 %v1086, %v1077
        %v1195 = vpack.c.b16 %v1096, %v1087
        %v1196 = vpack.c.b16 %v1097, %v1088
        %v1197 = vpack.c.b16 %v1098, %v1089
        %v1198 = vpack.c.b16 %v1099, %v1090
        %v1199 = vpack.c.b16 %v1100, %v1091
        %v1200 = vpack.c.b16 %v1101, %v1092
        %v1201 = vpack.c.b16 %v1102, %v1093
        %v1202 = vpack.c.b16 %v1103, %v1094
        %v1203 = vpack.c.b16 %v1104, %v1095
        %v1204 = vpack.c.b16 %v1114, %v1105
        %v1205 = vpack.c.b16 %v1115, %v1106
        %v1206 = vpack.c.b16 %v1116, %v1107
        %v1207 = vpack.c.b16 %v1117, %v1108
        %v1208 = vpack.c.b16 %v1118, %v1109
        %v1209 = vpack.c.b16 %v1119, %v1110
        %v1210 = vpack.c.b16 %v1120, %v1111
        %v1211 = vpack.c.b16 %v1121, %v1112
        %v1212 = vpack.c.b16 %v1122, %v1113
        %v1213 = vpack.c.b16 %v1132, %v1123
        %v1214 = vpack.c.b16 %v1133, %v1124
        %v1215 = vpack.c.b16 %v1134, %v1125
        %v1216 = vpack.c.b16 %v1135, %v1126
        %v1217 = vpack.c.b16 %v1136, %v1127
        %v1218 = vpack.c.b16 %v1137, %v1128
        %v1219 = vpack.c.b16 %v1138, %v1129
        %v1220 = vpack.c.b16 %v1139, %v1130
        %v1221 = vpack.c.b16 %v1140, %v1131
        %v1222 = vpack.c.b16 %v1150, %v1141
        %v1223 = vpack.c.b16 %v1151, %v1142
        %v1224 = vpack.c.b16 %v1152, %v1143
        %v1225 = vpack.c.b16 %v1153, %v1144
        %v1226 = vpack.c.b16 %v1154, %v1145
        %v1227 = vpack.c.b16 %v1155, %v1146
        %v1228 = vpack.c.b16 %v1156, %v1147
        %v1229 = vpack.c.b16 %v1157, %v1148
        %v1230 = vpack.c.b16 %v1158, %v1149
        %1303 = vmatpush.bf16.msra.mxu0 %v1222
        %1304 = vmatpush.bf16.msra.mxu0 %v1213
        %1305 = vmatpush.bf16.msra.mxu0 %v1204
        %1306 = vmatpush.bf16.msra.mxu0 %v1195
        %1307 = vmatpush.bf16.msra.mxu0 %v1186
        %1308 = vmatpush.bf16.msra.mxu0 %v1177
        %1309 = vmatpush.bf16.msra.mxu0 %v1168
        %1310 = vmatpush.bf16.msra.mxu0 %v1159
        %1311 = vmatmul.bf16.gmra.mxu0 %v932
        %v1312 = vpop.f32.mrf.mxu0
        %v1313 = vadd.f32 0.0, %v1312
        %v1314 = vpop.f32.mrf.mxu0
        %v1315 = vadd.f32 0.0, %v1314
        %1316 = vmatmul.bf16.gmra.mxu0 %v933
        %v1317 = vpop.f32.mrf.mxu0
        %v1318 = vadd.f32 0.0, %v1317
        %v1319 = vpop.f32.mrf.mxu0
        %v1320 = vadd.f32 0.0, %v1319
        %1321 = vmatmul.bf16.gmra.mxu0 %v934
        %v1322 = vpop.f32.mrf.mxu0
        %v1323 = vadd.f32 0.0, %v1322
        %v1324 = vpop.f32.mrf.mxu0
        %1325 = vdwg.mxu0
        %1326 = vmatpush.bf16.msra.mxu0 %v1223
        %1327 = vmatpush.bf16.msra.mxu0 %v1214
        %1328 = vmatpush.bf16.msra.mxu0 %v1205
        %1329 = vmatpush.bf16.msra.mxu0 %v1196
        %1330 = vmatpush.bf16.msra.mxu0 %v1187
        %1331 = vmatpush.bf16.msra.mxu0 %v1178
        %1332 = vmatpush.bf16.msra.mxu0 %v1169
        %1333 = vmatpush.bf16.msra.mxu0 %v1160
        %1334 = vmatmul.bf16.gmra.mxu0 %v932
        %v1335 = vpop.f32.mrf.mxu0
        %v1336 = vadd.f32 0.0, %v1335
        %v1337 = vpop.f32.mrf.mxu0
        %v1338 = vadd.f32 0.0, %v1337
        %1339 = vmatmul.bf16.gmra.mxu0 %v933
        %v1340 = vpop.f32.mrf.mxu0
        %v1341 = vadd.f32 0.0, %v1340
        %v1342 = vpop.f32.mrf.mxu0
        %v1343 = vadd.f32 0.0, %v1342
        %1344 = vmatmul.bf16.gmra.mxu0 %v934
        %v1345 = vpop.f32.mrf.mxu0
        %v1346 = vadd.f32 0.0, %v1345
        %v1347 = vpop.f32.mrf.mxu0
        %1348 = vdwg.mxu0
        %1349 = vmatpush.bf16.msra.mxu0 %v1224
        %1350 = vmatpush.bf16.msra.mxu0 %v1215
        %1351 = vmatpush.bf16.msra.mxu0 %v1206
        %1352 = vmatpush.bf16.msra.mxu0 %v1197
        %1353 = vmatpush.bf16.msra.mxu0 %v1188
        %1354 = vmatpush.bf16.msra.mxu0 %v1179
        %1355 = vmatpush.bf16.msra.mxu0 %v1170
        %1356 = vmatpush.bf16.msra.mxu0 %v1161
        %1357 = vmatmul.bf16.gmra.mxu0 %v932
        %v1358 = vpop.f32.mrf.mxu0
        %v1359 = vadd.f32 0.0, %v1358
        %v1360 = vpop.f32.mrf.mxu0
        %v1361 = vadd.f32 0.0, %v1360
        %1362 = vmatmul.bf16.gmra.mxu0 %v933
        %v1363 = vpop.f32.mrf.mxu0
        %v1364 = vadd.f32 0.0, %v1363
        %v1365 = vpop.f32.mrf.mxu0
        %v1366 = vadd.f32 0.0, %v1365
        %1367 = vmatmul.bf16.gmra.mxu0 %v934
        %v1368 = vpop.f32.mrf.mxu0
        %v1369 = vadd.f32 0.0, %v1368
        %v1370 = vpop.f32.mrf.mxu0
        %1371 = vdwg.mxu0
        %1372 = vmatpush.bf16.msra.mxu0 %v1225
        %1373 = vmatpush.bf16.msra.mxu0 %v1216
        %1374 = vmatpush.bf16.msra.mxu0 %v1207
        %1375 = vmatpush.bf16.msra.mxu0 %v1198
        %1376 = vmatpush.bf16.msra.mxu0 %v1189
        %1377 = vmatpush.bf16.msra.mxu0 %v1180
        %1378 = vmatpush.bf16.msra.mxu0 %v1171
        %1379 = vmatpush.bf16.msra.mxu0 %v1162
        %1380 = vmatmul.bf16.gmra.mxu0 %v932
        %v1381 = vpop.f32.mrf.mxu0
        %v1382 = vadd.f32 0.0, %v1381
        %v1383 = vpop.f32.mrf.mxu0
        %v1384 = vadd.f32 0.0, %v1383
        %1385 = vmatmul.bf16.gmra.mxu0 %v933
        %v1386 = vpop.f32.mrf.mxu0
        %v1387 = vadd.f32 0.0, %v1386
        %v1388 = vpop.f32.mrf.mxu0
        %v1389 = vadd.f32 0.0, %v1388
        %1390 = vmatmul.bf16.gmra.mxu0 %v934
        %v1391 = vpop.f32.mrf.mxu0
        %v1392 = vadd.f32 0.0, %v1391
        %v1393 = vpop.f32.mrf.mxu0
        %1394 = vdwg.mxu0
        %1395 = vmatpush.bf16.msra.mxu0 %v1226
        %1396 = vmatpush.bf16.msra.mxu0 %v1217
        %1397 = vmatpush.bf16.msra.mxu0 %v1208
        %1398 = vmatpush.bf16.msra.mxu0 %v1199
        %1399 = vmatpush.bf16.msra.mxu0 %v1190
        %1400 = vmatpush.bf16.msra.mxu0 %v1181
        %1401 = vmatpush.bf16.msra.mxu0 %v1172
        %1402 = vmatpush.bf16.msra.mxu0 %v1163
        %1403 = vmatmul.bf16.gmra.mxu0 %v932
        %v1404 = vpop.f32.mrf.mxu0
        %v1405 = vadd.f32 0.0, %v1404
        %v1406 = vpop.f32.mrf.mxu0
        %v1407 = vadd.f32 0.0, %v1406
        %1408 = vmatmul.bf16.gmra.mxu0 %v933
        %v1409 = vpop.f32.mrf.mxu0
        %v1410 = vadd.f32 0.0, %v1409
        %v1411 = vpop.f32.mrf.mxu0
        %v1412 = vadd.f32 0.0, %v1411
        %1413 = vmatmul.bf16.gmra.mxu0 %v934
        %v1414 = vpop.f32.mrf.mxu0
        %v1415 = vadd.f32 0.0, %v1414
        %v1416 = vpop.f32.mrf.mxu0
        %1417 = vdwg.mxu0
        %1418 = vmatpush.bf16.msra.mxu0 %v1227
        %1419 = vmatpush.bf16.msra.mxu0 %v1218
        %1420 = vmatpush.bf16.msra.mxu0 %v1209
        %1421 = vmatpush.bf16.msra.mxu0 %v1200
        %1422 = vmatpush.bf16.msra.mxu0 %v1191
        %1423 = vmatpush.bf16.msra.mxu0 %v1182
        %1424 = vmatpush.bf16.msra.mxu0 %v1173
        %1425 = vmatpush.bf16.msra.mxu0 %v1164
        %1426 = vmatmul.bf16.gmra.mxu0 %v932
        %v1427 = vpop.f32.mrf.mxu0
        %v1428 = vadd.f32 0.0, %v1427
        %v1429 = vpop.f32.mrf.mxu0
        %v1430 = vadd.f32 0.0, %v1429
        %1431 = vmatmul.bf16.gmra.mxu0 %v933
        %v1432 = vpop.f32.mrf.mxu0
        %v1433 = vadd.f32 0.0, %v1432
        %v1434 = vpop.f32.mrf.mxu0
        %v1435 = vadd.f32 0.0, %v1434
        %1436 = vmatmul.bf16.gmra.mxu0 %v934
        %v1437 = vpop.f32.mrf.mxu0
        %v1438 = vadd.f32 0.0, %v1437
        %v1439 = vpop.f32.mrf.mxu0
        %1440 = vdwg.mxu0
        %1441 = vmatpush.bf16.msra.mxu0 %v1228
        %1442 = vmatpush.bf16.msra.mxu0 %v1219
        %1443 = vmatpush.bf16.msra.mxu0 %v1210
        %1444 = vmatpush.bf16.msra.mxu0 %v1201
        %1445 = vmatpush.bf16.msra.mxu0 %v1192
        %1446 = vmatpush.bf16.msra.mxu0 %v1183
        %1447 = vmatpush.bf16.msra.mxu0 %v1174
        %1448 = vmatpush.bf16.msra.mxu0 %v1165
        %1449 = vmatmul.bf16.gmra.mxu0 %v932
        %v1450 = vpop.f32.mrf.mxu0
        %v1451 = vadd.f32 0.0, %v1450
        %v1452 = vpop.f32.mrf.mxu0
        %v1453 = vadd.f32 0.0, %v1452
        %1454 = vmatmul.bf16.gmra.mxu0 %v933
        %v1455 = vpop.f32.mrf.mxu0
        %v1456 = vadd.f32 0.0, %v1455
        %v1457 = vpop.f32.mrf.mxu0
        %v1458 = vadd.f32 0.0, %v1457
        %1459 = vmatmul.bf16.gmra.mxu0 %v934
        %v1460 = vpop.f32.mrf.mxu0
        %v1461 = vadd.f32 0.0, %v1460
        %v1462 = vpop.f32.mrf.mxu0
        %1463 = vdwg.mxu0
        %1464 = vmatpush.bf16.msra.mxu0 %v1229
        %1465 = vmatpush.bf16.msra.mxu0 %v1220
        %1466 = vmatpush.bf16.msra.mxu0 %v1211
        %1467 = vmatpush.bf16.msra.mxu0 %v1202
        %1468 = vmatpush.bf16.msra.mxu0 %v1193
        %1469 = vmatpush.bf16.msra.mxu0 %v1184
        %1470 = vmatpush.bf16.msra.mxu0 %v1175
        %1471 = vmatpush.bf16.msra.mxu0 %v1166
        %1472 = vmatmul.bf16.gmra.mxu0 %v932
        %v1473 = vpop.f32.mrf.mxu0
        %v1474 = vadd.f32 0.0, %v1473
        %v1475 = vpop.f32.mrf.mxu0
        %v1476 = vadd.f32 0.0, %v1475
        %1477 = vmatmul.bf16.gmra.mxu0 %v933
        %v1478 = vpop.f32.mrf.mxu0
        %v1479 = vadd.f32 0.0, %v1478
        %v1480 = vpop.f32.mrf.mxu0
        %v1481 = vadd.f32 0.0, %v1480
        %1482 = vmatmul.bf16.gmra.mxu0 %v934
        %v1483 = vpop.f32.mrf.mxu0
        %v1484 = vadd.f32 0.0, %v1483
        %v1485 = vpop.f32.mrf.mxu0
        %1486 = vdwg.mxu0
        %1487 = vmatpush.bf16.msra.mxu0 %v1230
        %1488 = vmatpush.bf16.msra.mxu0 %v1221
        %1489 = vmatpush.bf16.msra.mxu0 %v1212
        %1490 = vmatpush.bf16.msra.mxu0 %v1203
        %1491 = vmatpush.bf16.msra.mxu0 %v1194
        %1492 = vmatpush.bf16.msra.mxu0 %v1185
        %1493 = vmatpush.bf16.msra.mxu0 %v1176
        %1494 = vmatpush.bf16.msra.mxu0 %v1167
        %1495 = vmatmul.bf16.gmra.mxu0 %v932
        %v1496 = vpop.f32.mrf.mxu0
        %v1497 = vadd.f32 0.0, %v1496
        %v1498 = vpop.f32.mrf.mxu0
        %v1499 = vadd.f32 0.0, %v1498
        %1500 = vmatmul.bf16.gmra.mxu0 %v933
        %v1501 = vpop.f32.mrf.mxu0
        %v1502 = vadd.f32 0.0, %v1501
        %v1503 = vpop.f32.mrf.mxu0
        %v1504 = vadd.f32 0.0, %v1503
        %1505 = vmatmul.bf16.gmra.mxu0 %v934
        %v1506 = vpop.f32.mrf.mxu0
        %v1507 = vadd.f32 0.0, %v1506
        %v1508 = vpop.f32.mrf.mxu0
        %1509 = vdwg.mxu0
        %v1510 = vrot.slane %v1313, 2
        %v1511 = vrot.slane %v1315, 2
        %v1512 = vrot.slane %v1318, 2
        %v1513 = vrot.slane %v1320, 2
        %v1514 = vrot.slane %v1323, 2
        %v1515 = vlaneseq
        %v1516 = vshrl.u32 %v1515, 7
        %vm1517 = vcmp.lt.s32.totalorder %v1516, 6
        %v1518 = vsel %vm1517, %v1513, %v1514
        %v1519 = vsel %vm1517, %v1512, %v1513
        %v1520 = vsel %vm1517, %v1511, %v1512
        %v1521 = vsel %vm1517, %v1510, %v1511
        %v1522 = vsel %vm1517, %v1514, %v1510
        %v1523 = vld [vmem:[#allocation8 + $0x58] sm:$0xff]
        %v1524 = vld [vmem:[#allocation8 + $0x60] sm:$0xff]
        %v1525 = vld [vmem:[#allocation8 + $0x68] sm:$0xff]
        %v1526 = vld [vmem:[#allocation8 + $0x70] sm:$0xff]
        %v1527 = vld [vmem:[#allocation8 + $0x78] sm:$0xff]
        %v1528 = vmul.f32 %v1522, %v1523
        %v1529 = vmul.f32 %v1521, %v1524
        %v1530 = vmul.f32 %v1520, %v1525
        %v1531 = vmul.f32 %v1519, %v1526
        %v1532 = vmul.f32 %v1518, %v1527
        %v1533 = vadd.f32 %v1528, 0.0
        %v1534 = vadd.f32 %v1529, 0.0
        %v1535 = vadd.f32 %v1530, 0.0
        %v1536 = vadd.f32 %v1531, 0.0
        %v1537 = vadd.f32 %v1532, 0.0
        %v1538 = vrot.slane %v1336, 3
        %v1539 = vrot.slane %v1338, 3
        %v1540 = vrot.slane %v1341, 3
        %v1541 = vrot.slane %v1343, 3
        %v1542 = vrot.slane %v1346, 3
        %vm1543 = vcmp.lt.s32.totalorder %v1516, 5
        %v1544 = vsel %vm1543, %v1541, %v1542
        %v1545 = vsel %vm1543, %v1540, %v1541
        %v1546 = vsel %vm1543, %v1539, %v1540
        %v1547 = vsel %vm1543, %v1538, %v1539
        %v1548 = vsel %vm1543, %v1542, %v1538
        %v1549 = vld [vmem:[#allocation8 + $0x80] sm:$0xff]
        %v1550 = vld [vmem:[#allocation8 + $0x88] sm:$0xff]
        %v1551 = vld [vmem:[#allocation8 + $0x90] sm:$0xff]
        %v1552 = vld [vmem:[#allocation8 + $0x98] sm:$0xff]
        %v1553 = vld [vmem:[#allocation8 + $0xa0] sm:$0xff]
        %v1554 = vmul.f32 %v1548, %v1549
        %v1555 = vmul.f32 %v1547, %v1550
        %v1556 = vmul.f32 %v1546, %v1551
        %v1557 = vmul.f32 %v1545, %v1552
        %v1558 = vmul.f32 %v1544, %v1553
        %v1559 = vadd.f32 %v1533, %v1554
        %v1560 = vadd.f32 %v1534, %v1555
        %v1561 = vadd.f32 %v1535, %v1556
        %v1562 = vadd.f32 %v1536, %v1557
        %v1563 = vadd.f32 %v1537, %v1558
        %v1564 = vrot.slane %v1359, 4
        %v1565 = vrot.slane %v1361, 4
        %v1566 = vrot.slane %v1364, 4
        %v1567 = vrot.slane %v1366, 4
        %v1568 = vrot.slane %v1369, 4
        %vm1569 = vcmp.lt.s32.totalorder %v1516, 4
        %v1570 = vsel %vm1569, %v1567, %v1568
        %v1571 = vsel %vm1569, %v1566, %v1567
        %v1572 = vsel %vm1569, %v1565, %v1566
        %v1573 = vsel %vm1569, %v1564, %v1565
        %v1574 = vsel %vm1569, %v1568, %v1564
        %v1575 = vld [vmem:[#allocation8 + $0xa8] sm:$0xff]
        %v1576 = vld [vmem:[#allocation8 + $0xb0] sm:$0xff]
        %v1577 = vld [vmem:[#allocation8 + $0xb8] sm:$0xff]
        %v1578 = vld [vmem:[#allocation8 + $0xc0] sm:$0xff]
        %v1579 = vld [vmem:[#allocation8 + $0xc8] sm:$0xff]
        %v1580 = vmul.f32 %v1574, %v1575
        %v1581 = vmul.f32 %v1573, %v1576
        %v1582 = vmul.f32 %v1572, %v1577
        %v1583 = vmul.f32 %v1571, %v1578
        %v1584 = vmul.f32 %v1570, %v1579
        %v1585 = vadd.f32 %v1559, %v1580
        %v1586 = vadd.f32 %v1560, %v1581
        %v1587 = vadd.f32 %v1561, %v1582
        %v1588 = vadd.f32 %v1562, %v1583
        %v1589 = vadd.f32 %v1563, %v1584
        %v1590 = vrot.slane %v1382, 7
        %v1591 = vrot.slane %v1384, 7
        %v1592 = vrot.slane %v1387, 7
        %v1593 = vrot.slane %v1389, 7
        %v1594 = vrot.slane %v1392, 7
        %vm1595 = vcmp.lt.s32.totalorder %v1516, 1
        %v1596 = vsel %vm1595, %v1593, %v1594
        %v1597 = vsel %vm1595, %v1592, %v1593
        %v1598 = vsel %vm1595, %v1591, %v1592
        %v1599 = vsel %vm1595, %v1590, %v1591
        %v1600 = vsel %vm1595, %v1594, %v1590
        %v1601 = vld [vmem:[#allocation8 + $0xd0] sm:$0xff]
        %v1602 = vld [vmem:[#allocation8 + $0xd8] sm:$0xff]
        %v1603 = vld [vmem:[#allocation8 + $0xe0] sm:$0xff]
        %v1604 = vld [vmem:[#allocation8 + $0xe8] sm:$0xff]
        %v1605 = vld [vmem:[#allocation8 + $0xf0] sm:$0xff]
        %v1606 = vmul.f32 %v1600, %v1601
        %v1607 = vmul.f32 %v1599, %v1602
        %v1608 = vmul.f32 %v1598, %v1603
        %v1609 = vmul.f32 %v1597, %v1604
        %v1610 = vmul.f32 %v1596, %v1605
        %v1611 = vadd.f32 %v1585, %v1606
        %v1612 = vadd.f32 %v1586, %v1607
        %v1613 = vadd.f32 %v1587, %v1608
        %v1614 = vadd.f32 %v1588, %v1609
        %v1615 = vadd.f32 %v1589, %v1610
        %v1616 = vld [vmem:[#allocation8 + $0xf8] sm:$0xff]
        %v1617 = vld [vmem:[#allocation8 + $0x100] sm:$0xff]
        %v1618 = vld [vmem:[#allocation8 + $0x108] sm:$0xff]
        %v1619 = vld [vmem:[#allocation8 + $0x110] sm:$0xff]
        %v1620 = vld [vmem:[#allocation8 + $0x118] sm:$0xff]
        %v1621 = vmul.f32 %v1405, %v1616
        %v1622 = vmul.f32 %v1407, %v1617
        %v1623 = vmul.f32 %v1410, %v1618
        %v1624 = vmul.f32 %v1412, %v1619
        %v1625 = vmul.f32 %v1415, %v1620
        %v1626 = vadd.f32 %v1611, %v1621
        %v1627 = vadd.f32 %v1612, %v1622
        %v1628 = vadd.f32 %v1613, %v1623
        %v1629 = vadd.f32 %v1614, %v1624
        %v1630 = vadd.f32 %v1615, %v1625
        %v1631 = vrot.slane %v1428, 1
        %v1632 = vrot.slane %v1430, 1
        %v1633 = vrot.slane %v1433, 1
        %v1634 = vrot.slane %v1435, 1
        %v1635 = vrot.slane %v1438, 1
        %vm1636 = vcmp.lt.s32.totalorder %v1516, 7
        %v1637 = vsel %vm1636, %v1634, %v1635
        %v1638 = vsel %vm1636, %v1633, %v1634
        %v1639 = vsel %vm1636, %v1632, %v1633
        %v1640 = vsel %vm1636, %v1631, %v1632
        %v1641 = vsel %vm1636, %v1635, %v1631
        %v1642 = vld [vmem:[#allocation8 + $0x120] sm:$0xff]
        %v1643 = vld [vmem:[#allocation8 + $0x128] sm:$0xff]
        %v1644 = vld [vmem:[#allocation8 + $0x130] sm:$0xff]
        %v1645 = vld [vmem:[#allocation8 + $0x138] sm:$0xff]
        %v1646 = vld [vmem:[#allocation8 + $0x140] sm:$0xff]
        %v1647 = vmul.f32 %v1640, %v1642
        %v1648 = vmul.f32 %v1639, %v1643
        %v1649 = vmul.f32 %v1638, %v1644
        %v1650 = vmul.f32 %v1637, %v1645
        %v1651 = vmul.f32 %v1641, %v1646
        %v1652 = vadd.f32 %v1626, %v1647
        %v1653 = vadd.f32 %v1627, %v1648
        %v1654 = vadd.f32 %v1628, %v1649
        %v1655 = vadd.f32 %v1629, %v1650
        %v1656 = vadd.f32 %v1630, %v1651
        %v1657 = vrot.slane %v1451, 4
        %v1658 = vrot.slane %v1453, 4
        %v1659 = vrot.slane %v1456, 4
        %v1660 = vrot.slane %v1458, 4
        %v1661 = vrot.slane %v1461, 4
        %v1662 = vsel %vm1569, %v1660, %v1661
        %v1663 = vsel %vm1569, %v1659, %v1660
        %v1664 = vsel %vm1569, %v1658, %v1659
        %v1665 = vsel %vm1569, %v1657, %v1658
        %v1666 = vsel %vm1569, %v1661, %v1657
        %v1667 = vld [vmem:[#allocation8 + $0x148] sm:$0xff]
        %v1668 = vld [vmem:[#allocation8 + $0x150] sm:$0xff]
        %v1669 = vld [vmem:[#allocation8 + $0x158] sm:$0xff]
        %v1670 = vld [vmem:[#allocation8 + $0x160] sm:$0xff]
        %v1671 = vld [vmem:[#allocation8 + $0x168] sm:$0xff]
        %v1672 = vmul.f32 %v1665, %v1667
        %v1673 = vmul.f32 %v1664, %v1668
        %v1674 = vmul.f32 %v1663, %v1669
        %v1675 = vmul.f32 %v1662, %v1670
        %v1676 = vmul.f32 %v1666, %v1671
        %v1677 = vadd.f32 %v1652, %v1672
        %v1678 = vadd.f32 %v1653, %v1673
        %v1679 = vadd.f32 %v1654, %v1674
        %v1680 = vadd.f32 %v1655, %v1675
        %v1681 = vadd.f32 %v1656, %v1676
        %v1682 = vrot.slane %v1474, 5
        %v1683 = vrot.slane %v1476, 5
        %v1684 = vrot.slane %v1479, 5
        %v1685 = vrot.slane %v1481, 5
        %v1686 = vrot.slane %v1484, 5
        %vm1687 = vcmp.lt.s32.totalorder %v1516, 3
        %v1688 = vsel %vm1687, %v1685, %v1686
        %v1689 = vsel %vm1687, %v1684, %v1685
        %v1690 = vsel %vm1687, %v1683, %v1684
        %v1691 = vsel %vm1687, %v1682, %v1683
        %v1692 = vsel %vm1687, %v1686, %v1682
        %v1693 = vld [vmem:[#allocation8 + $0x170] sm:$0xff]
        %v1694 = vld [vmem:[#allocation8 + $0x178] sm:$0xff]
        %v1695 = vld [vmem:[#allocation8 + $0x180] sm:$0xff]
        %v1696 = vld [vmem:[#allocation8 + $0x188] sm:$0xff]
        %v1697 = vld [vmem:[#allocation8 + $0x190] sm:$0xff]
        %v1698 = vmul.f32 %v1691, %v1693
        %v1699 = vmul.f32 %v1690, %v1694
        %v1700 = vmul.f32 %v1689, %v1695
        %v1701 = vmul.f32 %v1688, %v1696
        %v1702 = vmul.f32 %v1692, %v1697
        %v1703 = vadd.f32 %v1677, %v1698
        %v1704 = vadd.f32 %v1678, %v1699
        %v1705 = vadd.f32 %v1679, %v1700
        %v1706 = vadd.f32 %v1680, %v1701
        %v1707 = vadd.f32 %v1681, %v1702
        %v1708 = vrot.slane %v1497, 6
        %v1709 = vrot.slane %v1499, 6
        %v1710 = vrot.slane %v1502, 6
        %v1711 = vrot.slane %v1504, 6
        %v1712 = vrot.slane %v1507, 6
        %vm1713 = vcmp.lt.s32.totalorder %v1516, 2
        %v1714 = vsel %vm1713, %v1711, %v1712
        %v1715 = vsel %vm1713, %v1710, %v1711
        %v1716 = vsel %vm1713, %v1709, %v1710
        %v1717 = vsel %vm1713, %v1708, %v1709
        %v1718 = vsel %vm1713, %v1712, %v1708
        %v1719 = vld [vmem:[#allocation8 + $0x198] sm:$0xff]
        %v1720 = vld [vmem:[#allocation8 + $0x1a0] sm:$0xff]
        %v1721 = vld [vmem:[#allocation8 + $0x1a8] sm:$0xff]
        %v1722 = vld [vmem:[#allocation8 + $0x1b0] sm:$0xff]
        %v1723 = vld [vmem:[#allocation8 + $0x1b8] sm:$0xff]
        %v1724 = vmul.f32 %v1717, %v1719
        %v1725 = vmul.f32 %v1716, %v1720
        %v1726 = vmul.f32 %v1715, %v1721
        %v1727 = vmul.f32 %v1714, %v1722
        %v1728 = vmul.f32 %v1718, %v1723
        %v1729 = vadd.f32 %v1703, %v1724
        %v1730 = vadd.f32 %v1704, %v1725
        %v1731 = vadd.f32 %v1705, %v1726
        %v1732 = vadd.f32 %v1706, %v1727
        %v1733 = vadd.f32 %v1707, %v1728
        %v1734 = vperm.slane %v473, 0
        %v1735 = vadd.f32 %v1729, %v1734
        %v1736 = vadd.f32 %v1730, %v1734
        %v1737 = vadd.f32 %v1731, %v1734
        %v1738 = vadd.f32 %v1732, %v1734
        %v1739 = vadd.f32 %v1733, %v1734
        %v1740 = vmax.f32 %v1735, 0.0
        %v1741 = vmax.f32 %v1736, 0.0
        %v1742 = vmax.f32 %v1737, 0.0
        %v1743 = vmax.f32 %v1738, 0.0
        %v1744 = vmax.f32 %v1739, 0.0
        %v1745 = vld [vmem:[#allocation7] sm:$0xff]
        %v1746 = vld [vmem:[#allocation7 + $0x8] sm:$0xff]
        %v1747 = vld [vmem:[#allocation7 + $0x10] sm:$0xff]
        %v1748 = vld [vmem:[#allocation7 + $0x18] sm:$0xff]
        %v1749 = vld [vmem:[#allocation7 + $0x20] sm:$0xf]
        %v1750 = vld [vmem:[#allocation7 + $0x24] sm:$0xff]
        %v1751 = vld [vmem:[#allocation7 + $0x2c] sm:$0xff]
        %v1752 = vld [vmem:[#allocation7 + $0x34] sm:$0xff]
        %v1753 = vld [vmem:[#allocation7 + $0x3c] sm:$0xff]
        %v1754 = vld [vmem:[#allocation7 + $0x44] sm:$0xf]
        %v1755 = vld [vmem:[#allocation7 + $0x48] sm:$0xff]
        %v1756 = vld [vmem:[#allocation7 + $0x50] sm:$0xff]
        %v1757 = vld [vmem:[#allocation7 + $0x58] sm:$0xff]
        %v1758 = vld [vmem:[#allocation7 + $0x60] sm:$0xff]
        %v1759 = vld [vmem:[#allocation7 + $0x68] sm:$0xf]
        %v1760 = vld [vmem:[#allocation7 + $0x6c] sm:$0xff]
        %v1761 = vld [vmem:[#allocation7 + $0x74] sm:$0xff]
        %v1762 = vld [vmem:[#allocation7 + $0x7c] sm:$0xff]
        %v1763 = vld [vmem:[#allocation7 + $0x84] sm:$0xff]
        %v1764 = vld [vmem:[#allocation7 + $0x8c] sm:$0xf]
        %v1765 = vld [vmem:[#allocation7 + $0x90] sm:$0xff]
        %v1766 = vld [vmem:[#allocation7 + $0x98] sm:$0xff]
        %v1767 = vld [vmem:[#allocation7 + $0xa0] sm:$0xff]
        %v1768 = vld [vmem:[#allocation7 + $0xa8] sm:$0xff]
        %v1769 = vld [vmem:[#allocation7 + $0xb0] sm:$0xf]
        %v1770 = vld [vmem:[#allocation7 + $0xb4] sm:$0xff]
        %v1771 = vld [vmem:[#allocation7 + $0xbc] sm:$0xff]
        %v1772 = vld [vmem:[#allocation7 + $0xc4] sm:$0xff]
        %v1773 = vld [vmem:[#allocation7 + $0xcc] sm:$0xff]
        %v1774 = vld [vmem:[#allocation7 + $0xd4] sm:$0xf]
        %v1775 = vld [vmem:[#allocation7 + $0xd8] sm:$0xff]
        %v1776 = vld [vmem:[#allocation7 + $0xe0] sm:$0xff]
        %v1777 = vld [vmem:[#allocation7 + $0xe8] sm:$0xff]
        %v1778 = vld [vmem:[#allocation7 + $0xf0] sm:$0xff]
        %v1779 = vld [vmem:[#allocation7 + $0xf8] sm:$0xf]
        %v1780 = vld [vmem:[#allocation7 + $0xfc] sm:$0xff]
        %v1781 = vld [vmem:[#allocation7 + $0x104] sm:$0xff]
        %v1782 = vld [vmem:[#allocation7 + $0x10c] sm:$0xff]
        %v1783 = vld [vmem:[#allocation7 + $0x114] sm:$0xff]
        %v1784 = vld [vmem:[#allocation7 + $0x11c] sm:$0xf]
        %v1785 = vld [vmem:[#allocation7 + $0x120] sm:$0xff]
        %v1786 = vld [vmem:[#allocation7 + $0x128] sm:$0xff]
        %v1787 = vld [vmem:[#allocation7 + $0x130] sm:$0xff]
        %v1788 = vld [vmem:[#allocation7 + $0x138] sm:$0xff]
        %v1789 = vld [vmem:[#allocation7 + $0x140] sm:$0xf]
        %v1790 = vld [vmem:[#allocation7 + $0x144] sm:$0xff]
        %v1791 = vld [vmem:[#allocation7 + $0x14c] sm:$0xff]
        %v1792 = vld [vmem:[#allocation7 + $0x154] sm:$0xff]
        %v1793 = vld [vmem:[#allocation7 + $0x15c] sm:$0xff]
        %v1794 = vld [vmem:[#allocation7 + $0x164] sm:$0xf]
        %v1795 = vld [vmem:[#allocation7 + $0x168] sm:$0xff]
        %v1796 = vld [vmem:[#allocation7 + $0x170] sm:$0xff]
        %v1797 = vld [vmem:[#allocation7 + $0x178] sm:$0xff]
        %v1798 = vld [vmem:[#allocation7 + $0x180] sm:$0xff]
        %v1799 = vld [vmem:[#allocation7 + $0x188] sm:$0xf]
        %v1800 = vld [vmem:[#allocation7 + $0x18c] sm:$0xff]
        %v1801 = vld [vmem:[#allocation7 + $0x194] sm:$0xff]
        %v1802 = vld [vmem:[#allocation7 + $0x19c] sm:$0xff]
        %v1803 = vld [vmem:[#allocation7 + $0x1a4] sm:$0xff]
        %v1804 = vld [vmem:[#allocation7 + $0x1ac] sm:$0xf]
        %v1805 = vld [vmem:[#allocation7 + $0x1b0] sm:$0xff]
        %v1806 = vld [vmem:[#allocation7 + $0x1b8] sm:$0xff]
        %v1807 = vld [vmem:[#allocation7 + $0x1c0] sm:$0xff]
        %v1808 = vld [vmem:[#allocation7 + $0x1c8] sm:$0xff]
        %v1809 = vld [vmem:[#allocation7 + $0x1d0] sm:$0xf]
        %v1810 = vld [vmem:[#allocation7 + $0x1d4] sm:$0xff]
        %v1811 = vld [vmem:[#allocation7 + $0x1dc] sm:$0xff]
        %v1812 = vld [vmem:[#allocation7 + $0x1e4] sm:$0xff]
        %v1813 = vld [vmem:[#allocation7 + $0x1ec] sm:$0xff]
        %v1814 = vld [vmem:[#allocation7 + $0x1f4] sm:$0xf]
        %v1815 = vld [vmem:[#allocation7 + $0x1f8] sm:$0xff]
        %v1816 = vld [vmem:[#allocation7 + $0x200] sm:$0xff]
        %v1817 = vld [vmem:[#allocation7 + $0x208] sm:$0xff]
        %v1818 = vld [vmem:[#allocation7 + $0x210] sm:$0xff]
        %v1819 = vld [vmem:[#allocation7 + $0x218] sm:$0xf]
        %v1820 = vld [vmem:[#allocation7 + $0x21c] sm:$0xff]
        %v1821 = vld [vmem:[#allocation7 + $0x224] sm:$0xff]
        %v1822 = vld [vmem:[#allocation7 + $0x22c] sm:$0xff]
        %v1823 = vld [vmem:[#allocation7 + $0x234] sm:$0xff]
        %v1824 = vld [vmem:[#allocation7 + $0x23c] sm:$0xf]
        %v1825 = vpack.c.bf16 %v843, %v840
        %v1826 = vpack.c.bf16 %v848, %v845
        %v1827 = vpack.c.bf16 %v850, %v850
        %v1908 = vunpack.c.l.b16 %v1745
        %v1909 = vunpack.c.h.b16 %v1745
        %v1910 = vunpack.c.l.b16 %v1746
        %v1911 = vunpack.c.h.b16 %v1746
        %v1912 = vunpack.c.l.b16 %v1747
        %v1913 = vunpack.c.h.b16 %v1747
        %v1914 = vunpack.c.l.b16 %v1748
        %v1915 = vunpack.c.h.b16 %v1748
        %v1916 = vunpack.c.l.b16 %v1749
        %v1917 = vunpack.c.l.b16 %v1750
        %v1918 = vunpack.c.h.b16 %v1750
        %v1919 = vunpack.c.l.b16 %v1751
        %v1920 = vunpack.c.h.b16 %v1751
        %v1921 = vunpack.c.l.b16 %v1752
        %v1922 = vunpack.c.h.b16 %v1752
        %v1923 = vunpack.c.l.b16 %v1753
        %v1924 = vunpack.c.h.b16 %v1753
        %v1925 = vunpack.c.l.b16 %v1754
        %v1926 = vunpack.c.l.b16 %v1755
        %v1927 = vunpack.c.h.b16 %v1755
        %v1928 = vunpack.c.l.b16 %v1756
        %v1929 = vunpack.c.h.b16 %v1756
        %v1930 = vunpack.c.l.b16 %v1757
        %v1931 = vunpack.c.h.b16 %v1757
        %v1932 = vunpack.c.l.b16 %v1758
        %v1933 = vunpack.c.h.b16 %v1758
        %v1934 = vunpack.c.l.b16 %v1759
        %v1935 = vunpack.c.l.b16 %v1760
        %v1936 = vunpack.c.h.b16 %v1760
        %v1937 = vunpack.c.l.b16 %v1761
        %v1938 = vunpack.c.h.b16 %v1761
        %v1939 = vunpack.c.l.b16 %v1762
        %v1940 = vunpack.c.h.b16 %v1762
        %v1941 = vunpack.c.l.b16 %v1763
        %v1942 = vunpack.c.h.b16 %v1763
        %v1943 = vunpack.c.l.b16 %v1764
        %v1944 = vunpack.c.l.b16 %v1765
        %v1945 = vunpack.c.h.b16 %v1765
        %v1946 = vunpack.c.l.b16 %v1766
        %v1947 = vunpack.c.h.b16 %v1766
        %v1948 = vunpack.c.l.b16 %v1767
        %v1949 = vunpack.c.h.b16 %v1767
        %v1950 = vunpack.c.l.b16 %v1768
        %v1951 = vunpack.c.h.b16 %v1768
        %v1952 = vunpack.c.l.b16 %v1769
        %v1953 = vunpack.c.l.b16 %v1770
        %v1954 = vunpack.c.h.b16 %v1770
        %v1955 = vunpack.c.l.b16 %v1771
        %v1956 = vunpack.c.h.b16 %v1771
        %v1957 = vunpack.c.l.b16 %v1772
        %v1958 = vunpack.c.h.b16 %v1772
        %v1959 = vunpack.c.l.b16 %v1773
        %v1960 = vunpack.c.h.b16 %v1773
        %v1961 = vunpack.c.l.b16 %v1774
        %v1962 = vunpack.c.l.b16 %v1775
        %v1963 = vunpack.c.h.b16 %v1775
        %v1964 = vunpack.c.l.b16 %v1776
        %v1965 = vunpack.c.h.b16 %v1776
        %v1966 = vunpack.c.l.b16 %v1777
        %v1967 = vunpack.c.h.b16 %v1777
        %v1968 = vunpack.c.l.b16 %v1778
        %v1969 = vunpack.c.h.b16 %v1778
        %v1970 = vunpack.c.l.b16 %v1779
        %v1971 = vunpack.c.l.b16 %v1780
        %v1972 = vunpack.c.h.b16 %v1780
        %v1973 = vunpack.c.l.b16 %v1781
        %v1974 = vunpack.c.h.b16 %v1781
        %v1975 = vunpack.c.l.b16 %v1782
        %v1976 = vunpack.c.h.b16 %v1782
        %v1977 = vunpack.c.l.b16 %v1783
        %v1978 = vunpack.c.h.b16 %v1783
        %v1979 = vunpack.c.l.b16 %v1784
        %v1980 = vunpack.c.l.b16 %v1785
        %v1981 = vunpack.c.h.b16 %v1785
        %v1982 = vunpack.c.l.b16 %v1786
        %v1983 = vunpack.c.h.b16 %v1786
        %v1984 = vunpack.c.l.b16 %v1787
        %v1985 = vunpack.c.h.b16 %v1787
        %v1986 = vunpack.c.l.b16 %v1788
        %v1987 = vunpack.c.h.b16 %v1788
        %v1988 = vunpack.c.l.b16 %v1789
        %v1989 = vunpack.c.l.b16 %v1790
        %v1990 = vunpack.c.h.b16 %v1790
        %v1991 = vunpack.c.l.b16 %v1791
        %v1992 = vunpack.c.h.b16 %v1791
        %v1993 = vunpack.c.l.b16 %v1792
        %v1994 = vunpack.c.h.b16 %v1792
        %v1995 = vunpack.c.l.b16 %v1793
        %v1996 = vunpack.c.h.b16 %v1793
        %v1997 = vunpack.c.l.b16 %v1794
        %v1998 = vunpack.c.l.b16 %v1795
        %v1999 = vunpack.c.h.b16 %v1795
        %v2000 = vunpack.c.l.b16 %v1796
        %v2001 = vunpack.c.h.b16 %v1796
        %v2002 = vunpack.c.l.b16 %v1797
        %v2003 = vunpack.c.h.b16 %v1797
        %v2004 = vunpack.c.l.b16 %v1798
        %v2005 = vunpack.c.h.b16 %v1798
        %v2006 = vunpack.c.l.b16 %v1799
        %v2007 = vunpack.c.l.b16 %v1800
        %v2008 = vunpack.c.h.b16 %v1800
        %v2009 = vunpack.c.l.b16 %v1801
        %v2010 = vunpack.c.h.b16 %v1801
        %v2011 = vunpack.c.l.b16 %v1802
        %v2012 = vunpack.c.h.b16 %v1802
        %v2013 = vunpack.c.l.b16 %v1803
        %v2014 = vunpack.c.h.b16 %v1803
        %v2015 = vunpack.c.l.b16 %v1804
        %v2016 = vunpack.c.l.b16 %v1805
        %v2017 = vunpack.c.h.b16 %v1805
        %v2018 = vunpack.c.l.b16 %v1806
        %v2019 = vunpack.c.h.b16 %v1806
        %v2020 = vunpack.c.l.b16 %v1807
        %v2021 = vunpack.c.h.b16 %v1807
        %v2022 = vunpack.c.l.b16 %v1808
        %v2023 = vunpack.c.h.b16 %v1808
        %v2024 = vunpack.c.l.b16 %v1809
        %v2025 = vunpack.c.l.b16 %v1810
        %v2026 = vunpack.c.h.b16 %v1810
        %v2027 = vunpack.c.l.b16 %v1811
        %v2028 = vunpack.c.h.b16 %v1811
        %v2029 = vunpack.c.l.b16 %v1812
        %v2030 = vunpack.c.h.b16 %v1812
        %v2031 = vunpack.c.l.b16 %v1813
        %v2032 = vunpack.c.h.b16 %v1813
        %v2033 = vunpack.c.l.b16 %v1814
        %v2034 = vunpack.c.l.b16 %v1815
        %v2035 = vunpack.c.h.b16 %v1815
        %v2036 = vunpack.c.l.b16 %v1816
        %v2037 = vunpack.c.h.b16 %v1816
        %v2038 = vunpack.c.l.b16 %v1817
        %v2039 = vunpack.c.h.b16 %v1817
        %v2040 = vunpack.c.l.b16 %v1818
        %v2041 = vunpack.c.h.b16 %v1818
        %v2042 = vunpack.c.l.b16 %v1819
        %v2043 = vunpack.c.l.b16 %v1820
        %v2044 = vunpack.c.h.b16 %v1820
        %v2045 = vunpack.c.l.b16 %v1821
        %v2046 = vunpack.c.h.b16 %v1821
        %v2047 = vunpack.c.l.b16 %v1822
        %v2048 = vunpack.c.h.b16 %v1822
        %v2049 = vunpack.c.l.b16 %v1823
        %v2050 = vunpack.c.h.b16 %v1823
        %v2051 = vunpack.c.l.b16 %v1824
        %v2052 = vpack.c.b16 %v1917, %v1908
        %v2053 = vpack.c.b16 %v1918, %v1909
        %v2054 = vpack.c.b16 %v1919, %v1910
        %v2055 = vpack.c.b16 %v1920, %v1911
        %v2056 = vpack.c.b16 %v1921, %v1912
        %v2057 = vpack.c.b16 %v1922, %v1913
        %v2058 = vpack.c.b16 %v1923, %v1914
        %v2059 = vpack.c.b16 %v1924, %v1915
        %v2060 = vpack.c.b16 %v1925, %v1916
        %v2061 = vpack.c.b16 %v1935, %v1926
        %v2062 = vpack.c.b16 %v1936, %v1927
        %v2063 = vpack.c.b16 %v1937, %v1928
        %v2064 = vpack.c.b16 %v1938, %v1929
        %v2065 = vpack.c.b16 %v1939, %v1930
        %v2066 = vpack.c.b16 %v1940, %v1931
        %v2067 = vpack.c.b16 %v1941, %v1932
        %v2068 = vpack.c.b16 %v1942, %v1933
        %v2069 = vpack.c.b16 %v1943, %v1934
        %v2070 = vpack.c.b16 %v1953, %v1944
        %v2071 = vpack.c.b16 %v1954, %v1945
        %v2072 = vpack.c.b16 %v1955, %v1946
        %v2073 = vpack.c.b16 %v1956, %v1947
        %v2074 = vpack.c.b16 %v1957, %v1948
        %v2075 = vpack.c.b16 %v1958, %v1949
        %v2076 = vpack.c.b16 %v1959, %v1950
        %v2077 = vpack.c.b16 %v1960, %v1951
        %v2078 = vpack.c.b16 %v1961, %v1952
        %v2079 = vpack.c.b16 %v1971, %v1962
        %v2080 = vpack.c.b16 %v1972, %v1963
        %v2081 = vpack.c.b16 %v1973, %v1964
        %v2082 = vpack.c.b16 %v1974, %v1965
        %v2083 = vpack.c.b16 %v1975, %v1966
        %v2084 = vpack.c.b16 %v1976, %v1967
        %v2085 = vpack.c.b16 %v1977, %v1968
        %v2086 = vpack.c.b16 %v1978, %v1969
        %v2087 = vpack.c.b16 %v1979, %v1970
        %v2088 = vpack.c.b16 %v1989, %v1980
        %v2089 = vpack.c.b16 %v1990, %v1981
        %v2090 = vpack.c.b16 %v1991, %v1982
        %v2091 = vpack.c.b16 %v1992, %v1983
        %v2092 = vpack.c.b16 %v1993, %v1984
        %v2093 = vpack.c.b16 %v1994, %v1985
        %v2094 = vpack.c.b16 %v1995, %v1986
        %v2095 = vpack.c.b16 %v1996, %v1987
        %v2096 = vpack.c.b16 %v1997, %v1988
        %v2097 = vpack.c.b16 %v2007, %v1998
        %v2098 = vpack.c.b16 %v2008, %v1999
        %v2099 = vpack.c.b16 %v2009, %v2000
        %v2100 = vpack.c.b16 %v2010, %v2001
        %v2101 = vpack.c.b16 %v2011, %v2002
        %v2102 = vpack.c.b16 %v2012, %v2003
        %v2103 = vpack.c.b16 %v2013, %v2004
        %v2104 = vpack.c.b16 %v2014, %v2005
        %v2105 = vpack.c.b16 %v2015, %v2006
        %v2106 = vpack.c.b16 %v2025, %v2016
        %v2107 = vpack.c.b16 %v2026, %v2017
        %v2108 = vpack.c.b16 %v2027, %v2018
        %v2109 = vpack.c.b16 %v2028, %v2019
        %v2110 = vpack.c.b16 %v2029, %v2020
        %v2111 = vpack.c.b16 %v2030, %v2021
        %v2112 = vpack.c.b16 %v2031, %v2022
        %v2113 = vpack.c.b16 %v2032, %v2023
        %v2114 = vpack.c.b16 %v2033, %v2024
        %v2115 = vpack.c.b16 %v2043, %v2034
        %v2116 = vpack.c.b16 %v2044, %v2035
        %v2117 = vpack.c.b16 %v2045, %v2036
        %v2118 = vpack.c.b16 %v2046, %v2037
        %v2119 = vpack.c.b16 %v2047, %v2038
        %v2120 = vpack.c.b16 %v2048, %v2039
        %v2121 = vpack.c.b16 %v2049, %v2040
        %v2122 = vpack.c.b16 %v2050, %v2041
        %v2123 = vpack.c.b16 %v2051, %v2042
        %2196 = vmatpush.bf16.msra.mxu0 %v2115
        %2197 = vmatpush.bf16.msra.mxu0 %v2106
        %2198 = vmatpush.bf16.msra.mxu0 %v2097
        %2199 = vmatpush.bf16.msra.mxu0 %v2088
        %2200 = vmatpush.bf16.msra.mxu0 %v2079
        %2201 = vmatpush.bf16.msra.mxu0 %v2070
        %2202 = vmatpush.bf16.msra.mxu0 %v2061
        %2203 = vmatpush.bf16.msra.mxu0 %v2052
        %2204 = vmatmul.bf16.gmra.mxu0 %v1825
        %v2205 = vpop.f32.mrf.mxu0
        %v2206 = vadd.f32 0.0, %v2205
        %v2207 = vpop.f32.mrf.mxu0
        %v2208 = vadd.f32 0.0, %v2207
        %2209 = vmatmul.bf16.gmra.mxu0 %v1826
        %v2210 = vpop.f32.mrf.mxu0
        %v2211 = vadd.f32 0.0, %v2210
        %v2212 = vpop.f32.mrf.mxu0
        %v2213 = vadd.f32 0.0, %v2212
        %2214 = vmatmul.bf16.gmra.mxu0 %v1827
        %v2215 = vpop.f32.mrf.mxu0
        %v2216 = vadd.f32 0.0, %v2215
        %v2217 = vpop.f32.mrf.mxu0
        %2218 = vdwg.mxu0
        %2219 = vmatpush.bf16.msra.mxu0 %v2116
        %2220 = vmatpush.bf16.msra.mxu0 %v2107
        %2221 = vmatpush.bf16.msra.mxu0 %v2098
        %2222 = vmatpush.bf16.msra.mxu0 %v2089
        %2223 = vmatpush.bf16.msra.mxu0 %v2080
        %2224 = vmatpush.bf16.msra.mxu0 %v2071
        %2225 = vmatpush.bf16.msra.mxu0 %v2062
        %2226 = vmatpush.bf16.msra.mxu0 %v2053
        %2227 = vmatmul.bf16.gmra.mxu0 %v1825
        %v2228 = vpop.f32.mrf.mxu0
        %v2229 = vadd.f32 0.0, %v2228
        %v2230 = vpop.f32.mrf.mxu0
        %v2231 = vadd.f32 0.0, %v2230
        %2232 = vmatmul.bf16.gmra.mxu0 %v1826
        %v2233 = vpop.f32.mrf.mxu0
        %v2234 = vadd.f32 0.0, %v2233
        %v2235 = vpop.f32.mrf.mxu0
        %v2236 = vadd.f32 0.0, %v2235
        %2237 = vmatmul.bf16.gmra.mxu0 %v1827
        %v2238 = vpop.f32.mrf.mxu0
        %v2239 = vadd.f32 0.0, %v2238
        %v2240 = vpop.f32.mrf.mxu0
        %2241 = vdwg.mxu0
        %2242 = vmatpush.bf16.msra.mxu0 %v2117
        %2243 = vmatpush.bf16.msra.mxu0 %v2108
        %2244 = vmatpush.bf16.msra.mxu0 %v2099
        %2245 = vmatpush.bf16.msra.mxu0 %v2090
        %2246 = vmatpush.bf16.msra.mxu0 %v2081
        %2247 = vmatpush.bf16.msra.mxu0 %v2072
        %2248 = vmatpush.bf16.msra.mxu0 %v2063
        %2249 = vmatpush.bf16.msra.mxu0 %v2054
        %2250 = vmatmul.bf16.gmra.mxu0 %v1825
        %v2251 = vpop.f32.mrf.mxu0
        %v2252 = vadd.f32 0.0, %v2251
        %v2253 = vpop.f32.mrf.mxu0
        %v2254 = vadd.f32 0.0, %v2253
        %2255 = vmatmul.bf16.gmra.mxu0 %v1826
        %v2256 = vpop.f32.mrf.mxu0
        %v2257 = vadd.f32 0.0, %v2256
        %v2258 = vpop.f32.mrf.mxu0
        %v2259 = vadd.f32 0.0, %v2258
        %2260 = vmatmul.bf16.gmra.mxu0 %v1827
        %v2261 = vpop.f32.mrf.mxu0
        %v2262 = vadd.f32 0.0, %v2261
        %v2263 = vpop.f32.mrf.mxu0
        %2264 = vdwg.mxu0
        %2265 = vmatpush.bf16.msra.mxu0 %v2118
        %2266 = vmatpush.bf16.msra.mxu0 %v2109
        %2267 = vmatpush.bf16.msra.mxu0 %v2100
        %2268 = vmatpush.bf16.msra.mxu0 %v2091
        %2269 = vmatpush.bf16.msra.mxu0 %v2082
        %2270 = vmatpush.bf16.msra.mxu0 %v2073
        %2271 = vmatpush.bf16.msra.mxu0 %v2064
        %2272 = vmatpush.bf16.msra.mxu0 %v2055
        %2273 = vmatmul.bf16.gmra.mxu0 %v1825
        %v2274 = vpop.f32.mrf.mxu0
        %v2275 = vadd.f32 0.0, %v2274
        %v2276 = vpop.f32.mrf.mxu0
        %v2277 = vadd.f32 0.0, %v2276
        %2278 = vmatmul.bf16.gmra.mxu0 %v1826
        %v2279 = vpop.f32.mrf.mxu0
        %v2280 = vadd.f32 0.0, %v2279
        %v2281 = vpop.f32.mrf.mxu0
        %v2282 = vadd.f32 0.0, %v2281
        %2283 = vmatmul.bf16.gmra.mxu0 %v1827
        %v2284 = vpop.f32.mrf.mxu0
        %v2285 = vadd.f32 0.0, %v2284
        %v2286 = vpop.f32.mrf.mxu0
        %2287 = vdwg.mxu0
        %2288 = vmatpush.bf16.msra.mxu0 %v2119
        %2289 = vmatpush.bf16.msra.mxu0 %v2110
        %2290 = vmatpush.bf16.msra.mxu0 %v2101
        %2291 = vmatpush.bf16.msra.mxu0 %v2092
        %2292 = vmatpush.bf16.msra.mxu0 %v2083
        %2293 = vmatpush.bf16.msra.mxu0 %v2074
        %2294 = vmatpush.bf16.msra.mxu0 %v2065
        %2295 = vmatpush.bf16.msra.mxu0 %v2056
        %2296 = vmatmul.bf16.gmra.mxu0 %v1825
        %v2297 = vpop.f32.mrf.mxu0
        %v2298 = vadd.f32 0.0, %v2297
        %v2299 = vpop.f32.mrf.mxu0
        %v2300 = vadd.f32 0.0, %v2299
        %2301 = vmatmul.bf16.gmra.mxu0 %v1826
        %v2302 = vpop.f32.mrf.mxu0
        %v2303 = vadd.f32 0.0, %v2302
        %v2304 = vpop.f32.mrf.mxu0
        %v2305 = vadd.f32 0.0, %v2304
        %2306 = vmatmul.bf16.gmra.mxu0 %v1827
        %v2307 = vpop.f32.mrf.mxu0
        %v2308 = vadd.f32 0.0, %v2307
        %v2309 = vpop.f32.mrf.mxu0
        %2310 = vdwg.mxu0
        %2311 = vmatpush.bf16.msra.mxu0 %v2120
        %2312 = vmatpush.bf16.msra.mxu0 %v2111
        %2313 = vmatpush.bf16.msra.mxu0 %v2102
        %2314 = vmatpush.bf16.msra.mxu0 %v2093
        %2315 = vmatpush.bf16.msra.mxu0 %v2084
        %2316 = vmatpush.bf16.msra.mxu0 %v2075
        %2317 = vmatpush.bf16.msra.mxu0 %v2066
        %2318 = vmatpush.bf16.msra.mxu0 %v2057
        %2319 = vmatmul.bf16.gmra.mxu0 %v1825
        %v2320 = vpop.f32.mrf.mxu0
        %v2321 = vadd.f32 0.0, %v2320
        %v2322 = vpop.f32.mrf.mxu0
        %v2323 = vadd.f32 0.0, %v2322
        %2324 = vmatmul.bf16.gmra.mxu0 %v1826
        %v2325 = vpop.f32.mrf.mxu0
        %v2326 = vadd.f32 0.0, %v2325
        %v2327 = vpop.f32.mrf.mxu0
        %v2328 = vadd.f32 0.0, %v2327
        %2329 = vmatmul.bf16.gmra.mxu0 %v1827
        %v2330 = vpop.f32.mrf.mxu0
        %v2331 = vadd.f32 0.0, %v2330
        %v2332 = vpop.f32.mrf.mxu0
        %2333 = vdwg.mxu0
        %2334 = vmatpush.bf16.msra.mxu0 %v2121
        %2335 = vmatpush.bf16.msra.mxu0 %v2112
        %2336 = vmatpush.bf16.msra.mxu0 %v2103
        %2337 = vmatpush.bf16.msra.mxu0 %v2094
        %2338 = vmatpush.bf16.msra.mxu0 %v2085
        %2339 = vmatpush.bf16.msra.mxu0 %v2076
        %2340 = vmatpush.bf16.msra.mxu0 %v2067
        %2341 = vmatpush.bf16.msra.mxu0 %v2058
        %2342 = vmatmul.bf16.gmra.mxu0 %v1825
        %v2343 = vpop.f32.mrf.mxu0
        %v2344 = vadd.f32 0.0, %v2343
        %v2345 = vpop.f32.mrf.mxu0
        %v2346 = vadd.f32 0.0, %v2345
        %2347 = vmatmul.bf16.gmra.mxu0 %v1826
        %v2348 = vpop.f32.mrf.mxu0
        %v2349 = vadd.f32 0.0, %v2348
        %v2350 = vpop.f32.mrf.mxu0
        %v2351 = vadd.f32 0.0, %v2350
        %2352 = vmatmul.bf16.gmra.mxu0 %v1827
        %v2353 = vpop.f32.mrf.mxu0
        %v2354 = vadd.f32 0.0, %v2353
        %v2355 = vpop.f32.mrf.mxu0
        %2356 = vdwg.mxu0
        %2357 = vmatpush.bf16.msra.mxu0 %v2122
        %2358 = vmatpush.bf16.msra.mxu0 %v2113
        %2359 = vmatpush.bf16.msra.mxu0 %v2104
        %2360 = vmatpush.bf16.msra.mxu0 %v2095
        %2361 = vmatpush.bf16.msra.mxu0 %v2086
        %2362 = vmatpush.bf16.msra.mxu0 %v2077
        %2363 = vmatpush.bf16.msra.mxu0 %v2068
        %2364 = vmatpush.bf16.msra.mxu0 %v2059
        %2365 = vmatmul.bf16.gmra.mxu0 %v1825
        %v2366 = vpop.f32.mrf.mxu0
        %v2367 = vadd.f32 0.0, %v2366
        %v2368 = vpop.f32.mrf.mxu0
        %v2369 = vadd.f32 0.0, %v2368
        %2370 = vmatmul.bf16.gmra.mxu0 %v1826
        %v2371 = vpop.f32.mrf.mxu0
        %v2372 = vadd.f32 0.0, %v2371
        %v2373 = vpop.f32.mrf.mxu0
        %v2374 = vadd.f32 0.0, %v2373
        %2375 = vmatmul.bf16.gmra.mxu0 %v1827
        %v2376 = vpop.f32.mrf.mxu0
        %v2377 = vadd.f32 0.0, %v2376
        %v2378 = vpop.f32.mrf.mxu0
        %2379 = vdwg.mxu0
        %2380 = vmatpush.bf16.msra.mxu0 %v2123
        %2381 = vmatpush.bf16.msra.mxu0 %v2114
        %2382 = vmatpush.bf16.msra.mxu0 %v2105
        %2383 = vmatpush.bf16.msra.mxu0 %v2096
        %2384 = vmatpush.bf16.msra.mxu0 %v2087
        %2385 = vmatpush.bf16.msra.mxu0 %v2078
        %2386 = vmatpush.bf16.msra.mxu0 %v2069
        %2387 = vmatpush.bf16.msra.mxu0 %v2060
        %2388 = vmatmul.bf16.gmra.mxu0 %v1825
        %v2389 = vpop.f32.mrf.mxu0
        %v2390 = vadd.f32 0.0, %v2389
        %v2391 = vpop.f32.mrf.mxu0
        %v2392 = vadd.f32 0.0, %v2391
        %2393 = vmatmul.bf16.gmra.mxu0 %v1826
        %v2394 = vpop.f32.mrf.mxu0
        %v2395 = vadd.f32 0.0, %v2394
        %v2396 = vpop.f32.mrf.mxu0
        %v2397 = vadd.f32 0.0, %v2396
        %2398 = vmatmul.bf16.gmra.mxu0 %v1827
        %v2399 = vpop.f32.mrf.mxu0
        %v2400 = vadd.f32 0.0, %v2399
        %v2401 = vpop.f32.mrf.mxu0
        %2402 = vdwg.mxu0
        %v2403 = vrot.slane %v2206, 2
        %v2404 = vrot.slane %v2208, 2
        %v2405 = vrot.slane %v2211, 2
        %v2406 = vrot.slane %v2213, 2
        %v2407 = vrot.slane %v2216, 2
        %v2408 = vsel %vm1517, %v2406, %v2407
        %v2409 = vsel %vm1517, %v2405, %v2406
        %v2410 = vsel %vm1517, %v2404, %v2405
        %v2411 = vsel %vm1517, %v2403, %v2404
        %v2412 = vsel %vm1517, %v2407, %v2403
        %v2413 = vmul.f32 %v2412, %v1523
        %v2414 = vmul.f32 %v2411, %v1524
        %v2415 = vmul.f32 %v2410, %v1525
        %v2416 = vmul.f32 %v2409, %v1526
        %v2417 = vmul.f32 %v2408, %v1527
        %v2418 = vadd.f32 %v2413, 0.0
        %v2419 = vadd.f32 %v2414, 0.0
        %v2420 = vadd.f32 %v2415, 0.0
        %v2421 = vadd.f32 %v2416, 0.0
        %v2422 = vadd.f32 %v2417, 0.0
        %v2423 = vrot.slane %v2229, 3
        %v2424 = vrot.slane %v2231, 3
        %v2425 = vrot.slane %v2234, 3
        %v2426 = vrot.slane %v2236, 3
        %v2427 = vrot.slane %v2239, 3
        %v2428 = vsel %vm1543, %v2426, %v2427
        %v2429 = vsel %vm1543, %v2425, %v2426
        %v2430 = vsel %vm1543, %v2424, %v2425
        %v2431 = vsel %vm1543, %v2423, %v2424
        %v2432 = vsel %vm1543, %v2427, %v2423
        %v2433 = vmul.f32 %v2432, %v1549
        %v2434 = vmul.f32 %v2431, %v1550
        %v2435 = vmul.f32 %v2430, %v1551
        %v2436 = vmul.f32 %v2429, %v1552
        %v2437 = vmul.f32 %v2428, %v1553
        %v2438 = vadd.f32 %v2418, %v2433
        %v2439 = vadd.f32 %v2419, %v2434
        %v2440 = vadd.f32 %v2420, %v2435
        %v2441 = vadd.f32 %v2421, %v2436
        %v2442 = vadd.f32 %v2422, %v2437
        %v2443 = vrot.slane %v2252, 4
        %v2444 = vrot.slane %v2254, 4
        %v2445 = vrot.slane %v2257, 4
        %v2446 = vrot.slane %v2259, 4
        %v2447 = vrot.slane %v2262, 4
        %v2448 = vsel %vm1569, %v2446, %v2447
        %v2449 = vsel %vm1569, %v2445, %v2446
        %v2450 = vsel %vm1569, %v2444, %v2445
        %v2451 = vsel %vm1569, %v2443, %v2444
        %v2452 = vsel %vm1569, %v2447, %v2443
        %v2453 = vmul.f32 %v2452, %v1575
        %v2454 = vmul.f32 %v2451, %v1576
        %v2455 = vmul.f32 %v2450, %v1577
        %v2456 = vmul.f32 %v2449, %v1578
        %v2457 = vmul.f32 %v2448, %v1579
        %v2458 = vadd.f32 %v2438, %v2453
        %v2459 = vadd.f32 %v2439, %v2454
        %v2460 = vadd.f32 %v2440, %v2455
        %v2461 = vadd.f32 %v2441, %v2456
        %v2462 = vadd.f32 %v2442, %v2457
        %v2463 = vrot.slane %v2275, 7
        %v2464 = vrot.slane %v2277, 7
        %v2465 = vrot.slane %v2280, 7
        %v2466 = vrot.slane %v2282, 7
        %v2467 = vrot.slane %v2285, 7
        %v2468 = vsel %vm1595, %v2466, %v2467
        %v2469 = vsel %vm1595, %v2465, %v2466
        %v2470 = vsel %vm1595, %v2464, %v2465
        %v2471 = vsel %vm1595, %v2463, %v2464
        %v2472 = vsel %vm1595, %v2467, %v2463
        %v2473 = vmul.f32 %v2472, %v1601
        %v2474 = vmul.f32 %v2471, %v1602
        %v2475 = vmul.f32 %v2470, %v1603
        %v2476 = vmul.f32 %v2469, %v1604
        %v2477 = vmul.f32 %v2468, %v1605
        %v2478 = vadd.f32 %v2458, %v2473
        %v2479 = vadd.f32 %v2459, %v2474
        %v2480 = vadd.f32 %v2460, %v2475
        %v2481 = vadd.f32 %v2461, %v2476
        %v2482 = vadd.f32 %v2462, %v2477
        %v2483 = vmul.f32 %v2298, %v1616
        %v2484 = vmul.f32 %v2300, %v1617
        %v2485 = vmul.f32 %v2303, %v1618
        %v2486 = vmul.f32 %v2305, %v1619
        %v2487 = vmul.f32 %v2308, %v1620
        %v2488 = vadd.f32 %v2478, %v2483
        %v2489 = vadd.f32 %v2479, %v2484
        %v2490 = vadd.f32 %v2480, %v2485
        %v2491 = vadd.f32 %v2481, %v2486
        %v2492 = vadd.f32 %v2482, %v2487
        %v2493 = vrot.slane %v2321, 1
        %v2494 = vrot.slane %v2323, 1
        %v2495 = vrot.slane %v2326, 1
        %v2496 = vrot.slane %v2328, 1
        %v2497 = vrot.slane %v2331, 1
        %v2498 = vsel %vm1636, %v2496, %v2497
        %v2499 = vsel %vm1636, %v2495, %v2496
        %v2500 = vsel %vm1636, %v2494, %v2495
        %v2501 = vsel %vm1636, %v2493, %v2494
        %v2502 = vsel %vm1636, %v2497, %v2493
        %v2503 = vmul.f32 %v2501, %v1642
        %v2504 = vmul.f32 %v2500, %v1643
        %v2505 = vmul.f32 %v2499, %v1644
        %v2506 = vmul.f32 %v2498, %v1645
        %v2507 = vmul.f32 %v2502, %v1646
        %v2508 = vadd.f32 %v2488, %v2503
        %v2509 = vadd.f32 %v2489, %v2504
        %v2510 = vadd.f32 %v2490, %v2505
        %v2511 = vadd.f32 %v2491, %v2506
        %v2512 = vadd.f32 %v2492, %v2507
        %v2513 = vrot.slane %v2344, 4
        %v2514 = vrot.slane %v2346, 4
        %v2515 = vrot.slane %v2349, 4
        %v2516 = vrot.slane %v2351, 4
        %v2517 = vrot.slane %v2354, 4
        %v2518 = vsel %vm1569, %v2516, %v2517
        %v2519 = vsel %vm1569, %v2515, %v2516
        %v2520 = vsel %vm1569, %v2514, %v2515
        %v2521 = vsel %vm1569, %v2513, %v2514
        %v2522 = vsel %vm1569, %v2517, %v2513
        %v2523 = vmul.f32 %v2521, %v1667
        %v2524 = vmul.f32 %v2520, %v1668
        %v2525 = vmul.f32 %v2519, %v1669
        %v2526 = vmul.f32 %v2518, %v1670
        %v2527 = vmul.f32 %v2522, %v1671
        %v2528 = vadd.f32 %v2508, %v2523
        %v2529 = vadd.f32 %v2509, %v2524
        %v2530 = vadd.f32 %v2510, %v2525
        %v2531 = vadd.f32 %v2511, %v2526
        %v2532 = vadd.f32 %v2512, %v2527
        %v2533 = vrot.slane %v2367, 5
        %v2534 = vrot.slane %v2369, 5
        %v2535 = vrot.slane %v2372, 5
        %v2536 = vrot.slane %v2374, 5
        %v2537 = vrot.slane %v2377, 5
        %v2538 = vsel %vm1687, %v2536, %v2537
        %v2539 = vsel %vm1687, %v2535, %v2536
        %v2540 = vsel %vm1687, %v2534, %v2535
        %v2541 = vsel %vm1687, %v2533, %v2534
        %v2542 = vsel %vm1687, %v2537, %v2533
        %v2543 = vmul.f32 %v2541, %v1693
        %v2544 = vmul.f32 %v2540, %v1694
        %v2545 = vmul.f32 %v2539, %v1695
        %v2546 = vmul.f32 %v2538, %v1696
        %v2547 = vmul.f32 %v2542, %v1697
        %v2548 = vadd.f32 %v2528, %v2543
        %v2549 = vadd.f32 %v2529, %v2544
        %v2550 = vadd.f32 %v2530, %v2545
        %v2551 = vadd.f32 %v2531, %v2546
        %v2552 = vadd.f32 %v2532, %v2547
        %v2553 = vrot.slane %v2390, 6
        %v2554 = vrot.slane %v2392, 6
        %v2555 = vrot.slane %v2395, 6
        %v2556 = vrot.slane %v2397, 6
        %v2557 = vrot.slane %v2400, 6
        %v2558 = vsel %vm1713, %v2556, %v2557
        %v2559 = vsel %vm1713, %v2555, %v2556
        %v2560 = vsel %vm1713, %v2554, %v2555
        %v2561 = vsel %vm1713, %v2553, %v2554
        %v2562 = vsel %vm1713, %v2557, %v2553
        %v2563 = vmul.f32 %v2561, %v1719
        %v2564 = vmul.f32 %v2560, %v1720
        %v2565 = vmul.f32 %v2559, %v1721
        %v2566 = vmul.f32 %v2558, %v1722
        %v2567 = vmul.f32 %v2562, %v1723
        %v2568 = vadd.f32 %v2548, %v2563
        %v2569 = vadd.f32 %v2549, %v2564
        %v2570 = vadd.f32 %v2550, %v2565
        %v2571 = vadd.f32 %v2551, %v2566
        %v2572 = vadd.f32 %v2552, %v2567
        %v2573 = vperm.slane %v474, 0
        %v2574 = vadd.f32 %v2568, %v2573
        %v2575 = vadd.f32 %v2569, %v2573
        %v2576 = vadd.f32 %v2570, %v2573
        %v2577 = vadd.f32 %v2571, %v2573
        %v2578 = vadd.f32 %v2572, %v2573
        %v2579 = vmax.f32 %v2574, 0.0
        %v2580 = vmax.f32 %v2575, 0.0
        %v2581 = vmax.f32 %v2576, 0.0
        %v2582 = vmax.f32 %v2577, 0.0
        %v2583 = vmax.f32 %v2578, 0.0
        %v2584 = vmul.f32 %v1740, %v477
        %v2585 = vmul.f32 %v1741, %v478
        %v2586 = vmul.f32 %v1742, %v479
        %v2587 = vmul.f32 %v1743, %v480
        %v2588 = vmul.f32 %v1744, %v481
        %v2589 = vmul.f32 %v2579, %v482
        %v2590 = vmul.f32 %v2580, %v483
        %v2591 = vmul.f32 %v2581, %v484
        %v2592 = vmul.f32 %v2582, %v485
        %v2593 = vmul.f32 %v2583, %v486
        %v2594 = vsub.f32 %v2584, %v2589
        %v2595 = vsub.f32 %v2585, %v2590
        %v2596 = vsub.f32 %v2586, %v2591
        %v2597 = vsub.f32 %v2587, %v2592
        %v2598 = vsub.f32 %v2588, %v2593
        %v2599 = vmul.f32 %v1740, %v482
        %v2600 = vmul.f32 %v1741, %v483
        %v2601 = vmul.f32 %v1742, %v484
        %v2602 = vmul.f32 %v1743, %v485
        %v2603 = vmul.f32 %v1744, %v486
        %v2604 = vmul.f32 %v2579, %v477
        %v2605 = vmul.f32 %v2580, %v478
        %v2606 = vmul.f32 %v2581, %v479
        %v2607 = vmul.f32 %v2582, %v480
        %v2608 = vmul.f32 %v2583, %v481
        %v2609 = vadd.f32 %v2599, %v2604
        %v2610 = vadd.f32 %v2600, %v2605
        %v2611 = vadd.f32 %v2601, %v2606
        %v2612 = vadd.f32 %v2602, %v2607
        %v2613 = vadd.f32 %v2603, %v2608
        %v2614 = vld [vmem:[#allocation3] sm:$0xf]
        %v2615 = vld [vmem:[#allocation3 + $0x4] sm:$0xf]
        %v2616 = vld [vmem:[#allocation3 + $0x8] sm:$0xf]
        %v2617 = vld [vmem:[#allocation3 + $0xc] sm:$0xf]
        %v2618 = vld [vmem:[#allocation3 + $0x10] sm:$0xf]
        %v2619 = vld [vmem:[#allocation3 + $0x14] sm:$0xf]
        %v2620 = vld [vmem:[#allocation3 + $0x18] sm:$0xf]
        %v2621 = vld [vmem:[#allocation3 + $0x1c] sm:$0xf]
        %v2622 = vpack.c.bf16 %v2595, %v2594
        %v2623 = vpack.c.bf16 %v2597, %v2596
        %v2624 = vpack.c.bf16 %v2598, %v2598
        %v2625 = vld [vmem:[%s3] sm:$0xf]
        %v2626 = vld [vmem:[%s3 + $0x4] sm:$0xf]
        %v2627 = vld [vmem:[%s3 + $0x8] sm:$0xf]
        %v2628 = vld [vmem:[%s3 + $0xc] sm:$0xf]
        %v2629 = vld [vmem:[%s3 + $0x10] sm:$0xf]
        %v2630 = vld [vmem:[%s3 + $0x14] sm:$0xf]
        %v2631 = vld [vmem:[%s3 + $0x18] sm:$0xf]
        %v2632 = vld [vmem:[%s3 + $0x1c] sm:$0xf]
        %v2633 = vpack.c.bf16 %v2610, %v2609
        %v2634 = vpack.c.bf16 %v2612, %v2611
        %v2635 = vpack.c.bf16 %v2613, %v2613
        %v2644 = vunpack.c.l.b16 %v2625
        %v2645 = vunpack.c.l.b16 %v2626
        %v2646 = vunpack.c.l.b16 %v2627
        %v2647 = vunpack.c.l.b16 %v2628
        %v2648 = vunpack.c.l.b16 %v2629
        %v2649 = vunpack.c.l.b16 %v2630
        %v2650 = vunpack.c.l.b16 %v2631
        %v2651 = vunpack.c.l.b16 %v2632
        %v2652 = vpack.c.b16 %v2645, %v2644
        %v2653 = vpack.c.b16 %v2647, %v2646
        %v2654 = vpack.c.b16 %v2649, %v2648
        %v2655 = vpack.c.b16 %v2651, %v2650
        %vm2656 = vcmask 326656
        %v2658 = vsel %vm2656, %v2652, 0
        %v2661 = vsel %vm2656, %v2653, 0
        %v2664 = vsel %vm2656, %v2654, 0
        %v2667 = vsel %vm2656, %v2655, 0
        %vm2669 = vcmask 1043456
        %v2671 = vsel %vm2669, %v2635, 0
        %2673 = vmatpush.bf16.msra.mxu0 0
        %2674 = vmatpush.bf16.msra.mxu0 0
        %2675 = vmatpush.bf16.msra.mxu0 0
        %2676 = vmatpush.bf16.msra.mxu0 0
        %2677 = vmatpush.bf16.msra.mxu0 0
        %2678 = vmatpush.bf16.msra.mxu0 %v2671
        %2679 = vmatpush.bf16.msra.mxu0 %v2634
        %2680 = vmatpush.bf16.msra.mxu0 %v2633
        %2681 = vmatmul.bf16.gmra.mxu0 %v2658
        %v2682 = vpop.f32.mrf.mxu0
        %v2683 = vadd.f32 0.0, %v2682
        %v2684 = vpop.f32.mrf.mxu0
        %v2685 = vadd.f32 0.0, %v2684
        %2686 = vmatmul.bf16.gmra.mxu0 %v2661
        %v2687 = vpop.f32.mrf.mxu0
        %v2688 = vadd.f32 0.0, %v2687
        %v2689 = vpop.f32.mrf.mxu0
        %v2690 = vadd.f32 0.0, %v2689
        %2691 = vmatmul.bf16.gmra.mxu0 %v2664
        %v2692 = vpop.f32.mrf.mxu0
        %v2693 = vadd.f32 0.0, %v2692
        %v2694 = vpop.f32.mrf.mxu0
        %v2695 = vadd.f32 0.0, %v2694
        %2696 = vmatmul.bf16.gmra.mxu0 %v2667
        %v2697 = vpop.f32.mrf.mxu0
        %v2698 = vadd.f32 0.0, %v2697
        %v2699 = vpop.f32.mrf.mxu0
        %v2700 = vadd.f32 0.0, %v2699
        %2701 = vdwg.mxu0
        %v2710 = vunpack.c.l.b16 %v2614
        %v2711 = vunpack.c.l.b16 %v2615
        %v2712 = vunpack.c.l.b16 %v2616
        %v2713 = vunpack.c.l.b16 %v2617
        %v2714 = vunpack.c.l.b16 %v2618
        %v2715 = vunpack.c.l.b16 %v2619
        %v2716 = vunpack.c.l.b16 %v2620
        %v2717 = vunpack.c.l.b16 %v2621
        %v2718 = vpack.c.b16 %v2711, %v2710
        %v2719 = vpack.c.b16 %v2713, %v2712
        %v2720 = vpack.c.b16 %v2715, %v2714
        %v2721 = vpack.c.b16 %v2717, %v2716
        %v2723 = vsel %vm2656, %v2718, 0
        %v2726 = vsel %vm2656, %v2719, 0
        %v2729 = vsel %vm2656, %v2720, 0
        %v2732 = vsel %vm2656, %v2721, 0
        %v2735 = vsel %vm2669, %v2624, 0
        %2737 = vmatpush.bf16.msra.mxu0 0
        %2738 = vmatpush.bf16.msra.mxu0 0
        %2739 = vmatpush.bf16.msra.mxu0 0
        %2740 = vmatpush.bf16.msra.mxu0 0
        %2741 = vmatpush.bf16.msra.mxu0 0
        %2742 = vmatpush.bf16.msra.mxu0 %v2735
        %2743 = vmatpush.bf16.msra.mxu0 %v2623
        %2744 = vmatpush.bf16.msra.mxu0 %v2622
        %2745 = vmatmul.bf16.gmra.mxu0 %v2723
        %v2746 = vpop.f32.mrf.mxu0
        %v2747 = vadd.f32 %v2683, %v2746
        %v2748 = vpop.f32.mrf.mxu0
        %v2749 = vadd.f32 %v2685, %v2748
        %2750 = vmatmul.bf16.gmra.mxu0 %v2726
        %v2751 = vpop.f32.mrf.mxu0
        %v2752 = vadd.f32 %v2688, %v2751
        %v2753 = vpop.f32.mrf.mxu0
        %v2754 = vadd.f32 %v2690, %v2753
        %2755 = vmatmul.bf16.gmra.mxu0 %v2729
        %v2756 = vpop.f32.mrf.mxu0
        %v2757 = vadd.f32 %v2693, %v2756
        %v2758 = vpop.f32.mrf.mxu0
        %v2759 = vadd.f32 %v2695, %v2758
        %2760 = vmatmul.bf16.gmra.mxu0 %v2732
        %v2761 = vpop.f32.mrf.mxu0
        %v2762 = vadd.f32 %v2698, %v2761
        %v2763 = vpop.f32.mrf.mxu0
        %v2764 = vadd.f32 %v2700, %v2763
        %2765 = vdwg.mxu0
        %v2766 = vld [vmem:[%s6] sm:$0xff]
        %v2767 = vld [vmem:[%s6 + $0x8] sm:$0xff]
        %v2768 = vld [vmem:[%s6 + $0x10] sm:$0xff]
        %v2769 = vld [vmem:[%s6 + $0x18] sm:$0xff]
        %v2770 = vld [vmem:[%s6 + $0x20] sm:$0xff]
        %v2771 = vld [vmem:[%s6 + $0x28] sm:$0xff]
        %v2772 = vld [vmem:[%s6 + $0x30] sm:$0xff]
        %v2773 = vld [vmem:[%s6 + $0x38] sm:$0xff]
        %v2774 = vld [vmem:[%s6 + $0x40] sm:$0xff]
        %v2775 = vld [vmem:[%s6 + $0x48] sm:$0xff]
        %v2776 = vld [vmem:[%s6 + $0x50] sm:$0xff]
        %v2777 = vld [vmem:[%s6 + $0x58] sm:$0xff]
        %v2778 = vld [vmem:[%s6 + $0x60] sm:$0xff]
        %v2779 = vld [vmem:[%s6 + $0x68] sm:$0xff]
        %v2780 = vld [vmem:[%s6 + $0x70] sm:$0xff]
        %v2781 = vld [vmem:[%s6 + $0x78] sm:$0xff]
        %v2782 = vld [vmem:[%s6 + $0x80] sm:$0xff]
        %v2783 = vld [vmem:[%s6 + $0x88] sm:$0xff]
        %v2784 = vld [vmem:[%s6 + $0x90] sm:$0xff]
        %v2785 = vld [vmem:[%s6 + $0x98] sm:$0xff]
        %v2786 = vld [vmem:[%s6 + $0xa0] sm:$0xff]
        %v2787 = vld [vmem:[%s6 + $0xa8] sm:$0xff]
        %v2788 = vld [vmem:[%s6 + $0xb0] sm:$0xff]
        %v2789 = vld [vmem:[%s6 + $0xb8] sm:$0xff]
        %v2790 = vld [vmem:[%s6 + $0xc0] sm:$0xff]
        %v2791 = vld [vmem:[%s6 + $0xc8] sm:$0xff]
        %v2792 = vld [vmem:[%s6 + $0xd0] sm:$0xff]
        %v2793 = vld [vmem:[%s6 + $0xd8] sm:$0xff]
        %v2794 = vld [vmem:[%s6 + $0xe0] sm:$0xff]
        %v2795 = vld [vmem:[%s6 + $0xe8] sm:$0xff]
        %v2796 = vld [vmem:[%s6 + $0xf0] sm:$0xff]
        %v2797 = vld [vmem:[%s6 + $0xf8] sm:$0xff]
        %v2798 = vpack.c.bf16 %v463, %v462
        %v2799 = vpack.c.bf16 %v465, %v464
        %v2800 = vpack.c.bf16 %v467, %v466
        %v2801 = vpack.c.bf16 %v469, %v468
        %v2802 = vpack.c.bf16 %v470, %v470
        %v2835 = vunpack.c.l.b16 %v2766
        %v2836 = vunpack.c.h.b16 %v2766
        %v2837 = vunpack.c.l.b16 %v2767
        %v2838 = vunpack.c.h.b16 %v2767
        %v2839 = vunpack.c.l.b16 %v2768
        %v2840 = vunpack.c.h.b16 %v2768
        %v2841 = vunpack.c.l.b16 %v2769
        %v2842 = vunpack.c.h.b16 %v2769
        %v2843 = vunpack.c.l.b16 %v2770
        %v2844 = vunpack.c.h.b16 %v2770
        %v2845 = vunpack.c.l.b16 %v2771
        %v2846 = vunpack.c.h.b16 %v2771
        %v2847 = vunpack.c.l.b16 %v2772
        %v2848 = vunpack.c.h.b16 %v2772
        %v2849 = vunpack.c.l.b16 %v2773
        %v2850 = vunpack.c.h.b16 %v2773
        %v2851 = vunpack.c.l.b16 %v2774
        %v2852 = vunpack.c.h.b16 %v2774
        %v2853 = vunpack.c.l.b16 %v2775
        %v2854 = vunpack.c.h.b16 %v2775
        %v2855 = vunpack.c.l.b16 %v2776
        %v2856 = vunpack.c.h.b16 %v2776
        %v2857 = vunpack.c.l.b16 %v2777
        %v2858 = vunpack.c.h.b16 %v2777
        %v2859 = vunpack.c.l.b16 %v2778
        %v2860 = vunpack.c.h.b16 %v2778
        %v2861 = vunpack.c.l.b16 %v2779
        %v2862 = vunpack.c.h.b16 %v2779
        %v2863 = vunpack.c.l.b16 %v2780
        %v2864 = vunpack.c.h.b16 %v2780
        %v2865 = vunpack.c.l.b16 %v2781
        %v2866 = vunpack.c.h.b16 %v2781
        %v2867 = vunpack.c.l.b16 %v2782
        %v2868 = vunpack.c.h.b16 %v2782
        %v2869 = vunpack.c.l.b16 %v2783
        %v2870 = vunpack.c.h.b16 %v2783
        %v2871 = vunpack.c.l.b16 %v2784
        %v2872 = vunpack.c.h.b16 %v2784
        %v2873 = vunpack.c.l.b16 %v2785
        %v2874 = vunpack.c.h.b16 %v2785
        %v2875 = vunpack.c.l.b16 %v2786
        %v2876 = vunpack.c.h.b16 %v2786
        %v2877 = vunpack.c.l.b16 %v2787
        %v2878 = vunpack.c.h.b16 %v2787
        %v2879 = vunpack.c.l.b16 %v2788
        %v2880 = vunpack.c.h.b16 %v2788
        %v2881 = vunpack.c.l.b16 %v2789
        %v2882 = vunpack.c.h.b16 %v2789
        %v2883 = vunpack.c.l.b16 %v2790
        %v2884 = vunpack.c.h.b16 %v2790
        %v2885 = vunpack.c.l.b16 %v2791
        %v2886 = vunpack.c.h.b16 %v2791
        %v2887 = vunpack.c.l.b16 %v2792
        %v2888 = vunpack.c.h.b16 %v2792
        %v2889 = vunpack.c.l.b16 %v2793
        %v2890 = vunpack.c.h.b16 %v2793
        %v2891 = vunpack.c.l.b16 %v2794
        %v2892 = vunpack.c.h.b16 %v2794
        %v2893 = vunpack.c.l.b16 %v2795
        %v2894 = vunpack.c.h.b16 %v2795
        %v2895 = vunpack.c.l.b16 %v2796
        %v2896 = vunpack.c.h.b16 %v2796
        %v2897 = vunpack.c.l.b16 %v2797
        %v2898 = vunpack.c.h.b16 %v2797
        %v2899 = vpack.c.b16 %v2839, %v2835
        %v2900 = vpack.c.b16 %v2840, %v2836
        %v2901 = vpack.c.b16 %v2841, %v2837
        %v2902 = vpack.c.b16 %v2842, %v2838
        %v2903 = vpack.c.b16 %v2847, %v2843
        %v2904 = vpack.c.b16 %v2848, %v2844
        %v2905 = vpack.c.b16 %v2849, %v2845
        %v2906 = vpack.c.b16 %v2850, %v2846
        %v2907 = vpack.c.b16 %v2855, %v2851
        %v2908 = vpack.c.b16 %v2856, %v2852
        %v2909 = vpack.c.b16 %v2857, %v2853
        %v2910 = vpack.c.b16 %v2858, %v2854
        %v2911 = vpack.c.b16 %v2863, %v2859
        %v2912 = vpack.c.b16 %v2864, %v2860
        %v2913 = vpack.c.b16 %v2865, %v2861
        %v2914 = vpack.c.b16 %v2866, %v2862
        %v2915 = vpack.c.b16 %v2871, %v2867
        %v2916 = vpack.c.b16 %v2872, %v2868
        %v2917 = vpack.c.b16 %v2873, %v2869
        %v2918 = vpack.c.b16 %v2874, %v2870
        %v2919 = vpack.c.b16 %v2879, %v2875
        %v2920 = vpack.c.b16 %v2880, %v2876
        %v2921 = vpack.c.b16 %v2881, %v2877
        %v2922 = vpack.c.b16 %v2882, %v2878
        %v2923 = vpack.c.b16 %v2887, %v2883
        %v2924 = vpack.c.b16 %v2888, %v2884
        %v2925 = vpack.c.b16 %v2889, %v2885
        %v2926 = vpack.c.b16 %v2890, %v2886
        %v2927 = vpack.c.b16 %v2895, %v2891
        %v2928 = vpack.c.b16 %v2896, %v2892
        %v2929 = vpack.c.b16 %v2897, %v2893
        %v2930 = vpack.c.b16 %v2898, %v2894
        %2963 = vmatpush.bf16.msra.mxu0 %v2927
        %2964 = vmatpush.bf16.msra.mxu0 %v2923
        %2965 = vmatpush.bf16.msra.mxu0 %v2919
        %2966 = vmatpush.bf16.msra.mxu0 %v2915
        %2967 = vmatpush.bf16.msra.mxu0 %v2911
        %2968 = vmatpush.bf16.msra.mxu0 %v2907
        %2969 = vmatpush.bf16.msra.mxu0 %v2903
        %2970 = vmatpush.bf16.msra.mxu0 %v2899
        %2971 = vmatmul.bf16.gmra.mxu0 %v2798
        %v2972 = vpop.f32.mrf.mxu0
        %v2973 = vadd.f32 0.0, %v2972
        %v2974 = vpop.f32.mrf.mxu0
        %v2975 = vadd.f32 0.0, %v2974
        %2976 = vmatmul.bf16.gmra.mxu0 %v2799
        %v2977 = vpop.f32.mrf.mxu0
        %v2978 = vadd.f32 0.0, %v2977
        %v2979 = vpop.f32.mrf.mxu0
        %v2980 = vadd.f32 0.0, %v2979
        %2981 = vmatmul.bf16.gmra.mxu0 %v2800
        %v2982 = vpop.f32.mrf.mxu0
        %v2983 = vadd.f32 0.0, %v2982
        %v2984 = vpop.f32.mrf.mxu0
        %v2985 = vadd.f32 0.0, %v2984
        %2986 = vmatmul.bf16.gmra.mxu0 %v2801
        %v2987 = vpop.f32.mrf.mxu0
        %v2988 = vadd.f32 0.0, %v2987
        %v2989 = vpop.f32.mrf.mxu0
        %v2990 = vadd.f32 0.0, %v2989
        %2991 = vmatmul.bf16.gmra.mxu0 %v2802
        %v2992 = vpop.f32.mrf.mxu0
        %v2993 = vadd.f32 0.0, %v2992
        %v2994 = vpop.f32.mrf.mxu0
        %2995 = vdwg.mxu0
        %2996 = vmatpush.bf16.msra.mxu0 %v2928
        %2997 = vmatpush.bf16.msra.mxu0 %v2924
        %2998 = vmatpush.bf16.msra.mxu0 %v2920
        %2999 = vmatpush.bf16.msra.mxu0 %v2916
        %3000 = vmatpush.bf16.msra.mxu0 %v2912
        %3001 = vmatpush.bf16.msra.mxu0 %v2908
        %3002 = vmatpush.bf16.msra.mxu0 %v2904
        %3003 = vmatpush.bf16.msra.mxu0 %v2900
        %3004 = vmatmul.bf16.gmra.mxu0 %v2798
        %v3005 = vpop.f32.mrf.mxu0
        %v3006 = vadd.f32 0.0, %v3005
        %v3007 = vpop.f32.mrf.mxu0
        %v3008 = vadd.f32 0.0, %v3007
        %3009 = vmatmul.bf16.gmra.mxu0 %v2799
        %v3010 = vpop.f32.mrf.mxu0
        %v3011 = vadd.f32 0.0, %v3010
        %v3012 = vpop.f32.mrf.mxu0
        %v3013 = vadd.f32 0.0, %v3012
        %3014 = vmatmul.bf16.gmra.mxu0 %v2800
        %v3015 = vpop.f32.mrf.mxu0
        %v3016 = vadd.f32 0.0, %v3015
        %v3017 = vpop.f32.mrf.mxu0
        %v3018 = vadd.f32 0.0, %v3017
        %3019 = vmatmul.bf16.gmra.mxu0 %v2801
        %v3020 = vpop.f32.mrf.mxu0
        %v3021 = vadd.f32 0.0, %v3020
        %v3022 = vpop.f32.mrf.mxu0
        %v3023 = vadd.f32 0.0, %v3022
        %3024 = vmatmul.bf16.gmra.mxu0 %v2802
        %v3025 = vpop.f32.mrf.mxu0
        %v3026 = vadd.f32 0.0, %v3025
        %v3027 = vpop.f32.mrf.mxu0
        %3028 = vdwg.mxu0
        %3029 = vmatpush.bf16.msra.mxu0 %v2929
        %3030 = vmatpush.bf16.msra.mxu0 %v2925
        %3031 = vmatpush.bf16.msra.mxu0 %v2921
        %3032 = vmatpush.bf16.msra.mxu0 %v2917
        %3033 = vmatpush.bf16.msra.mxu0 %v2913
        %3034 = vmatpush.bf16.msra.mxu0 %v2909
        %3035 = vmatpush.bf16.msra.mxu0 %v2905
        %3036 = vmatpush.bf16.msra.mxu0 %v2901
        %3037 = vmatmul.bf16.gmra.mxu0 %v2798
        %v3038 = vpop.f32.mrf.mxu0
        %v3039 = vadd.f32 0.0, %v3038
        %v3040 = vpop.f32.mrf.mxu0
        %v3041 = vadd.f32 0.0, %v3040
        %3042 = vmatmul.bf16.gmra.mxu0 %v2799
        %v3043 = vpop.f32.mrf.mxu0
        %v3044 = vadd.f32 0.0, %v3043
        %v3045 = vpop.f32.mrf.mxu0
        %v3046 = vadd.f32 0.0, %v3045
        %3047 = vmatmul.bf16.gmra.mxu0 %v2800
        %v3048 = vpop.f32.mrf.mxu0
        %v3049 = vadd.f32 0.0, %v3048
        %v3050 = vpop.f32.mrf.mxu0
        %v3051 = vadd.f32 0.0, %v3050
        %3052 = vmatmul.bf16.gmra.mxu0 %v2801
        %v3053 = vpop.f32.mrf.mxu0
        %v3054 = vadd.f32 0.0, %v3053
        %v3055 = vpop.f32.mrf.mxu0
        %v3056 = vadd.f32 0.0, %v3055
        %3057 = vmatmul.bf16.gmra.mxu0 %v2802
        %v3058 = vpop.f32.mrf.mxu0
        %v3059 = vadd.f32 0.0, %v3058
        %v3060 = vpop.f32.mrf.mxu0
        %3061 = vdwg.mxu0
        %3062 = vmatpush.bf16.msra.mxu0 %v2930
        %3063 = vmatpush.bf16.msra.mxu0 %v2926
        %3064 = vmatpush.bf16.msra.mxu0 %v2922
        %3065 = vmatpush.bf16.msra.mxu0 %v2918
        %3066 = vmatpush.bf16.msra.mxu0 %v2914
        %3067 = vmatpush.bf16.msra.mxu0 %v2910
        %3068 = vmatpush.bf16.msra.mxu0 %v2906
        %3069 = vmatpush.bf16.msra.mxu0 %v2902
        %3070 = vmatmul.bf16.gmra.mxu0 %v2798
        %v3071 = vpop.f32.mrf.mxu0
        %v3072 = vadd.f32 0.0, %v3071
        %v3073 = vpop.f32.mrf.mxu0
        %v3074 = vadd.f32 0.0, %v3073
        %3075 = vmatmul.bf16.gmra.mxu0 %v2799
        %v3076 = vpop.f32.mrf.mxu0
        %v3077 = vadd.f32 0.0, %v3076
        %v3078 = vpop.f32.mrf.mxu0
        %v3079 = vadd.f32 0.0, %v3078
        %3080 = vmatmul.bf16.gmra.mxu0 %v2800
        %v3081 = vpop.f32.mrf.mxu0
        %v3082 = vadd.f32 0.0, %v3081
        %v3083 = vpop.f32.mrf.mxu0
        %v3084 = vadd.f32 0.0, %v3083
        %3085 = vmatmul.bf16.gmra.mxu0 %v2801
        %v3086 = vpop.f32.mrf.mxu0
        %v3087 = vadd.f32 0.0, %v3086
        %v3088 = vpop.f32.mrf.mxu0
        %v3089 = vadd.f32 0.0, %v3088
        %3090 = vmatmul.bf16.gmra.mxu0 %v2802
        %v3091 = vpop.f32.mrf.mxu0
        %v3092 = vadd.f32 0.0, %v3091
        %v3093 = vpop.f32.mrf.mxu0
        %3094 = vdwg.mxu0
        %v3095 = vld [vmem:[#allocation8 + $0x1c0] sm:$0xff]
        %v3096 = vld [vmem:[#allocation8 + $0x1c8] sm:$0xff]
        %v3097 = vld [vmem:[#allocation8 + $0x1d0] sm:$0xff]
        %v3098 = vld [vmem:[#allocation8 + $0x1d8] sm:$0xff]
        %v3099 = vld [vmem:[#allocation8 + $0x1e0] sm:$0xff]
        %v3100 = vld [vmem:[#allocation8 + $0x1e8] sm:$0xff]
        %v3101 = vld [vmem:[#allocation8 + $0x1f0] sm:$0xff]
        %v3102 = vld [vmem:[#allocation8 + $0x1f8] sm:$0xff]
        %v3103 = vld [vmem:[#allocation8 + $0x200] sm:$0xff]
        %v3104 = vld [vmem:[#allocation8 + $0x208] sm:$0xff]
        %v3105 = vld [vmem:[#allocation8 + $0x210] sm:$0xff]
        %v3106 = vld [vmem:[#allocation8 + $0x218] sm:$0xff]
        %v3107 = vld [vmem:[#allocation8 + $0x220] sm:$0xff]
        %v3108 = vld [vmem:[#allocation8 + $0x228] sm:$0xff]
        %v3109 = vld [vmem:[#allocation8 + $0x230] sm:$0xff]
        %v3110 = vld [vmem:[#allocation8 + $0x238] sm:$0xff]
        %v3111 = vld [vmem:[#allocation8 + $0x240] sm:$0xff]
        %v3112 = vld [vmem:[#allocation8 + $0x248] sm:$0xff]
        %v3113 = vrot.slane %v2973, 7
        %v3114 = vrot.slane %v2975, 7
        %v3115 = vrot.slane %v2978, 7
        %v3116 = vrot.slane %v2980, 7
        %v3117 = vrot.slane %v2983, 7
        %v3118 = vrot.slane %v2985, 7
        %v3119 = vrot.slane %v2988, 7
        %v3120 = vrot.slane %v2990, 7
        %v3121 = vrot.slane %v2993, 7
        %v3122 = vsel %vm1595, %v3120, %v3121
        %v3123 = vsel %vm1595, %v3119, %v3120
        %v3124 = vsel %vm1595, %v3118, %v3119
        %v3125 = vsel %vm1595, %v3117, %v3118
        %v3126 = vsel %vm1595, %v3116, %v3117
        %v3127 = vsel %vm1595, %v3115, %v3116
        %v3128 = vsel %vm1595, %v3114, %v3115
        %v3129 = vsel %vm1595, %v3113, %v3114
        %v3130 = vsel %vm1595, %v3121, %v3113
        %v3131 = vmul.f32 %v3130, %v3095
        %v3132 = vmul.f32 %v3129, %v3096
        %v3133 = vmul.f32 %v3128, %v3097
        %v3134 = vmul.f32 %v3127, %v3098
        %v3135 = vmul.f32 %v3126, %v3099
        %v3136 = vmul.f32 %v3125, %v3100
        %v3137 = vmul.f32 %v3124, %v3101
        %v3138 = vmul.f32 %v3123, %v3102
        %v3139 = vmul.f32 %v3122, %v3103
        %v3140 = vrot.slane %v3039, 1
        %v3141 = vrot.slane %v3041, 1
        %v3142 = vrot.slane %v3044, 1
        %v3143 = vrot.slane %v3046, 1
        %v3144 = vrot.slane %v3049, 1
        %v3145 = vrot.slane %v3051, 1
        %v3146 = vrot.slane %v3054, 1
        %v3147 = vrot.slane %v3056, 1
        %v3148 = vrot.slane %v3059, 1
        %v3149 = vsel %vm1636, %v3147, %v3148
        %v3150 = vsel %vm1636, %v3146, %v3147
        %v3151 = vsel %vm1636, %v3145, %v3146
        %v3152 = vsel %vm1636, %v3144, %v3145
        %v3153 = vsel %vm1636, %v3143, %v3144
        %v3154 = vsel %vm1636, %v3142, %v3143
        %v3155 = vsel %vm1636, %v3141, %v3142
        %v3156 = vsel %vm1636, %v3140, %v3141
        %v3157 = vsel %vm1636, %v3148, %v3140
        %v3158 = vmul.f32 %v3156, %v3104
        %v3159 = vmul.f32 %v3155, %v3105
        %v3160 = vmul.f32 %v3154, %v3106
        %v3161 = vmul.f32 %v3153, %v3107
        %v3162 = vmul.f32 %v3152, %v3108
        %v3163 = vmul.f32 %v3151, %v3109
        %v3164 = vmul.f32 %v3150, %v3110
        %v3165 = vmul.f32 %v3149, %v3111
        %v3166 = vmul.f32 %v3157, %v3112
        %v3167 = vadd.f32 %v3131, %v3006
        %v3168 = vadd.f32 %v3132, %v3008
        %v3169 = vadd.f32 %v3133, %v3011
        %v3170 = vadd.f32 %v3134, %v3013
        %v3171 = vadd.f32 %v3135, %v3016
        %v3172 = vadd.f32 %v3136, %v3018
        %v3173 = vadd.f32 %v3137, %v3021
        %v3174 = vadd.f32 %v3138, %v3023
        %v3175 = vadd.f32 %v3139, %v3026
        %v3176 = vadd.f32 %v3167, %v3158
        %v3177 = vadd.f32 %v3168, %v3159
        %v3178 = vadd.f32 %v3169, %v3160
        %v3179 = vadd.f32 %v3170, %v3161
        %v3180 = vadd.f32 %v3171, %v3162
        %v3181 = vadd.f32 %v3172, %v3163
        %v3182 = vadd.f32 %v3173, %v3164
        %v3183 = vadd.f32 %v3174, %v3165
        %v3184 = vadd.f32 %v3175, %v3166
        %v3185 = vperm.slane %v475, 0
        %v3186 = vadd.f32 %v3176, %v3185
        %v3187 = vadd.f32 %v3177, %v3185
        %v3188 = vadd.f32 %v3178, %v3185
        %v3189 = vadd.f32 %v3179, %v3185
        %v3190 = vadd.f32 %v3180, %v3185
        %v3191 = vadd.f32 %v3181, %v3185
        %v3192 = vadd.f32 %v3182, %v3185
        %v3193 = vadd.f32 %v3183, %v3185
        %v3194 = vadd.f32 %v3184, %v3185
        %v3195 = vmax.f32 %v3186, 0.0
        %v3196 = vmax.f32 %v3187, 0.0
        %v3197 = vmax.f32 %v3188, 0.0
        %v3198 = vmax.f32 %v3189, 0.0
        %v3199 = vmax.f32 %v3190, 0.0
        %v3200 = vmax.f32 %v3191, 0.0
        %v3201 = vmax.f32 %v3192, 0.0
        %v3202 = vmax.f32 %v3193, 0.0
        %v3203 = vmax.f32 %v3194, 0.0
        %v3204 = vperm.slane %v476, 0
        %v3205 = vadd.f32 %v3072, %v3204
        %v3206 = vadd.f32 %v3074, %v3204
        %v3207 = vadd.f32 %v3077, %v3204
        %v3208 = vadd.f32 %v3079, %v3204
        %v3209 = vadd.f32 %v3082, %v3204
        %v3210 = vadd.f32 %v3084, %v3204
        %v3211 = vadd.f32 %v3087, %v3204
        %v3212 = vadd.f32 %v3089, %v3204
        %v3213 = vadd.f32 %v3092, %v3204
        %v3214 = vmax.f32 %v3205, 0.0
        %v3215 = vmax.f32 %v3206, 0.0
        %v3216 = vmax.f32 %v3207, 0.0
        %v3217 = vmax.f32 %v3208, 0.0
        %v3218 = vmax.f32 %v3209, 0.0
        %v3219 = vmax.f32 %v3210, 0.0
        %v3220 = vmax.f32 %v3211, 0.0
        %v3221 = vmax.f32 %v3212, 0.0
        %v3222 = vmax.f32 %v3213, 0.0
        %v3223 = vadd.f32 %v3195, %v3214
        %v3224 = vadd.f32 %v3196, %v3215
        %v3225 = vadd.f32 %v3197, %v3216
        %v3226 = vadd.f32 %v3198, %v3217
        %v3227 = vadd.f32 %v3199, %v3218
        %v3228 = vadd.f32 %v3200, %v3219
        %v3229 = vadd.f32 %v3201, %v3220
        %v3230 = vadd.f32 %v3202, %v3221
        %v3231 = vadd.f32 %v3203, %v3222
        %v3232 = vadd.f32 %v3223, %v462
        %v3233 = vmax.f32 %v3232, 0.0
        %v3234 = vadd.f32 %v3224, %v2747
        %v3235 = vadd.f32 %v3225, %v2749
        %v3236 = vadd.f32 %v3226, %v2752
        %v3237 = vadd.f32 %v3227, %v2754
        %v3238 = vadd.f32 %v3228, %v2757
        %v3239 = vadd.f32 %v3229, %v2759
        %v3240 = vadd.f32 %v3230, %v2762
        %v3241 = vadd.f32 %v3231, %v2764
        %v3242 = vmax.f32 %v3234, 0.0
        %v3243 = vmax.f32 %v3235, 0.0
        %v3244 = vmax.f32 %v3236, 0.0
        %v3245 = vmax.f32 %v3237, 0.0
        %v3246 = vmax.f32 %v3238, 0.0
        %v3247 = vmax.f32 %v3239, 0.0
        %v3248 = vmax.f32 %v3240, 0.0
        %v3249 = vmax.f32 %v3241, 0.0
        %3250 = vst [vmem:[%s460] sm:$0xff] %v3233
        %3251 = vst [vmem:[%s460 + $0x8] sm:$0xff] %v3242
        %3252 = vst [vmem:[%s460 + $0x10] sm:$0xff] %v3243
        %3253 = vst [vmem:[%s460 + $0x18] sm:$0xff] %v3244
        %3254 = vst [vmem:[%s460 + $0x20] sm:$0xff] %v3245
        %3255 = vst [vmem:[%s460 + $0x28] sm:$0xff] %v3246
        %3256 = vst [vmem:[%s460 + $0x30] sm:$0xff] %v3247
        %3257 = vst [vmem:[%s460 + $0x38] sm:$0xff] %v3248
        %3258 = vst [vmem:[%s460 + $0x40] sm:$0xff] %v3249
        %s3259 = sand.u32 %s225, 1
        %s3260 = sand.u32 %s225, 1
        %s3261 = smul.addr %s3260, 72
        %s3262 = scalar_lea.vmem [#allocation10], %s3261
        // Predicated region
        $region111: #{fwd.1} parent=89 // pred_check
          %p3263 = pneg %p235
        $region112: #{fwd.1} parent=89 // pred_check_branch
          %3265 = sbr.rel (%p3263) target = $region114
        $region113: #{fwd.1} parent=89 // pred_region
          %s3266 = smul.addr %s23, 8
          %s3267 = scalar_lea.vmem %s9, %s3266
          // Predicated region
          $region115: #{fwd.1} parent=113 // pred_check
            _
          $region116: #{fwd.1} parent=113 // pred_check_branch
            %3269 = sbr.rel (0) target = $region118
          $region117: #{fwd.1} parent=113 // pred_region
            // Predicated region
            $region119: #{fwd.1} parent=117 // pred_check
              _
            $region120: #{fwd.1} parent=117 // pred_check_branch
              %3271 = sbr.rel (0) target = $region122
            $region121: #{fwd.1} parent=117 // pred_region
              // Predicated region
              $region134: #{fwd.1} parent=121 // pred_check
                _
              $region135: #{fwd.1} parent=121 // pred_check_branch
                %3303 = sbr.rel (0) target = $region137
              $region136: #{fwd.1} parent=121 // pred_region
                loop: start=0, step=1, limit=1
                $region138: #{fwd.1} parent=136 // loop_pre_header
                  _
                $region139: #{fwd.1} parent=136 // loop_header
                  %s3305 = sphi 0, %s3309
                  %p3306 = scmp.ge.s32.totalorder %s3305, 1
                  %s3310 = sphi %s3262, %s3262
                  %s3311 = sphi %s3267, %s3267
                $region140: #{fwd.1} parent=136 // loop_header_branch
                  %3308 = sbr.rel (%p3306) target = $region144
                $region141: #{fwd.1} parent=136 // loop_body
                  %v3312 = vld [vmem:[%s3310] sm:$0xff]
                  %3313 = vst [vmem:[%s3311] sm:$0xff] %v3312
                  %v3314 = vld [vmem:[%s3310 + $0x8] sm:$0xff]
                  %3315 = vst [vmem:[%s3311 + $0x10] sm:$0xff] %v3314
                  %v3316 = vld [vmem:[%s3310 + $0x10] sm:$0xff]
                  %3317 = vst [vmem:[%s3311 + $0x20] sm:$0xff] %v3316
                  %v3318 = vld [vmem:[%s3310 + $0x18] sm:$0xff]
                  %3319 = vst [vmem:[%s3311 + $0x30] sm:$0xff] %v3318
                  %v3320 = vld [vmem:[%s3310 + $0x20] sm:$0xff]
                  %3321 = vst [vmem:[%s3311 + $0x40] sm:$0xff] %v3320
                  %v3322 = vld [vmem:[%s3310 + $0x28] sm:$0xff]
                  %3323 = vst [vmem:[%s3311 + $0x50] sm:$0xff] %v3322
                  %v3324 = vld [vmem:[%s3310 + $0x30] sm:$0xff]
                  %3325 = vst [vmem:[%s3311 + $0x60] sm:$0xff] %v3324
                  %v3326 = vld [vmem:[%s3310 + $0x38] sm:$0xff]
                  %3327 = vst [vmem:[%s3311 + $0x70] sm:$0xff] %v3326
                  %v3328 = vld [vmem:[%s3310 + $0x40] sm:$0xff]
                  %3329 = vst [vmem:[%s3311 + $0x80] sm:$0xff] %v3328
                $region142: #{fwd.1} parent=136 // loop_footer
                  %s3309 = sadd.s32 1, %s3305
                $region143: #{fwd.1} parent=136 // loop_footer_branch
                  %3304 = sbr.rel target = $region139
                $region144: #{fwd.1} parent=136 // loop_exit
                  _
              $region137: #{fwd.1} parent=121 // pred_fallthru
                _
              // Predicated region
              $region145: #{fwd.1} parent=121 // pred_check
                _
              $region146: #{fwd.1} parent=121 // pred_check_branch
                %3331 = sbr.rel target = $region148
              $region147: #{fwd.1} parent=121 // pred_region
                _
              $region148: #{fwd.1} parent=121 // pred_fallthru
                _
            $region122: #{fwd.1} parent=117 // pred_fallthru
              _
            // Predicated region
            $region123: #{fwd.1} parent=117 // pred_check
              _
            $region124: #{fwd.1} parent=117 // pred_check_branch
              %3273 = sbr.rel target = $region126
            $region125: #{fwd.1} parent=117 // pred_region
              %s3275 = ssub.s32 256, 1
              loop: start=0, step=1, limit=1
              $region127: #{fwd.1} parent=125 // loop_pre_header
                _
              $region128: #{fwd.1} parent=125 // loop_header
                %s3277 = sphi 0, %s3281
                %p3278 = scmp.ge.s32.totalorder %s3277, 1
                %s3282 = sphi %s3262, %s3262
                %s3283 = sphi %s3267, %s3267
              $region129: #{fwd.1} parent=125 // loop_header_branch
                %3280 = sbr.rel (%p3278) target = $region133
              $region130: #{fwd.1} parent=125 // loop_body
                %v3284 = vld [vmem:[%s3282] sm:%s3275]
                %3285 = vst [vmem:[%s3283] sm:%s3275] %v3284
                %v3286 = vld [vmem:[%s3282 + $0x8] sm:%s3275]
                %3287 = vst [vmem:[%s3283 + $0x10] sm:%s3275] %v3286
                %v3288 = vld [vmem:[%s3282 + $0x10] sm:%s3275]
                %3289 = vst [vmem:[%s3283 + $0x20] sm:%s3275] %v3288
                %v3290 = vld [vmem:[%s3282 + $0x18] sm:%s3275]
                %3291 = vst [vmem:[%s3283 + $0x30] sm:%s3275] %v3290
                %v3292 = vld [vmem:[%s3282 + $0x20] sm:%s3275]
                %3293 = vst [vmem:[%s3283 + $0x40] sm:%s3275] %v3292
                %v3294 = vld [vmem:[%s3282 + $0x28] sm:%s3275]
                %3295 = vst [vmem:[%s3283 + $0x50] sm:%s3275] %v3294
                %v3296 = vld [vmem:[%s3282 + $0x30] sm:%s3275]
                %3297 = vst [vmem:[%s3283 + $0x60] sm:%s3275] %v3296
                %v3298 = vld [vmem:[%s3282 + $0x38] sm:%s3275]
                %3299 = vst [vmem:[%s3283 + $0x70] sm:%s3275] %v3298
                %v3300 = vld [vmem:[%s3282 + $0x40] sm:%s3275]
                %3301 = vst [vmem:[%s3283 + $0x80] sm:%s3275] %v3300
              $region131: #{fwd.1} parent=125 // loop_footer
                %s3281 = sadd.s32 1, %s3277
              $region132: #{fwd.1} parent=125 // loop_footer_branch
                %3276 = sbr.rel target = $region128
              $region133: #{fwd.1} parent=125 // loop_exit
                _
            $region126: #{fwd.1} parent=117 // pred_fallthru
              _
          $region118: #{fwd.1} parent=113 // pred_fallthru
            _
          %3332 = vnop
        $region114: #{fwd.1} parent=89 // pred_fallthru
          _
      $region90: #{fwd.1} parent=5 // pred_fallthru
        _
      %p3333 = scmp.le.s32.totalorder 2, %s18
      // Predicated region
      $region149: #{fwd.1} parent=5 // pred_check
        %p3334 = pneg %p3333
      $region150: #{fwd.1} parent=5 // pred_check_branch
        %3336 = sbr.rel (%p3334) target = $region152
      $region151: #{fwd.1} parent=5 // pred_region
        %s3337 = ssub.s32 %s18, 2
        // Predicated region
        $region153: #{fwd.1} parent=151 // pred_check
          %p3338 = pneg %p241
        $region154: #{fwd.1} parent=151 // pred_check_branch
          %3340 = sbr.rel (%p3338) target = $region156
        $region155: #{fwd.1} parent=151 // pred_region
          %s3341 = sand.u32 %s226, 1
          %s3342 = sand.u32 %s226, 1
          %s3343 = smul.addr %s3342, 72
          %s3344 = scalar_lea.vmem [#allocation10], %s3343
        $region156: #{fwd.1} parent=151 // pred_fallthru
          _
      $region152: #{fwd.1} parent=5 // pred_fallthru
        _
    $region6: #{fwd.1} parent=1 // loop_footer
      %s22 = sadd.s32 1, %s18
    $region7: #{fwd.1} parent=1 // loop_footer_branch
      %17 = sbr.rel target = $region3
    $region8: #{fwd.1} parent=1 // loop_exit
      _
    %3345 = vsyncpa [#allocation4], 1
    %s3346 = scalar_lea.sflag [#allocation4], 1
    %3347 = vsyncpa %s3346, 1
    %3348 = vsyncpa [#allocation6], 1
    %3349 = vsyncpa [#allocation9], 1

</llo_original>
